<compile_context>
chip_gen: v6e
topology: v6e:2x2x1
jax: 0.10.0
libtpu: 0.0.40
codegen_flags: <defaults>
</compile_context>

<pallas_src>
import math

import jax
import jax.numpy as jnp
from jax.experimental import pallas as pl
from jax.experimental.pallas import tpu as pltpu


def _cov_kernel(cov_ref, wrow_ref, wcol_ref, co_ref, tmp_ref):
    """cov_out[i-tile, j-tile] = (W_row @ C) @ W_col^T  for the current batch b."""
    # cov_ref : (IN, IN)         per-batch block (batch dim squeezed); the block
    #                            index ignores (i, j) so it is DMA'd once per b.
    # wrow_ref: (TILE_O, IN)     row tile of W, indexed by i (pipelined).
    # wcol_ref: (TILE_P, IN)     column tile of W, indexed by j (pipelined).
    # co_ref  : (TILE_O, TILE_P) lane-dense output block.
    # tmp_ref : (TILE_O, IN)     f32 scratch cached across the j axis.

    @pl.when(pl.program_id(2) == 0)
    def _():
        # tmp = W_row @ C : computed once per (b, i), reused for every j.
        tmp_ref[...] = jnp.dot(wrow_ref[...], cov_ref[...],
                               preferred_element_type=jnp.float32)

    # (W_row @ C) @ W_col^T : contract the shared last (lane) dim -> no transpose.
    co_ref[...] = jax.lax.dot_general(
        tmp_ref[...], wcol_ref[...],
        dimension_numbers=(((1,), (1,)), ((), ())),
        preferred_element_type=jnp.float32,
    ).astype(co_ref.dtype)


def _vmem_capacity_bytes():
    """Physical VMEM of the attached TPU generation (fallback: v7x-safe 64 MiB)."""
    try:
        cap = getattr(pltpu.get_tpu_info(), "vmem_capacity_bytes", None)
        if cap:
            return int(cap)
    except Exception:
        pass
    return 64 * 1024 * 1024


def _select_tiles(IN, OUT, itemsize, budget_bytes):
    """Largest (TILE_O, TILE_P) whose per-step VMEM footprint fits the budget."""
    def need(to, tp):
        return itemsize * (
            2 * IN * IN        # cov block (double-buffered)
            + 2 * to * IN      # W row tile (double-buffered)
            + 2 * tp * IN      # W col tile (double-buffered)
            + 2 * to * tp      # cov_out block (double-buffered)
        ) + 4 * to * IN        # f32 tmp scratch

    cands = []
    for t in (OUT, 1024, 512, 256, 128):
        if 0 < t <= OUT and OUT % t == 0 and t not in cands:
            cands.append(t)
    if not cands:
        cands = [OUT]

    # Prefer a large TILE_P (lane-dense, unmasked output stores), then large TILE_O.
    for tp in cands:
        for to in cands:
            if need(to, tp) <= budget_bytes:
                return to, tp, need(to, tp)

    # Nothing fits: take the smallest tiles and report the TRUE footprint; the
    # caller does NOT clamp vmem_limit_bytes below it (compile fails loudly
    # instead of silently spilling).
    # TODO(synk): add an IN-reduction grid axis (pl.when-initialised f32
    # accumulator) for layers whose (IN, IN) cov block alone exceeds VMEM.
    to = tp = cands[-1]
    return to, tp, need(to, tp)


def linear_duo_forward(u, cov, weight, bias=None, bias_var=None, scale=None,
                       sparse_mask=None):
    B, IN = u.shape
    OUT = weight.shape[0]
    assert weight.shape == (OUT, IN) and cov.shape == (B, IN, IN)

    if sparse_mask is not None:
        weight = weight * sparse_mask          # matches `self.weight * self.sparse_mask`
    cov = jax.lax.stop_gradient(cov)           # matches `cov.detach()`

    # Fold a scalar scale into W when no additive term interferes:
    #   u @ (sW)^T == s (u @ W^T),  (sW) C (sW)^T == s^2 W C W^T   (exact)
    fold_scale = (scale is not None) and (bias is None) and (bias_var is None)
    if fold_scale:
        weight = weight * scale

    # ---- mean path: ONE plain XLA matmul (hoisted out of the Pallas kernel) ----
    u_out = jax.lax.dot_general(
        u, weight, dimension_numbers=(((1,), (1,)), ((), ())),
        preferred_element_type=jnp.float32).astype(u.dtype)

    # ---- covariance path: fused Pallas kernel over a (b, i, j) grid ----
    itemsize = max(jnp.dtype(cov.dtype).itemsize, jnp.dtype(weight.dtype).itemsize)
    capacity = _vmem_capacity_bytes()
    budget = (capacity * 3) // 4               # ~96 MiB on v5e/v6e, ~48 MiB on v7x
    tile_o, tile_p, vmem_need = _select_tiles(IN, OUT, itemsize, budget)
    n_i, n_j = OUT // tile_o, OUT // tile_p
    grid = (B, n_i, n_j)

    flops = 2 * B * OUT * IN * IN + 2 * B * OUT * OUT * IN
    bytes_accessed = itemsize * (B * IN * IN       # cov, once per b
                                 + B * OUT * IN    # W row tiles, once per (b, i)
                                 + B * n_i * OUT * IN  # W col tiles, per (b, i, j)
                                 + B * OUT * OUT)  # cov_out writeback
    # Never clamp the limit below the real footprint; cap at physical capacity.
    vmem_limit = int(min(max(vmem_need * 5 // 4, 32 * 1024 * 1024), capacity))

    cov_out = pl.pallas_call(
        _cov_kernel,
        out_shape=jax.ShapeDtypeStruct((B, OUT, OUT), cov.dtype),
        grid_spec=pltpu.PrefetchScalarGridSpec(
            num_scalar_prefetch=0,
            grid=grid,
            in_specs=[
                # cov[b]: constant across (i, j) -> fetched once per batch element.
                pl.BlockSpec((pl.Squeezed(), IN, IN), lambda b, i, j: (b, 0, 0)),
                # W row tile (varies with i): arrives via the pipeline, no in-kernel slice.
                pl.BlockSpec((tile_o, IN), lambda b, i, j: (i, 0)),
                # W column tile (varies with j).
                pl.BlockSpec((tile_p, IN), lambda b, i, j: (j, 0)),
            ],
            out_specs=pl.BlockSpec((pl.Squeezed(), tile_o, tile_p),
                                   lambda b, i, j: (b, i, j)),
            scratch_shapes=[pltpu.VMEM((tile_o, IN), jnp.float32)],
        ),
        compiler_params=pltpu.CompilerParams(
            # Every grid point writes its own cov_out block, so b and i can carry
            # megacore parallelism; j reuses the tmp scratch -> sequential.
            dimension_semantics=("parallel", "parallel", "arbitrary"),
            vmem_limit_bytes=vmem_limit,
        ),
        cost_estimate=pl.CostEstimate(flops=flops, transcendentals=0,
                                      bytes_accessed=bytes_accessed),
    )(cov, weight, weight)

    # Optional affine glue (all default-off in the module).
    if bias is not None:
        u_out = u_out + bias[None, :]
    if bias_var is not None:
        cov_out = cov_out + jnp.diag(bias_var)[None, :, :]
    if scale is not None and not fold_scale:
        u_out = u_out * scale
        cov_out = cov_out * (scale * scale)
    # TODO(synk): train-time `dropout` and the `smuc` flag have no visible reference
    # implementation in the provided module; omitted (module defaults are off).
    # TODO(synk): exploit symmetry of W C W^T (compute only j >= i tiles and mirror
    # via an epilogue) and optional bf16 operands with f32 accumulation for a
    # further ~2x / ~3x MXU win on v6e/v7x when numerics allow.
    return u_out, cov_out


if __name__ == "__main__":
    B, IN, OUT = 2, 256, 768   # multi-batch, exercises the (b, i, j) grid

    key = jax.random.PRNGKey(0)
    k_w, k_u, k_c = jax.random.split(key, 3)

    # kaiming_uniform_(a=sqrt(5)) on (OUT, IN) -> U(-1/sqrt(fan_in), 1/sqrt(fan_in))
    bound = 1.0 / math.sqrt(IN)
    weight = jax.random.uniform(k_w, (OUT, IN), jnp.float32, -bound, bound)

    u = jax.random.normal(k_u, (B, IN), jnp.float32)
    a = jax.random.normal(k_c, (B, IN, IN), jnp.float32)
    cov = jnp.einsum("bij,bkj->bik", a, a) / IN   # symmetric PSD covariance

    u_out, cov_out = linear_duo_forward(u, cov, weight)
    jax.block_until_ready((u_out, cov_out))

    # plain-JAX reference
    u_ref = u @ weight.T
    cov_ref = jnp.einsum("oi,bij,pj->bop", weight, cov, weight)
    assert jnp.allclose(u_out, u_ref, atol=1e-3, rtol=1e-3)
    assert jnp.allclose(cov_out, cov_ref, atol=1e-3, rtol=1e-3)

    print("KERNEL_OK")
</pallas_src>

<mosaic_0001>
module attributes {stable_mosaic.version = 11 : i64} {
  func.func @_cov_kernel(%arg0: i32, %arg1: i32, %arg2: i32, %arg3: memref<1x256x256xf32, #tpu.memory_space<vmem>>, %arg4: memref<768x256xf32, #tpu.memory_space<vmem>>, %arg5: memref<768x256xf32, #tpu.memory_space<vmem>>, %arg6: memref<1x768x768xf32, #tpu.memory_space<vmem>>, %arg7: memref<768x256xf32, #tpu.memory_space<vmem>>) attributes {dimension_semantics = [#tpu.dimension_semantics<parallel>, #tpu.dimension_semantics<parallel>, #tpu.dimension_semantics<arbitrary>], iteration_bounds = array<i64: 2, 1, 1>, scalar_prefetch = 0 : i64, scratch_operands = 1 : i64, tpu.core_type = #tpu.core_type<tc>, window_params = [{transform_indices = @transform_0, window_bounds = array<i64: 1, 256, 256>}, {transform_indices = @transform_1, window_bounds = array<i64: 768, 256>}, {transform_indices = @transform_2, window_bounds = array<i64: 768, 256>}, {transform_indices = @transform_3, window_bounds = array<i64: 1, 768, 768>}]} {
    %c0_i32 = arith.constant 0 : i32
    %0 = arith.cmpi eq, %arg2, %c0_i32 : i32
    %1 = arith.extui %0 : i1 to i32
    %c0_i32_0 = arith.constant 0 : i32
    %2 = arith.cmpi ne, %1, %c0_i32_0 : i32
    scf.if %2 {
      %c0_7 = arith.constant 0 : index
      %c0_8 = arith.constant 0 : index
      %9 = vector.load %arg4[%c0_7, %c0_8] : memref<768x256xf32, #tpu.memory_space<vmem>>, vector<768x256xf32>
      %c0_9 = arith.constant 0 : index
      %c0_10 = arith.constant 0 : index
      %c0_11 = arith.constant 0 : index
      %10 = vector.load %arg3[%c0_9, %c0_10, %c0_11] : memref<1x256x256xf32, #tpu.memory_space<vmem>>, vector<1x256x256xf32>
      %11 = vector.shape_cast %10 : vector<1x256x256xf32> to vector<256x256xf32>
      %cst_12 = arith.constant dense<0.000000e+00> : vector<768x256xf32>
      %12 = tpu.matmul %9, %11, %cst_12 {dimension_numbers = #tpu.dot_dimension_numbers<[1], [0], [0], [1], [0, 0, 1, 1], [], []>} : vector<768x256xf32>, vector<256x256xf32>, vector<768x256xf32> -> vector<768x256xf32>
      %c0_13 = arith.constant 0 : index
      %c0_14 = arith.constant 0 : index
      %13 = vector.load %arg7[%c0_13, %c0_14] : memref<768x256xf32, #tpu.memory_space<vmem>>, vector<768x256xf32>
      tpu.vector_store %arg7[%c0_13, %c0_14], %12 {strides = array<i32>} : memref<768x256xf32, #tpu.memory_space<vmem>>, vector<768x256xf32>,
    } else {
    }
    %c0 = arith.constant 0 : index
    %c0_1 = arith.constant 0 : index
    %3 = vector.load %arg7[%c0, %c0_1] : memref<768x256xf32, #tpu.memory_space<vmem>>, vector<768x256xf32>
    %c0_2 = arith.constant 0 : index
    %c0_3 = arith.constant 0 : index
    %4 = vector.load %arg5[%c0_2, %c0_3] : memref<768x256xf32, #tpu.memory_space<vmem>>, vector<768x256xf32>
    %cst = arith.constant dense<0.000000e+00> : vector<768x768xf32>
    %5 = tpu.matmul %3, %4, %cst {dimension_numbers = #tpu.dot_dimension_numbers<[1], [1], [0], [0], [0, 0, 1, 0], [], []>} : vector<768x256xf32>, vector<768x256xf32>, vector<768x768xf32> -> vector<768x768xf32>
    %c0_4 = arith.constant 0 : index
    %c0_5 = arith.constant 0 : index
    %c0_6 = arith.constant 0 : index
    %6 = vector.load %arg6[%c0_4, %c0_5, %c0_6] : memref<1x768x768xf32, #tpu.memory_space<vmem>>, vector<1x768x768xf32>
    %7 = vector.shape_cast %6 : vector<1x768x768xf32> to vector<768x768xf32>
    %8 = vector.shape_cast %5 : vector<768x768xf32> to vector<1x768x768xf32>
    tpu.vector_store %arg6[%c0_4, %c0_5, %c0_6], %8 {strides = array<i32>} : memref<1x768x768xf32, #tpu.memory_space<vmem>>, vector<1x768x768xf32>,
    return
  }
  func.func @transform_0(%arg0: i32, %arg1: i32, %arg2: i32) -> (i32, i32, i32) {
    %c0_i32 = arith.constant 0 : i32
    %c0_i32_0 = arith.constant 0 : i32
    %c0_i32_1 = arith.constant 0 : i32
    return %arg0, %c0_i32, %c0_i32_0 : i32, i32, i32
  }
  func.func @transform_1(%arg0: i32, %arg1: i32, %arg2: i32) -> (i32, i32) {
    %c0_i32 = arith.constant 0 : i32
    %c0_i32_0 = arith.constant 0 : i32
    return %arg1, %c0_i32 : i32, i32
  }
  func.func @transform_2(%arg0: i32, %arg1: i32, %arg2: i32) -> (i32, i32) {
    %c0_i32 = arith.constant 0 : i32
    %c0_i32_0 = arith.constant 0 : i32
    return %arg2, %c0_i32 : i32, i32
  }
  func.func @transform_3(%arg0: i32, %arg1: i32, %arg2: i32) -> (i32, i32, i32) {
    %c0_i32 = arith.constant 0 : i32
    return %arg0, %arg1, %arg2 : i32, i32, i32
  }
}

</mosaic_0001>

<llo_original>
// kernel: tpu_custom_call.1
$region0: #{tpu_custom_call.1}
  #allocation0 [shape = 'u32[]', space=smem, size = 0x4, offset = 0x4, fixed_abs, tag = 'smem constant byte address 0x4 - core index']
  #allocation1 [shape = 'u32[144,128]{1,0:T(1,128)}', space=vmem, size = 0x12000, scoped, tag = 'internal scratch']
  #allocation2 [shape = 'f32[768,256]{1,0:T(8,128)}', space=vmem, size = 0xc0000, scoped, tag = 'scratch operand']
  %s0 = inlined_call_operand.hbm [shape: f32[2,256,256], index: 0, kind: input, shape index: {}]
  %s1 = inlined_call_operand.hbm [shape: f32[768,256], index: 1, kind: input, shape index: {}]
  %s2 = inlined_call_operand.hbm [shape: f32[768,256], index: 2, kind: input, shape index: {}]
  %s3 = inlined_call_operand.hbm [shape: f32[2,768,768], index: 3, kind: output, shape index: {}]
  %s4 = sld [smem:[#allocation0]]
  $region61: #{tpu_custom_call.1} parent=0
    _
  %s6 = ssub.s32 1, %s4
  %s7 = scalar_select 0, %s6, %s4
  $region1: #{tpu_custom_call.1} parent=0
    #allocation3 [shape = 'u8[524288]{0}', space=vmem, size = 0x80000, scoped, tag = 'input window, operand 0']
    #allocation4 [shape = 's32[2]{0}', space=sflag, size = 0x8, scoped, tag = 'scoped memory for tpu_custom_call.1']
    #allocation5 [shape = 's32[2]{0}', space=sflag, size = 0x8, scoped, tag = 'scoped memory for tpu_custom_call.1']
    #allocation6 [shape = 'u8[786432]{0}', space=vmem, size = 0xc0000, scoped, tag = 'input window, operand 1, single buffered']
    #allocation7 [shape = 's32[1]{0}', space=sflag, size = 0x4, scoped, tag = 'scoped memory for tpu_custom_call.1']
    #allocation8 [shape = 'u8[786432]{0}', space=vmem, size = 0xc0000, scoped, tag = 'input window, operand 2, single buffered']
    #allocation9 [shape = 'u8[4718592]{0}', space=vmem, size = 0x480000, scoped, tag = 'output window, operand 0']
    %8 = vsyncpa [#allocation4], 0
    %s9 = scalar_lea.sflag [#allocation4], 1
    %10 = vsyncpa %s9, 0
    %11 = vsyncpa [#allocation7], 0
    %12 = vsyncpa [#allocation5], 0
    %s13 = scalar_lea.sflag [#allocation5], 1
    %14 = vsyncpa %s13, 0
    loop: start=0, step=1, limit=4
    $region2: #{tpu_custom_call.1} parent=1 // loop_pre_header
      _
    $region3: #{tpu_custom_call.1} parent=1 // loop_header
      %s16 = sphi 0, %s20
      %p17 = scmp.ge.s32.totalorder %s16, 4
      %s23 = sphi 0, %s42
      %s24 = sphi 0, %s38
      %s25 = sphi 0, %s34
      %s26 = sphi 0, %s23
      %s27 = sphi 0, %s24
      %s28 = sphi 0, %s25
      %s29 = sphi 0, %s26
      %s30 = sphi 0, %s27
      %s31 = sphi 0, %s28
      %s45 = sphi 0, %s47
      %s48 = sphi 0, %s45
      %s49 = sphi 0, %s48
      %s65 = sphi 0, %s49
      %s71 = sphi 0, %s73
      %s74 = sphi 0, %s71
      %s75 = sphi 0, %s74
      %s91 = sphi 0, %s75
      %s97 = sphi 0, %s99
      %s100 = sphi 0, %s97
      %s101 = sphi 0, %s100
      %s117 = sphi 0, %s101
      %s127 = sphi 0, %s129
      %s130 = sphi 0, %s127
      %s131 = sphi 0, %s130
      %s147 = sphi 0, %s131
    $region4: #{tpu_custom_call.1} parent=1 // loop_header_branch
      %19 = sbr.rel (%p17) target = $region8
    $region5: #{tpu_custom_call.1} parent=1 // loop_body
      %s21 = ssub.s32 %s16, 1
      %s22 = ssub.s32 %s16, 2
      %s32 = sadd.s32 1, %s25
      %p33 = scmp.ge.s32.totalorder %s32, 1
      %s34 = scalar_select %p33, 0, %s32
      %s35 = sadd.s32 1, %s24
      %s36 = scalar_select %p33, %s35, %s24
      %p37 = scmp.ge.s32.totalorder %s36, 1
      %s38 = scalar_select %p37, 0, %s36
      %s39 = sadd.s32 1, %s23
      %s40 = scalar_select %p37, %s39, %s23
      %p41 = scmp.ge.s32.totalorder %s40, 2
      %s42 = scalar_select %p41, 0, %s40
      %s43 = ssub.s32 %s23, %s42
      %p44 = scmp.eq.s32.totalorder %s43, 0
      %s46 = sadd.s32 %s45, 1
      %s47 = scalar_select %p44, %s45, %s46
      %p50 = pneg %p44
      %p51 = scmp.eq.s32.totalorder %s16, 1
      %p52 = por %p50, %p51
      %p53 = scmp.ne.s32.totalorder %s45, %s48
      %p54 = scmp.eq.s32.totalorder %s16, 0
      %p55 = por %p53, %p54
      %p56 = scmp.ne.s32.totalorder %s45, %s48
      %p57 = scmp.eq.s32.totalorder %s21, 1
      %p58 = por %p56, %p57
      %p59 = scmp.ne.s32.totalorder %s48, %s49
      %p60 = scmp.eq.s32.totalorder %s21, 0
      %p61 = por %p59, %p60
      %p62 = scmp.ne.s32.totalorder %s48, %s49
      %p63 = scmp.eq.s32.totalorder %s22, 1
      %p64 = por %p62, %p63
      %p66 = scmp.ne.s32.totalorder %s49, %s65
      %p67 = scmp.eq.s32.totalorder %s22, 0
      %p68 = por %p66, %p67
      %s69 = ssub.s32 %s24, %s38
      %p70 = scmp.eq.s32.totalorder %s69, 0
      %s72 = sadd.s32 %s71, 1
      %s73 = scalar_select %p70, %s71, %s72
      %p76 = pneg %p70
      %p77 = scmp.eq.s32.totalorder %s16, 1
      %p78 = por %p76, %p77
      %p79 = scmp.ne.s32.totalorder %s71, %s74
      %p80 = scmp.eq.s32.totalorder %s16, 0
      %p81 = por %p79, %p80
      %p82 = scmp.ne.s32.totalorder %s71, %s74
      %p83 = scmp.eq.s32.totalorder %s21, 1
      %p84 = por %p82, %p83
      %p85 = scmp.ne.s32.totalorder %s74, %s75
      %p86 = scmp.eq.s32.totalorder %s21, 0
      %p87 = por %p85, %p86
      %p88 = scmp.ne.s32.totalorder %s74, %s75
      %p89 = scmp.eq.s32.totalorder %s22, 1
      %p90 = por %p88, %p89
      %p92 = scmp.ne.s32.totalorder %s75, %s91
      %p93 = scmp.eq.s32.totalorder %s22, 0
      %p94 = por %p92, %p93
      %s95 = ssub.s32 %s25, %s34
      %p96 = scmp.eq.s32.totalorder %s95, 0
      %s98 = sadd.s32 %s97, 1
      %s99 = scalar_select %p96, %s97, %s98
      %p102 = pneg %p96
      %p103 = scmp.eq.s32.totalorder %s16, 1
      %p104 = por %p102, %p103
      %p105 = scmp.ne.s32.totalorder %s97, %s100
      %p106 = scmp.eq.s32.totalorder %s16, 0
      %p107 = por %p105, %p106
      %p108 = scmp.ne.s32.totalorder %s97, %s100
      %p109 = scmp.eq.s32.totalorder %s21, 1
      %p110 = por %p108, %p109
      %p111 = scmp.ne.s32.totalorder %s100, %s101
      %p112 = scmp.eq.s32.totalorder %s21, 0
      %p113 = por %p111, %p112
      %p114 = scmp.ne.s32.totalorder %s100, %s101
      %p115 = scmp.eq.s32.totalorder %s22, 1
      %p116 = por %p114, %p115
      %p118 = scmp.ne.s32.totalorder %s101, %s117
      %p119 = scmp.eq.s32.totalorder %s22, 0
      %p120 = por %p118, %p119
      %s121 = ssub.s32 %s23, %s42
      %s122 = ssub.s32 %s24, %s38
      %s123 = sor.u32 %s121, %s122
      %s124 = ssub.s32 %s25, %s34
      %s125 = sor.u32 %s123, %s124
      %p126 = scmp.eq.s32.totalorder %s125, 0
      %s128 = sadd.s32 %s127, 1
      %s129 = scalar_select %p126, %s127, %s128
      %p132 = pneg %p126
      %p133 = scmp.eq.s32.totalorder %s16, 1
      %p134 = por %p132, %p133
      %p135 = scmp.ne.s32.totalorder %s127, %s130
      %p136 = scmp.eq.s32.totalorder %s16, 0
      %p137 = por %p135, %p136
      %p138 = scmp.ne.s32.totalorder %s127, %s130
      %p139 = scmp.eq.s32.totalorder %s21, 1
      %p140 = por %p138, %p139
      %p141 = scmp.ne.s32.totalorder %s130, %s131
      %p142 = scmp.eq.s32.totalorder %s21, 0
      %p143 = por %p141, %p142
      %p144 = scmp.ne.s32.totalorder %s130, %s131
      %p145 = scmp.eq.s32.totalorder %s22, 1
      %p146 = por %p144, %p145
      %p148 = scmp.ne.s32.totalorder %s131, %s147
      %p149 = scmp.eq.s32.totalorder %s22, 0
      %p150 = por %p148, %p149
      %p151 = scmp.le.s32.totalorder 1, %s16
      %p152 = scmp.lt.s32.totalorder %s16, 3
      %p153 = pnand %p151, %p152
      %p154 = pneg %p153
      // Predicated region
      $region9: #{tpu_custom_call.1} parent=5 // pred_check
        _
      $region10: #{tpu_custom_call.1} parent=5 // pred_check_branch
        %156 = sbr.rel (%p153) target = $region12
      $region11: #{tpu_custom_call.1} parent=5 // pred_region
        %s157 = ssub.s32 %s16, 1
        // Predicated region
        $region13: #{tpu_custom_call.1} parent=11 // pred_check
          %p158 = pneg %p87
        $region14: #{tpu_custom_call.1} parent=11 // pred_check_branch
          %160 = sbr.rel (%p158) target = $region16
        $region15: #{tpu_custom_call.1} parent=11 // pred_region
          %s161 = smul.u32 96, %s27
          %s163 = ssub.s32 24576, 24576
          %164 = vsyncadd [#allocation7], %s163
          %s165 = smul.addr %s161, 2
          %s166 = smul.addr %s165, 128
          %s167 = scalar_lea.hbm %s1, %s166
          %s168 = sshll.u32 [#allocation6], 4
          %s169 = int_to_ptr.vmem [resolvable:$true] %s168
          %174 = dma.hbm_to_vmem [thread:$0]  %s167, 24576, %s169, [#allocation7], 256, 256, 16
        $region16: #{tpu_custom_call.1} parent=11 // pred_fallthru
          _
        // Predicated region
        $region17: #{tpu_custom_call.1} parent=11 // pred_check
          %p175 = pneg %p113
        $region18: #{tpu_custom_call.1} parent=11 // pred_check_branch
          %177 = sbr.rel (%p175) target = $region20
        $region19: #{tpu_custom_call.1} parent=11 // pred_region
          %s178 = smul.u32 96, %s28
          %s180 = ssub.s32 24576, 24576
          %181 = vsyncadd [#allocation7], %s180
          %s182 = smul.addr %s178, 2
          %s183 = smul.addr %s182, 128
          %s184 = scalar_lea.hbm %s2, %s183
          %s185 = sshll.u32 [#allocation8], 4
          %s186 = int_to_ptr.vmem [resolvable:$true] %s185
          %191 = dma.hbm_to_vmem [thread:$0]  %s184, 24576, %s186, [#allocation7], 256, 256, 16
        $region20: #{tpu_custom_call.1} parent=11 // pred_fallthru
          _
      $region12: #{tpu_custom_call.1} parent=5 // pred_fallthru
        _
      %p192 = scmp.lt.s32.totalorder %s16, 2
      // Predicated region
      $region21: #{tpu_custom_call.1} parent=5 // pred_check
        %p193 = pneg %p192
      $region22: #{tpu_custom_call.1} parent=5 // pred_check_branch
        %195 = sbr.rel (%p193) target = $region24
      $region23: #{tpu_custom_call.1} parent=5 // pred_region
        // Predicated region
        $region25: #{tpu_custom_call.1} parent=23 // pred_check
          %p196 = pneg %p55
        $region26: #{tpu_custom_call.1} parent=23 // pred_check_branch
          %198 = sbr.rel (%p196) target = $region28
        $region27: #{tpu_custom_call.1} parent=23 // pred_region
          %s199 = sand.u32 %s45, 1
          %s200 = scalar_lea.sflag [#allocation4], %s199
          %s201 = sand.u32 %s45, 1
          %s202 = smul.addr %s201, 512
          %s203 = scalar_lea.vmem [#allocation3], %s202
          %s205 = ssub.s32 8192, 8192
          %206 = vsyncadd %s200, %s205
          %s207 = smul.addr %s23, 64
          %s208 = smul.addr %s207, 128
          %s209 = scalar_lea.hbm %s0, %s208
          %s210 = sshll.u32 %s203, 4
          %s211 = int_to_ptr.vmem [resolvable:$true] %s210
          %216 = dma.hbm_to_vmem [thread:$0]  %s209, 8192, %s211, %s200, 256, 256, 16
        $region28: #{tpu_custom_call.1} parent=23 // pred_fallthru
          _
      $region24: #{tpu_custom_call.1} parent=5 // pred_fallthru
        _
      %p217 = scmp.le.s32.totalorder 1, %s16
      %p218 = scmp.lt.s32.totalorder %s16, 3
      %p219 = pnand %p217, %p218
      %p220 = pneg %p219
      // Predicated region
      $region29: #{tpu_custom_call.1} parent=5 // pred_check
        _
      $region30: #{tpu_custom_call.1} parent=5 // pred_check_branch
        %222 = sbr.rel (%p219) target = $region32
      $region31: #{tpu_custom_call.1} parent=5 // pred_region
        %s223 = ssub.s32 %s16, 1
        %s224 = sand.u32 %s48, 1
        %s225 = scalar_lea.sflag [#allocation4], %s224
        %s226 = sand.u32 %s48, 1
        %s227 = smul.addr %s226, 512
        %s228 = scalar_lea.vmem [#allocation3], %s227
        // Predicated region
        $region33: #{tpu_custom_call.1} parent=31 // pred_check
          %p229 = pneg %p61
        $region34: #{tpu_custom_call.1} parent=31 // pred_check_branch
          %231 = sbr.rel (%p229) target = $region36
        $region35: #{tpu_custom_call.1} parent=31 // pred_region
          %232 = dma.done %s225, 8192
        $region36: #{tpu_custom_call.1} parent=31 // pred_fallthru
          _
        // Predicated region
        $region37: #{tpu_custom_call.1} parent=31 // pred_check
          %p233 = pneg %p87
        $region38: #{tpu_custom_call.1} parent=31 // pred_check_branch
          %235 = sbr.rel (%p233) target = $region40
        $region39: #{tpu_custom_call.1} parent=31 // pred_region
          %236 = dma.done [#allocation7], 24576
        $region40: #{tpu_custom_call.1} parent=31 // pred_fallthru
          _
        // Predicated region
        $region41: #{tpu_custom_call.1} parent=31 // pred_check
          %p237 = pneg %p113
        $region42: #{tpu_custom_call.1} parent=31 // pred_check_branch
          %239 = sbr.rel (%p237) target = $region44
        $region43: #{tpu_custom_call.1} parent=31 // pred_region
          %240 = dma.done [#allocation7], 24576
        $region44: #{tpu_custom_call.1} parent=31 // pred_fallthru
          _
        %s241 = sand.u32 %s48, 1
        %s242 = scalar_lea.sflag [#allocation4], %s241
        %s243 = sand.u32 %s48, 1
        %s244 = smul.addr %s243, 512
        %s245 = scalar_lea.vmem [#allocation3], %s244
        %p246 = pneg %p61
        %p247 = pneg %p58
        %p248 = pneg %p87
        %p249 = pneg %p84
        %p250 = pneg %p113
        %p251 = pneg %p110
        %p252 = pneg %p143
        %p253 = pneg %p140
        %s254 = sand.u32 %s130, 1
        %s255 = scalar_lea.sflag [#allocation5], %s254
        %s256 = sand.u32 %s130, 1
        %s257 = smul.addr %s256, 4608
        %s258 = scalar_lea.vmem [#allocation9], %s257
        %s259 = smul.u32 96, %s27
        %s260 = smul.u32 96, %s28
        %s261 = smul.u32 96, %s27
        %s262 = smul.u32 6, %s28
        %p263 = scmp.eq.s32.totalorder %s28, 0
        // Predicated region
        $region45: #{tpu_custom_call.1} parent=31 // pred_check
          %p264 = pneg %p263
        $region46: #{tpu_custom_call.1} parent=31 // pred_check_branch
          %266 = sbr.rel (%p264) target = $region48
        $region47: #{tpu_custom_call.1} parent=31 // pred_region
          %v267 = vld [vmem:[#allocation6] sm:$0xff]
          %v268 = vld [vmem:[#allocation6 + $0x8] sm:$0xff]
          %v269 = vld [vmem:[#allocation6 + $0x10] sm:$0xff]
          %v270 = vld [vmem:[#allocation6 + $0x18] sm:$0xff]
          %v271 = vld [vmem:[#allocation6 + $0x20] sm:$0xff]
          %v272 = vld [vmem:[#allocation6 + $0x28] sm:$0xff]
          %v273 = vld [vmem:[#allocation6 + $0x30] sm:$0xff]
          %v274 = vld [vmem:[#allocation6 + $0x38] sm:$0xff]
          %v275 = vld [vmem:[#allocation6 + $0x40] sm:$0xff]
          %v276 = vld [vmem:[#allocation6 + $0x48] sm:$0xff]
          %v277 = vld [vmem:[#allocation6 + $0x50] sm:$0xff]
          %v278 = vld [vmem:[#allocation6 + $0x58] sm:$0xff]
          %v279 = vld [vmem:[#allocation6 + $0x60] sm:$0xff]
          %v280 = vld [vmem:[#allocation6 + $0x68] sm:$0xff]
          %v281 = vld [vmem:[#allocation6 + $0x70] sm:$0xff]
          %v282 = vld [vmem:[#allocation6 + $0x78] sm:$0xff]
          %v283 = vld [vmem:[#allocation6 + $0x80] sm:$0xff]
          %v284 = vld [vmem:[#allocation6 + $0x88] sm:$0xff]
          %v285 = vld [vmem:[#allocation6 + $0x90] sm:$0xff]
          %v286 = vld [vmem:[#allocation6 + $0x98] sm:$0xff]
          %v287 = vld [vmem:[#allocation6 + $0xa0] sm:$0xff]
          %v288 = vld [vmem:[#allocation6 + $0xa8] sm:$0xff]
          %v289 = vld [vmem:[#allocation6 + $0xb0] sm:$0xff]
          %v290 = vld [vmem:[#allocation6 + $0xb8] sm:$0xff]
          %v291 = vld [vmem:[#allocation6 + $0xc0] sm:$0xff]
          %v292 = vld [vmem:[#allocation6 + $0xc8] sm:$0xff]
          %v293 = vld [vmem:[#allocation6 + $0xd0] sm:$0xff]
          %v294 = vld [vmem:[#allocation6 + $0xd8] sm:$0xff]
          %v295 = vld [vmem:[#allocation6 + $0xe0] sm:$0xff]
          %v296 = vld [vmem:[#allocation6 + $0xe8] sm:$0xff]
          %v297 = vld [vmem:[#allocation6 + $0xf0] sm:$0xff]
          %v298 = vld [vmem:[#allocation6 + $0xf8] sm:$0xff]
          %v299 = vld [vmem:[#allocation6 + $0x100] sm:$0xff]
          %v300 = vld [vmem:[#allocation6 + $0x108] sm:$0xff]
          %v301 = vld [vmem:[#allocation6 + $0x110] sm:$0xff]
          %v302 = vld [vmem:[#allocation6 + $0x118] sm:$0xff]
          %v303 = vld [vmem:[#allocation6 + $0x120] sm:$0xff]
          %v304 = vld [vmem:[#allocation6 + $0x128] sm:$0xff]
          %v305 = vld [vmem:[#allocation6 + $0x130] sm:$0xff]
          %v306 = vld [vmem:[#allocation6 + $0x138] sm:$0xff]
          %v307 = vld [vmem:[#allocation6 + $0x140] sm:$0xff]
          %v308 = vld [vmem:[#allocation6 + $0x148] sm:$0xff]
          %v309 = vld [vmem:[#allocation6 + $0x150] sm:$0xff]
          %v310 = vld [vmem:[#allocation6 + $0x158] sm:$0xff]
          %v311 = vld [vmem:[#allocation6 + $0x160] sm:$0xff]
          %v312 = vld [vmem:[#allocation6 + $0x168] sm:$0xff]
          %v313 = vld [vmem:[#allocation6 + $0x170] sm:$0xff]
          %v314 = vld [vmem:[#allocation6 + $0x178] sm:$0xff]
          %v315 = vld [vmem:[#allocation6 + $0x180] sm:$0xff]
          %v316 = vld [vmem:[#allocation6 + $0x188] sm:$0xff]
          %v317 = vld [vmem:[#allocation6 + $0x190] sm:$0xff]
          %v318 = vld [vmem:[#allocation6 + $0x198] sm:$0xff]
          %v319 = vld [vmem:[#allocation6 + $0x1a0] sm:$0xff]
          %v320 = vld [vmem:[#allocation6 + $0x1a8] sm:$0xff]
          %v321 = vld [vmem:[#allocation6 + $0x1b0] sm:$0xff]
          %v322 = vld [vmem:[#allocation6 + $0x1b8] sm:$0xff]
          %v323 = vld [vmem:[#allocation6 + $0x1c0] sm:$0xff]
          %v324 = vld [vmem:[#allocation6 + $0x1c8] sm:$0xff]
          %v325 = vld [vmem:[#allocation6 + $0x1d0] sm:$0xff]
          %v326 = vld [vmem:[#allocation6 + $0x1d8] sm:$0xff]
          %v327 = vld [vmem:[#allocation6 + $0x1e0] sm:$0xff]
          %v328 = vld [vmem:[#allocation6 + $0x1e8] sm:$0xff]
          %v329 = vld [vmem:[#allocation6 + $0x1f0] sm:$0xff]
          %v330 = vld [vmem:[#allocation6 + $0x1f8] sm:$0xff]
          %v331 = vld [vmem:[#allocation6 + $0x200] sm:$0xff]
          %v332 = vld [vmem:[#allocation6 + $0x208] sm:$0xff]
          %v333 = vld [vmem:[#allocation6 + $0x210] sm:$0xff]
          %v334 = vld [vmem:[#allocation6 + $0x218] sm:$0xff]
          %v335 = vld [vmem:[#allocation6 + $0x220] sm:$0xff]
          %v336 = vld [vmem:[#allocation6 + $0x228] sm:$0xff]
          %v337 = vld [vmem:[#allocation6 + $0x230] sm:$0xff]
          %v338 = vld [vmem:[#allocation6 + $0x238] sm:$0xff]
          %v339 = vld [vmem:[#allocation6 + $0x240] sm:$0xff]
          %v340 = vld [vmem:[#allocation6 + $0x248] sm:$0xff]
          %v341 = vld [vmem:[#allocation6 + $0x250] sm:$0xff]
          %v342 = vld [vmem:[#allocation6 + $0x258] sm:$0xff]
          %v343 = vld [vmem:[#allocation6 + $0x260] sm:$0xff]
          %v344 = vld [vmem:[#allocation6 + $0x268] sm:$0xff]
          %v345 = vld [vmem:[#allocation6 + $0x270] sm:$0xff]
          %v346 = vld [vmem:[#allocation6 + $0x278] sm:$0xff]
          %v347 = vld [vmem:[#allocation6 + $0x280] sm:$0xff]
          %v348 = vld [vmem:[#allocation6 + $0x288] sm:$0xff]
          %v349 = vld [vmem:[#allocation6 + $0x290] sm:$0xff]
          %v350 = vld [vmem:[#allocation6 + $0x298] sm:$0xff]
          %v351 = vld [vmem:[#allocation6 + $0x2a0] sm:$0xff]
          %v352 = vld [vmem:[#allocation6 + $0x2a8] sm:$0xff]
          %v353 = vld [vmem:[#allocation6 + $0x2b0] sm:$0xff]
          %v354 = vld [vmem:[#allocation6 + $0x2b8] sm:$0xff]
          %v355 = vld [vmem:[#allocation6 + $0x2c0] sm:$0xff]
          %v356 = vld [vmem:[#allocation6 + $0x2c8] sm:$0xff]
          %v357 = vld [vmem:[#allocation6 + $0x2d0] sm:$0xff]
          %v358 = vld [vmem:[#allocation6 + $0x2d8] sm:$0xff]
          %v359 = vld [vmem:[#allocation6 + $0x2e0] sm:$0xff]
          %v360 = vld [vmem:[#allocation6 + $0x2e8] sm:$0xff]
          %v361 = vld [vmem:[#allocation6 + $0x2f0] sm:$0xff]
          %v362 = vld [vmem:[#allocation6 + $0x2f8] sm:$0xff]
          %v363 = vld [vmem:[#allocation6 + $0x300] sm:$0xff]
          %v364 = vld [vmem:[#allocation6 + $0x308] sm:$0xff]
          %v365 = vld [vmem:[#allocation6 + $0x310] sm:$0xff]
          %v366 = vld [vmem:[#allocation6 + $0x318] sm:$0xff]
          %v367 = vld [vmem:[#allocation6 + $0x320] sm:$0xff]
          %v368 = vld [vmem:[#allocation6 + $0x328] sm:$0xff]
          %v369 = vld [vmem:[#allocation6 + $0x330] sm:$0xff]
          %v370 = vld [vmem:[#allocation6 + $0x338] sm:$0xff]
          %v371 = vld [vmem:[#allocation6 + $0x340] sm:$0xff]
          %v372 = vld [vmem:[#allocation6 + $0x348] sm:$0xff]
          %v373 = vld [vmem:[#allocation6 + $0x350] sm:$0xff]
          %v374 = vld [vmem:[#allocation6 + $0x358] sm:$0xff]
          %v375 = vld [vmem:[#allocation6 + $0x360] sm:$0xff]
          %v376 = vld [vmem:[#allocation6 + $0x368] sm:$0xff]
          %v377 = vld [vmem:[#allocation6 + $0x370] sm:$0xff]
          %v378 = vld [vmem:[#allocation6 + $0x378] sm:$0xff]
          %v379 = vld [vmem:[#allocation6 + $0x380] sm:$0xff]
          %v380 = vld [vmem:[#allocation6 + $0x388] sm:$0xff]
          %v381 = vld [vmem:[#allocation6 + $0x390] sm:$0xff]
          %v382 = vld [vmem:[#allocation6 + $0x398] sm:$0xff]
          %v383 = vld [vmem:[#allocation6 + $0x3a0] sm:$0xff]
          %v384 = vld [vmem:[#allocation6 + $0x3a8] sm:$0xff]
          %v385 = vld [vmem:[#allocation6 + $0x3b0] sm:$0xff]
          %v386 = vld [vmem:[#allocation6 + $0x3b8] sm:$0xff]
          %v387 = vld [vmem:[#allocation6 + $0x3c0] sm:$0xff]
          %v388 = vld [vmem:[#allocation6 + $0x3c8] sm:$0xff]
          %v389 = vld [vmem:[#allocation6 + $0x3d0] sm:$0xff]
          %v390 = vld [vmem:[#allocation6 + $0x3d8] sm:$0xff]
          %v391 = vld [vmem:[#allocation6 + $0x3e0] sm:$0xff]
          %v392 = vld [vmem:[#allocation6 + $0x3e8] sm:$0xff]
          %v393 = vld [vmem:[#allocation6 + $0x3f0] sm:$0xff]
          %v394 = vld [vmem:[#allocation6 + $0x3f8] sm:$0xff]
          %v395 = vld [vmem:[#allocation6 + $0x400] sm:$0xff]
          %v396 = vld [vmem:[#allocation6 + $0x408] sm:$0xff]
          %v397 = vld [vmem:[#allocation6 + $0x410] sm:$0xff]
          %v398 = vld [vmem:[#allocation6 + $0x418] sm:$0xff]
          %v399 = vld [vmem:[#allocation6 + $0x420] sm:$0xff]
          %v400 = vld [vmem:[#allocation6 + $0x428] sm:$0xff]
          %v401 = vld [vmem:[#allocation6 + $0x430] sm:$0xff]
          %v402 = vld [vmem:[#allocation6 + $0x438] sm:$0xff]
          %v403 = vld [vmem:[#allocation6 + $0x440] sm:$0xff]
          %v404 = vld [vmem:[#allocation6 + $0x448] sm:$0xff]
          %v405 = vld [vmem:[#allocation6 + $0x450] sm:$0xff]
          %v406 = vld [vmem:[#allocation6 + $0x458] sm:$0xff]
          %v407 = vld [vmem:[#allocation6 + $0x460] sm:$0xff]
          %v408 = vld [vmem:[#allocation6 + $0x468] sm:$0xff]
          %v409 = vld [vmem:[#allocation6 + $0x470] sm:$0xff]
          %v410 = vld [vmem:[#allocation6 + $0x478] sm:$0xff]
          %v411 = vld [vmem:[#allocation6 + $0x480] sm:$0xff]
          %v412 = vld [vmem:[#allocation6 + $0x488] sm:$0xff]
          %v413 = vld [vmem:[#allocation6 + $0x490] sm:$0xff]
          %v414 = vld [vmem:[#allocation6 + $0x498] sm:$0xff]
          %v415 = vld [vmem:[#allocation6 + $0x4a0] sm:$0xff]
          %v416 = vld [vmem:[#allocation6 + $0x4a8] sm:$0xff]
          %v417 = vld [vmem:[#allocation6 + $0x4b0] sm:$0xff]
          %v418 = vld [vmem:[#allocation6 + $0x4b8] sm:$0xff]
          %v419 = vld [vmem:[#allocation6 + $0x4c0] sm:$0xff]
          %v420 = vld [vmem:[#allocation6 + $0x4c8] sm:$0xff]
          %v421 = vld [vmem:[#allocation6 + $0x4d0] sm:$0xff]
          %v422 = vld [vmem:[#allocation6 + $0x4d8] sm:$0xff]
          %v423 = vld [vmem:[#allocation6 + $0x4e0] sm:$0xff]
          %v424 = vld [vmem:[#allocation6 + $0x4e8] sm:$0xff]
          %v425 = vld [vmem:[#allocation6 + $0x4f0] sm:$0xff]
          %v426 = vld [vmem:[#allocation6 + $0x4f8] sm:$0xff]
          %v427 = vld [vmem:[#allocation6 + $0x500] sm:$0xff]
          %v428 = vld [vmem:[#allocation6 + $0x508] sm:$0xff]
          %v429 = vld [vmem:[#allocation6 + $0x510] sm:$0xff]
          %v430 = vld [vmem:[#allocation6 + $0x518] sm:$0xff]
          %v431 = vld [vmem:[#allocation6 + $0x520] sm:$0xff]
          %v432 = vld [vmem:[#allocation6 + $0x528] sm:$0xff]
          %v433 = vld [vmem:[#allocation6 + $0x530] sm:$0xff]
          %v434 = vld [vmem:[#allocation6 + $0x538] sm:$0xff]
          %v435 = vld [vmem:[#allocation6 + $0x540] sm:$0xff]
          %v436 = vld [vmem:[#allocation6 + $0x548] sm:$0xff]
          %v437 = vld [vmem:[#allocation6 + $0x550] sm:$0xff]
          %v438 = vld [vmem:[#allocation6 + $0x558] sm:$0xff]
          %v439 = vld [vmem:[#allocation6 + $0x560] sm:$0xff]
          %v440 = vld [vmem:[#allocation6 + $0x568] sm:$0xff]
          %v441 = vld [vmem:[#allocation6 + $0x570] sm:$0xff]
          %v442 = vld [vmem:[#allocation6 + $0x578] sm:$0xff]
          %v443 = vld [vmem:[#allocation6 + $0x580] sm:$0xff]
          %v444 = vld [vmem:[#allocation6 + $0x588] sm:$0xff]
          %v445 = vld [vmem:[#allocation6 + $0x590] sm:$0xff]
          %v446 = vld [vmem:[#allocation6 + $0x598] sm:$0xff]
          %v447 = vld [vmem:[#allocation6 + $0x5a0] sm:$0xff]
          %v448 = vld [vmem:[#allocation6 + $0x5a8] sm:$0xff]
          %v449 = vld [vmem:[#allocation6 + $0x5b0] sm:$0xff]
          %v450 = vld [vmem:[#allocation6 + $0x5b8] sm:$0xff]
          %v451 = vld [vmem:[#allocation6 + $0x5c0] sm:$0xff]
          %v452 = vld [vmem:[#allocation6 + $0x5c8] sm:$0xff]
          %v453 = vld [vmem:[#allocation6 + $0x5d0] sm:$0xff]
          %v454 = vld [vmem:[#allocation6 + $0x5d8] sm:$0xff]
          %v455 = vld [vmem:[#allocation6 + $0x5e0] sm:$0xff]
          %v456 = vld [vmem:[#allocation6 + $0x5e8] sm:$0xff]
          %v457 = vld [vmem:[#allocation6 + $0x5f0] sm:$0xff]
          %v458 = vld [vmem:[#allocation6 + $0x5f8] sm:$0xff]
          %v459 = vld [vmem:[%s228] sm:$0xff]
          %v460 = vld [vmem:[%s228 + $0x8] sm:$0xff]
          %v461 = vld [vmem:[%s228 + $0x10] sm:$0xff]
          %v462 = vld [vmem:[%s228 + $0x18] sm:$0xff]
          %v463 = vld [vmem:[%s228 + $0x20] sm:$0xff]
          %v464 = vld [vmem:[%s228 + $0x28] sm:$0xff]
          %v465 = vld [vmem:[%s228 + $0x30] sm:$0xff]
          %v466 = vld [vmem:[%s228 + $0x38] sm:$0xff]
          %v467 = vld [vmem:[%s228 + $0x40] sm:$0xff]
          %v468 = vld [vmem:[%s228 + $0x48] sm:$0xff]
          %v469 = vld [vmem:[%s228 + $0x50] sm:$0xff]
          %v470 = vld [vmem:[%s228 + $0x58] sm:$0xff]
          %v471 = vld [vmem:[%s228 + $0x60] sm:$0xff]
          %v472 = vld [vmem:[%s228 + $0x68] sm:$0xff]
          %v473 = vld [vmem:[%s228 + $0x70] sm:$0xff]
          %v474 = vld [vmem:[%s228 + $0x78] sm:$0xff]
          %v475 = vld [vmem:[%s228 + $0x80] sm:$0xff]
          %v476 = vld [vmem:[%s228 + $0x88] sm:$0xff]
          %v477 = vld [vmem:[%s228 + $0x90] sm:$0xff]
          %v478 = vld [vmem:[%s228 + $0x98] sm:$0xff]
          %v479 = vld [vmem:[%s228 + $0xa0] sm:$0xff]
          %v480 = vld [vmem:[%s228 + $0xa8] sm:$0xff]
          %v481 = vld [vmem:[%s228 + $0xb0] sm:$0xff]
          %v482 = vld [vmem:[%s228 + $0xb8] sm:$0xff]
          %v483 = vld [vmem:[%s228 + $0xc0] sm:$0xff]
          %v484 = vld [vmem:[%s228 + $0xc8] sm:$0xff]
          %v485 = vld [vmem:[%s228 + $0xd0] sm:$0xff]
          %v486 = vld [vmem:[%s228 + $0xd8] sm:$0xff]
          %v487 = vld [vmem:[%s228 + $0xe0] sm:$0xff]
          %v488 = vld [vmem:[%s228 + $0xe8] sm:$0xff]
          %v489 = vld [vmem:[%s228 + $0xf0] sm:$0xff]
          %v490 = vld [vmem:[%s228 + $0xf8] sm:$0xff]
          %v491 = vld [vmem:[%s228 + $0x100] sm:$0xff]
          %v492 = vld [vmem:[%s228 + $0x108] sm:$0xff]
          %v493 = vld [vmem:[%s228 + $0x110] sm:$0xff]
          %v494 = vld [vmem:[%s228 + $0x118] sm:$0xff]
          %v495 = vld [vmem:[%s228 + $0x120] sm:$0xff]
          %v496 = vld [vmem:[%s228 + $0x128] sm:$0xff]
          %v497 = vld [vmem:[%s228 + $0x130] sm:$0xff]
          %v498 = vld [vmem:[%s228 + $0x138] sm:$0xff]
          %v499 = vld [vmem:[%s228 + $0x140] sm:$0xff]
          %v500 = vld [vmem:[%s228 + $0x148] sm:$0xff]
          %v501 = vld [vmem:[%s228 + $0x150] sm:$0xff]
          %v502 = vld [vmem:[%s228 + $0x158] sm:$0xff]
          %v503 = vld [vmem:[%s228 + $0x160] sm:$0xff]
          %v504 = vld [vmem:[%s228 + $0x168] sm:$0xff]
          %v505 = vld [vmem:[%s228 + $0x170] sm:$0xff]
          %v506 = vld [vmem:[%s228 + $0x178] sm:$0xff]
          %v507 = vld [vmem:[%s228 + $0x180] sm:$0xff]
          %v508 = vld [vmem:[%s228 + $0x188] sm:$0xff]
          %v509 = vld [vmem:[%s228 + $0x190] sm:$0xff]
          %v510 = vld [vmem:[%s228 + $0x198] sm:$0xff]
          %v511 = vld [vmem:[%s228 + $0x1a0] sm:$0xff]
          %v512 = vld [vmem:[%s228 + $0x1a8] sm:$0xff]
          %v513 = vld [vmem:[%s228 + $0x1b0] sm:$0xff]
          %v514 = vld [vmem:[%s228 + $0x1b8] sm:$0xff]
          %v515 = vld [vmem:[%s228 + $0x1c0] sm:$0xff]
          %v516 = vld [vmem:[%s228 + $0x1c8] sm:$0xff]
          %v517 = vld [vmem:[%s228 + $0x1d0] sm:$0xff]
          %v518 = vld [vmem:[%s228 + $0x1d8] sm:$0xff]
          %v519 = vld [vmem:[%s228 + $0x1e0] sm:$0xff]
          %v520 = vld [vmem:[%s228 + $0x1e8] sm:$0xff]
          %v521 = vld [vmem:[%s228 + $0x1f0] sm:$0xff]
          %v522 = vld [vmem:[%s228 + $0x1f8] sm:$0xff]
          %523 = vmatprep.subr.mxu0 %v490
          %524 = vmatpush1.msra.mxu0 %v489
          %525 = vmatprep.subr.mxu0 %v488
          %526 = vmatpush1.msra.mxu0 %v487
          %527 = vmatprep.subr.mxu0 %v486
          %528 = vmatpush1.msra.mxu0 %v485
          %529 = vmatprep.subr.mxu0 %v484
          %530 = vmatpush1.msra.mxu0 %v483
          %531 = vmatprep.subr.mxu0 %v482
          %532 = vmatpush1.msra.mxu0 %v481
          %533 = vmatprep.subr.mxu0 %v480
          %534 = vmatpush1.msra.mxu0 %v479
          %535 = vmatprep.subr.mxu0 %v478
          %536 = vmatpush1.msra.mxu0 %v477
          %537 = vmatprep.subr.mxu0 %v476
          %538 = vmatpush1.msra.mxu0 %v475
          %539 = vmatprep.subr.mxu0 %v474
          %540 = vmatpush1.msra.mxu0 %v473
          %541 = vmatprep.subr.mxu0 %v472
          %542 = vmatpush1.msra.mxu0 %v471
          %543 = vmatprep.subr.mxu0 %v470
          %544 = vmatpush1.msra.mxu0 %v469
          %545 = vmatprep.subr.mxu0 %v468
          %546 = vmatpush1.msra.mxu0 %v467
          %547 = vmatprep.subr.mxu0 %v466
          %548 = vmatpush1.msra.mxu0 %v465
          %549 = vmatprep.subr.mxu0 %v464
          %550 = vmatpush1.msra.mxu0 %v463
          %551 = vmatprep.subr.mxu0 %v462
          %552 = vmatpush1.msra.mxu0 %v461
          %553 = vmatprep.subr.mxu0 %v460
          %554 = vmatpush1.msra.mxu0 %v459
          %555 = vmatprep.subr.mxu0 %v522
          %556 = vmatpush2.msra.mxu0 %v521
          %557 = vmatprep.subr.mxu0 %v520
          %558 = vmatpush2.msra.mxu0 %v519
          %559 = vmatprep.subr.mxu0 %v518
          %560 = vmatpush2.msra.mxu0 %v517
          %561 = vmatprep.subr.mxu0 %v516
          %562 = vmatpush2.msra.mxu0 %v515
          %563 = vmatprep.subr.mxu0 %v514
          %564 = vmatpush2.msra.mxu0 %v513
          %565 = vmatprep.subr.mxu0 %v512
          %566 = vmatpush2.msra.mxu0 %v511
          %567 = vmatprep.subr.mxu0 %v510
          %568 = vmatpush2.msra.mxu0 %v509
          %569 = vmatprep.subr.mxu0 %v508
          %570 = vmatpush2.msra.mxu0 %v507
          %571 = vmatprep.subr.mxu0 %v506
          %572 = vmatpush2.msra.mxu0 %v505
          %573 = vmatprep.subr.mxu0 %v504
          %574 = vmatpush2.msra.mxu0 %v503
          %575 = vmatprep.subr.mxu0 %v502
          %576 = vmatpush2.msra.mxu0 %v501
          %577 = vmatprep.subr.mxu0 %v500
          %578 = vmatpush2.msra.mxu0 %v499
          %579 = vmatprep.subr.mxu0 %v498
          %580 = vmatpush2.msra.mxu0 %v497
          %581 = vmatprep.subr.mxu0 %v496
          %582 = vmatpush2.msra.mxu0 %v495
          %583 = vmatprep.subr.mxu0 %v494
          %584 = vmatpush2.msra.mxu0 %v493
          %585 = vmatprep.subr.mxu0 %v492
          %586 = vmatpush2.msra.mxu0 %v491
          %587 = vmatprep.mubr.f32.mxu0 %v268
          %588 = vmatmul.mubr.f32.gmra.mxu0 %v267
          %v589 = vpop.f32.mrf.mxu0
          %v590 = vadd.f32 0.0, %v589
          %v591 = vpop.f32.mrf.mxu0
          %v592 = vadd.f32 0.0, %v591
          %593 = vmatprep.mubr.f32.mxu0 %v270
          %594 = vmatmul.mubr.f32.gmra.mxu0 %v269
          %v595 = vpop.f32.mrf.mxu0
          %v596 = vadd.f32 0.0, %v595
          %v597 = vpop.f32.mrf.mxu0
          %v598 = vadd.f32 0.0, %v597
          %599 = vmatprep.mubr.f32.mxu0 %v272
          %600 = vmatmul.mubr.f32.gmra.mxu0 %v271
          %v601 = vpop.f32.mrf.mxu0
          %v602 = vadd.f32 0.0, %v601
          %v603 = vpop.f32.mrf.mxu0
          %v604 = vadd.f32 0.0, %v603
          %605 = vmatprep.mubr.f32.mxu0 %v274
          %606 = vmatmul.mubr.f32.gmra.mxu0 %v273
          %v607 = vpop.f32.mrf.mxu0
          %v608 = vadd.f32 0.0, %v607
          %v609 = vpop.f32.mrf.mxu0
          %v610 = vadd.f32 0.0, %v609
          %611 = vmatprep.mubr.f32.mxu0 %v276
          %612 = vmatmul.mubr.f32.gmra.mxu0 %v275
          %v613 = vpop.f32.mrf.mxu0
          %v614 = vadd.f32 0.0, %v613
          %v615 = vpop.f32.mrf.mxu0
          %v616 = vadd.f32 0.0, %v615
          %617 = vmatprep.mubr.f32.mxu0 %v278
          %618 = vmatmul.mubr.f32.gmra.mxu0 %v277
          %v619 = vpop.f32.mrf.mxu0
          %v620 = vadd.f32 0.0, %v619
          %v621 = vpop.f32.mrf.mxu0
          %v622 = vadd.f32 0.0, %v621
          %623 = vmatprep.mubr.f32.mxu0 %v280
          %624 = vmatmul.mubr.f32.gmra.mxu0 %v279
          %v625 = vpop.f32.mrf.mxu0
          %v626 = vadd.f32 0.0, %v625
          %v627 = vpop.f32.mrf.mxu0
          %v628 = vadd.f32 0.0, %v627
          %629 = vmatprep.mubr.f32.mxu0 %v282
          %630 = vmatmul.mubr.f32.gmra.mxu0 %v281
          %v631 = vpop.f32.mrf.mxu0
          %v632 = vadd.f32 0.0, %v631
          %v633 = vpop.f32.mrf.mxu0
          %v634 = vadd.f32 0.0, %v633
          %635 = vmatprep.mubr.f32.mxu0 %v284
          %636 = vmatmul.mubr.f32.gmra.mxu0 %v283
          %v637 = vpop.f32.mrf.mxu0
          %v638 = vadd.f32 0.0, %v637
          %v639 = vpop.f32.mrf.mxu0
          %v640 = vadd.f32 0.0, %v639
          %641 = vmatprep.mubr.f32.mxu0 %v286
          %642 = vmatmul.mubr.f32.gmra.mxu0 %v285
          %v643 = vpop.f32.mrf.mxu0
          %v644 = vadd.f32 0.0, %v643
          %v645 = vpop.f32.mrf.mxu0
          %v646 = vadd.f32 0.0, %v645
          %647 = vmatprep.mubr.f32.mxu0 %v288
          %648 = vmatmul.mubr.f32.gmra.mxu0 %v287
          %v649 = vpop.f32.mrf.mxu0
          %v650 = vadd.f32 0.0, %v649
          %v651 = vpop.f32.mrf.mxu0
          %v652 = vadd.f32 0.0, %v651
          %653 = vmatprep.mubr.f32.mxu0 %v290
          %654 = vmatmul.mubr.f32.gmra.mxu0 %v289
          %v655 = vpop.f32.mrf.mxu0
          %v656 = vadd.f32 0.0, %v655
          %v657 = vpop.f32.mrf.mxu0
          %v658 = vadd.f32 0.0, %v657
          %659 = vmatprep.mubr.f32.mxu0 %v292
          %660 = vmatmul.mubr.f32.gmra.mxu0 %v291
          %v661 = vpop.f32.mrf.mxu0
          %v662 = vadd.f32 0.0, %v661
          %v663 = vpop.f32.mrf.mxu0
          %v664 = vadd.f32 0.0, %v663
          %665 = vmatprep.mubr.f32.mxu0 %v294
          %666 = vmatmul.mubr.f32.gmra.mxu0 %v293
          %v667 = vpop.f32.mrf.mxu0
          %v668 = vadd.f32 0.0, %v667
          %v669 = vpop.f32.mrf.mxu0
          %v670 = vadd.f32 0.0, %v669
          %671 = vmatprep.mubr.f32.mxu0 %v296
          %672 = vmatmul.mubr.f32.gmra.mxu0 %v295
          %v673 = vpop.f32.mrf.mxu0
          %v674 = vadd.f32 0.0, %v673
          %v675 = vpop.f32.mrf.mxu0
          %v676 = vadd.f32 0.0, %v675
          %677 = vmatprep.mubr.f32.mxu0 %v298
          %678 = vmatmul.mubr.f32.gmra.mxu0 %v297
          %v679 = vpop.f32.mrf.mxu0
          %v680 = vadd.f32 0.0, %v679
          %v681 = vpop.f32.mrf.mxu0
          %v682 = vadd.f32 0.0, %v681
          %683 = vmatprep.mubr.f32.mxu0 %v300
          %684 = vmatmul.mubr.f32.gmra.mxu0 %v299
          %v685 = vpop.f32.mrf.mxu0
          %v686 = vadd.f32 0.0, %v685
          %v687 = vpop.f32.mrf.mxu0
          %v688 = vadd.f32 0.0, %v687
          %689 = vmatprep.mubr.f32.mxu0 %v302
          %690 = vmatmul.mubr.f32.gmra.mxu0 %v301
          %v691 = vpop.f32.mrf.mxu0
          %v692 = vadd.f32 0.0, %v691
          %v693 = vpop.f32.mrf.mxu0
          %v694 = vadd.f32 0.0, %v693
          %695 = vmatprep.mubr.f32.mxu0 %v304
          %696 = vmatmul.mubr.f32.gmra.mxu0 %v303
          %v697 = vpop.f32.mrf.mxu0
          %v698 = vadd.f32 0.0, %v697
          %v699 = vpop.f32.mrf.mxu0
          %v700 = vadd.f32 0.0, %v699
          %701 = vmatprep.mubr.f32.mxu0 %v306
          %702 = vmatmul.mubr.f32.gmra.mxu0 %v305
          %v703 = vpop.f32.mrf.mxu0
          %v704 = vadd.f32 0.0, %v703
          %v705 = vpop.f32.mrf.mxu0
          %v706 = vadd.f32 0.0, %v705
          %707 = vmatprep.mubr.f32.mxu0 %v308
          %708 = vmatmul.mubr.f32.gmra.mxu0 %v307
          %v709 = vpop.f32.mrf.mxu0
          %v710 = vadd.f32 0.0, %v709
          %v711 = vpop.f32.mrf.mxu0
          %v712 = vadd.f32 0.0, %v711
          %713 = vmatprep.mubr.f32.mxu0 %v310
          %714 = vmatmul.mubr.f32.gmra.mxu0 %v309
          %v715 = vpop.f32.mrf.mxu0
          %v716 = vadd.f32 0.0, %v715
          %v717 = vpop.f32.mrf.mxu0
          %v718 = vadd.f32 0.0, %v717
          %719 = vmatprep.mubr.f32.mxu0 %v312
          %720 = vmatmul.mubr.f32.gmra.mxu0 %v311
          %v721 = vpop.f32.mrf.mxu0
          %v722 = vadd.f32 0.0, %v721
          %v723 = vpop.f32.mrf.mxu0
          %v724 = vadd.f32 0.0, %v723
          %725 = vmatprep.mubr.f32.mxu0 %v314
          %726 = vmatmul.mubr.f32.gmra.mxu0 %v313
          %v727 = vpop.f32.mrf.mxu0
          %v728 = vadd.f32 0.0, %v727
          %v729 = vpop.f32.mrf.mxu0
          %v730 = vadd.f32 0.0, %v729
          %731 = vmatprep.mubr.f32.mxu0 %v316
          %732 = vmatmul.mubr.f32.gmra.mxu0 %v315
          %v733 = vpop.f32.mrf.mxu0
          %v734 = vadd.f32 0.0, %v733
          %v735 = vpop.f32.mrf.mxu0
          %v736 = vadd.f32 0.0, %v735
          %737 = vmatprep.mubr.f32.mxu0 %v318
          %738 = vmatmul.mubr.f32.gmra.mxu0 %v317
          %v739 = vpop.f32.mrf.mxu0
          %v740 = vadd.f32 0.0, %v739
          %v741 = vpop.f32.mrf.mxu0
          %v742 = vadd.f32 0.0, %v741
          %743 = vmatprep.mubr.f32.mxu0 %v320
          %744 = vmatmul.mubr.f32.gmra.mxu0 %v319
          %v745 = vpop.f32.mrf.mxu0
          %v746 = vadd.f32 0.0, %v745
          %v747 = vpop.f32.mrf.mxu0
          %v748 = vadd.f32 0.0, %v747
          %749 = vmatprep.mubr.f32.mxu0 %v322
          %750 = vmatmul.mubr.f32.gmra.mxu0 %v321
          %v751 = vpop.f32.mrf.mxu0
          %v752 = vadd.f32 0.0, %v751
          %v753 = vpop.f32.mrf.mxu0
          %v754 = vadd.f32 0.0, %v753
          %755 = vmatprep.mubr.f32.mxu0 %v324
          %756 = vmatmul.mubr.f32.gmra.mxu0 %v323
          %v757 = vpop.f32.mrf.mxu0
          %v758 = vadd.f32 0.0, %v757
          %v759 = vpop.f32.mrf.mxu0
          %v760 = vadd.f32 0.0, %v759
          %761 = vmatprep.mubr.f32.mxu0 %v326
          %762 = vmatmul.mubr.f32.gmra.mxu0 %v325
          %v763 = vpop.f32.mrf.mxu0
          %v764 = vadd.f32 0.0, %v763
          %v765 = vpop.f32.mrf.mxu0
          %v766 = vadd.f32 0.0, %v765
          %767 = vmatprep.mubr.f32.mxu0 %v328
          %768 = vmatmul.mubr.f32.gmra.mxu0 %v327
          %v769 = vpop.f32.mrf.mxu0
          %v770 = vadd.f32 0.0, %v769
          %v771 = vpop.f32.mrf.mxu0
          %v772 = vadd.f32 0.0, %v771
          %773 = vmatprep.mubr.f32.mxu0 %v330
          %774 = vmatmul.mubr.f32.gmra.mxu0 %v329
          %v775 = vpop.f32.mrf.mxu0
          %v776 = vadd.f32 0.0, %v775
          %v777 = vpop.f32.mrf.mxu0
          %v778 = vadd.f32 0.0, %v777
          %779 = vmatprep.mubr.f32.mxu0 %v332
          %780 = vmatmul.mubr.f32.gmra.mxu0 %v331
          %v781 = vpop.f32.mrf.mxu0
          %v782 = vadd.f32 0.0, %v781
          %v783 = vpop.f32.mrf.mxu0
          %v784 = vadd.f32 0.0, %v783
          %785 = vmatprep.mubr.f32.mxu0 %v334
          %786 = vmatmul.mubr.f32.gmra.mxu0 %v333
          %v787 = vpop.f32.mrf.mxu0
          %v788 = vadd.f32 0.0, %v787
          %v789 = vpop.f32.mrf.mxu0
          %v790 = vadd.f32 0.0, %v789
          %791 = vmatprep.mubr.f32.mxu0 %v336
          %792 = vmatmul.mubr.f32.gmra.mxu0 %v335
          %v793 = vpop.f32.mrf.mxu0
          %v794 = vadd.f32 0.0, %v793
          %v795 = vpop.f32.mrf.mxu0
          %v796 = vadd.f32 0.0, %v795
          %797 = vmatprep.mubr.f32.mxu0 %v338
          %798 = vmatmul.mubr.f32.gmra.mxu0 %v337
          %v799 = vpop.f32.mrf.mxu0
          %v800 = vadd.f32 0.0, %v799
          %v801 = vpop.f32.mrf.mxu0
          %v802 = vadd.f32 0.0, %v801
          %803 = vmatprep.mubr.f32.mxu0 %v340
          %804 = vmatmul.mubr.f32.gmra.mxu0 %v339
          %v805 = vpop.f32.mrf.mxu0
          %v806 = vadd.f32 0.0, %v805
          %v807 = vpop.f32.mrf.mxu0
          %v808 = vadd.f32 0.0, %v807
          %809 = vmatprep.mubr.f32.mxu0 %v342
          %810 = vmatmul.mubr.f32.gmra.mxu0 %v341
          %v811 = vpop.f32.mrf.mxu0
          %v812 = vadd.f32 0.0, %v811
          %v813 = vpop.f32.mrf.mxu0
          %v814 = vadd.f32 0.0, %v813
          %815 = vmatprep.mubr.f32.mxu0 %v344
          %816 = vmatmul.mubr.f32.gmra.mxu0 %v343
          %v817 = vpop.f32.mrf.mxu0
          %v818 = vadd.f32 0.0, %v817
          %v819 = vpop.f32.mrf.mxu0
          %v820 = vadd.f32 0.0, %v819
          %821 = vmatprep.mubr.f32.mxu0 %v346
          %822 = vmatmul.mubr.f32.gmra.mxu0 %v345
          %v823 = vpop.f32.mrf.mxu0
          %v824 = vadd.f32 0.0, %v823
          %v825 = vpop.f32.mrf.mxu0
          %v826 = vadd.f32 0.0, %v825
          %827 = vmatprep.mubr.f32.mxu0 %v348
          %828 = vmatmul.mubr.f32.gmra.mxu0 %v347
          %v829 = vpop.f32.mrf.mxu0
          %v830 = vadd.f32 0.0, %v829
          %v831 = vpop.f32.mrf.mxu0
          %v832 = vadd.f32 0.0, %v831
          %833 = vmatprep.mubr.f32.mxu0 %v350
          %834 = vmatmul.mubr.f32.gmra.mxu0 %v349
          %v835 = vpop.f32.mrf.mxu0
          %v836 = vadd.f32 0.0, %v835
          %v837 = vpop.f32.mrf.mxu0
          %v838 = vadd.f32 0.0, %v837
          %839 = vmatprep.mubr.f32.mxu0 %v352
          %840 = vmatmul.mubr.f32.gmra.mxu0 %v351
          %v841 = vpop.f32.mrf.mxu0
          %v842 = vadd.f32 0.0, %v841
          %v843 = vpop.f32.mrf.mxu0
          %v844 = vadd.f32 0.0, %v843
          %845 = vmatprep.mubr.f32.mxu0 %v354
          %846 = vmatmul.mubr.f32.gmra.mxu0 %v353
          %v847 = vpop.f32.mrf.mxu0
          %v848 = vadd.f32 0.0, %v847
          %v849 = vpop.f32.mrf.mxu0
          %v850 = vadd.f32 0.0, %v849
          %851 = vmatprep.mubr.f32.mxu0 %v356
          %852 = vmatmul.mubr.f32.gmra.mxu0 %v355
          %v853 = vpop.f32.mrf.mxu0
          %v854 = vadd.f32 0.0, %v853
          %v855 = vpop.f32.mrf.mxu0
          %v856 = vadd.f32 0.0, %v855
          %857 = vmatprep.mubr.f32.mxu0 %v358
          %858 = vmatmul.mubr.f32.gmra.mxu0 %v357
          %v859 = vpop.f32.mrf.mxu0
          %v860 = vadd.f32 0.0, %v859
          %v861 = vpop.f32.mrf.mxu0
          %v862 = vadd.f32 0.0, %v861
          %863 = vmatprep.mubr.f32.mxu0 %v360
          %864 = vmatmul.mubr.f32.gmra.mxu0 %v359
          %v865 = vpop.f32.mrf.mxu0
          %v866 = vadd.f32 0.0, %v865
          %v867 = vpop.f32.mrf.mxu0
          %v868 = vadd.f32 0.0, %v867
          %869 = vmatprep.mubr.f32.mxu0 %v362
          %870 = vmatmul.mubr.f32.gmra.mxu0 %v361
          %v871 = vpop.f32.mrf.mxu0
          %v872 = vadd.f32 0.0, %v871
          %v873 = vpop.f32.mrf.mxu0
          %v874 = vadd.f32 0.0, %v873
          %875 = vmatprep.mubr.f32.mxu0 %v364
          %876 = vmatmul.mubr.f32.gmra.mxu0 %v363
          %v877 = vpop.f32.mrf.mxu0
          %v878 = vadd.f32 0.0, %v877
          %v879 = vpop.f32.mrf.mxu0
          %v880 = vadd.f32 0.0, %v879
          %881 = vmatprep.mubr.f32.mxu0 %v366
          %882 = vmatmul.mubr.f32.gmra.mxu0 %v365
          %v883 = vpop.f32.mrf.mxu0
          %v884 = vadd.f32 0.0, %v883
          %v885 = vpop.f32.mrf.mxu0
          %v886 = vadd.f32 0.0, %v885
          %887 = vmatprep.mubr.f32.mxu0 %v368
          %888 = vmatmul.mubr.f32.gmra.mxu0 %v367
          %v889 = vpop.f32.mrf.mxu0
          %v890 = vadd.f32 0.0, %v889
          %v891 = vpop.f32.mrf.mxu0
          %v892 = vadd.f32 0.0, %v891
          %893 = vmatprep.mubr.f32.mxu0 %v370
          %894 = vmatmul.mubr.f32.gmra.mxu0 %v369
          %v895 = vpop.f32.mrf.mxu0
          %v896 = vadd.f32 0.0, %v895
          %v897 = vpop.f32.mrf.mxu0
          %v898 = vadd.f32 0.0, %v897
          %899 = vmatprep.mubr.f32.mxu0 %v372
          %900 = vmatmul.mubr.f32.gmra.mxu0 %v371
          %v901 = vpop.f32.mrf.mxu0
          %v902 = vadd.f32 0.0, %v901
          %v903 = vpop.f32.mrf.mxu0
          %v904 = vadd.f32 0.0, %v903
          %905 = vmatprep.mubr.f32.mxu0 %v374
          %906 = vmatmul.mubr.f32.gmra.mxu0 %v373
          %v907 = vpop.f32.mrf.mxu0
          %v908 = vadd.f32 0.0, %v907
          %v909 = vpop.f32.mrf.mxu0
          %v910 = vadd.f32 0.0, %v909
          %911 = vmatprep.mubr.f32.mxu0 %v376
          %912 = vmatmul.mubr.f32.gmra.mxu0 %v375
          %v913 = vpop.f32.mrf.mxu0
          %v914 = vadd.f32 0.0, %v913
          %v915 = vpop.f32.mrf.mxu0
          %v916 = vadd.f32 0.0, %v915
          %917 = vmatprep.mubr.f32.mxu0 %v378
          %918 = vmatmul.mubr.f32.gmra.mxu0 %v377
          %v919 = vpop.f32.mrf.mxu0
          %v920 = vadd.f32 0.0, %v919
          %v921 = vpop.f32.mrf.mxu0
          %v922 = vadd.f32 0.0, %v921
          %923 = vmatprep.mubr.f32.mxu0 %v380
          %924 = vmatmul.mubr.f32.gmra.mxu0 %v379
          %v925 = vpop.f32.mrf.mxu0
          %v926 = vadd.f32 0.0, %v925
          %v927 = vpop.f32.mrf.mxu0
          %v928 = vadd.f32 0.0, %v927
          %929 = vmatprep.mubr.f32.mxu0 %v382
          %930 = vmatmul.mubr.f32.gmra.mxu0 %v381
          %v931 = vpop.f32.mrf.mxu0
          %v932 = vadd.f32 0.0, %v931
          %v933 = vpop.f32.mrf.mxu0
          %v934 = vadd.f32 0.0, %v933
          %935 = vmatprep.mubr.f32.mxu0 %v384
          %936 = vmatmul.mubr.f32.gmra.mxu0 %v383
          %v937 = vpop.f32.mrf.mxu0
          %v938 = vadd.f32 0.0, %v937
          %v939 = vpop.f32.mrf.mxu0
          %v940 = vadd.f32 0.0, %v939
          %941 = vmatprep.mubr.f32.mxu0 %v386
          %942 = vmatmul.mubr.f32.gmra.mxu0 %v385
          %v943 = vpop.f32.mrf.mxu0
          %v944 = vadd.f32 0.0, %v943
          %v945 = vpop.f32.mrf.mxu0
          %v946 = vadd.f32 0.0, %v945
          %947 = vmatprep.mubr.f32.mxu0 %v388
          %948 = vmatmul.mubr.f32.gmra.mxu0 %v387
          %v949 = vpop.f32.mrf.mxu0
          %v950 = vadd.f32 0.0, %v949
          %v951 = vpop.f32.mrf.mxu0
          %v952 = vadd.f32 0.0, %v951
          %953 = vmatprep.mubr.f32.mxu0 %v390
          %954 = vmatmul.mubr.f32.gmra.mxu0 %v389
          %v955 = vpop.f32.mrf.mxu0
          %v956 = vadd.f32 0.0, %v955
          %v957 = vpop.f32.mrf.mxu0
          %v958 = vadd.f32 0.0, %v957
          %959 = vmatprep.mubr.f32.mxu0 %v392
          %960 = vmatmul.mubr.f32.gmra.mxu0 %v391
          %v961 = vpop.f32.mrf.mxu0
          %v962 = vadd.f32 0.0, %v961
          %v963 = vpop.f32.mrf.mxu0
          %v964 = vadd.f32 0.0, %v963
          %965 = vmatprep.mubr.f32.mxu0 %v394
          %966 = vmatmul.mubr.f32.gmra.mxu0 %v393
          %v967 = vpop.f32.mrf.mxu0
          %v968 = vadd.f32 0.0, %v967
          %v969 = vpop.f32.mrf.mxu0
          %v970 = vadd.f32 0.0, %v969
          %971 = vmatprep.mubr.f32.mxu0 %v396
          %972 = vmatmul.mubr.f32.gmra.mxu0 %v395
          %v973 = vpop.f32.mrf.mxu0
          %v974 = vadd.f32 0.0, %v973
          %v975 = vpop.f32.mrf.mxu0
          %v976 = vadd.f32 0.0, %v975
          %977 = vmatprep.mubr.f32.mxu0 %v398
          %978 = vmatmul.mubr.f32.gmra.mxu0 %v397
          %v979 = vpop.f32.mrf.mxu0
          %v980 = vadd.f32 0.0, %v979
          %v981 = vpop.f32.mrf.mxu0
          %v982 = vadd.f32 0.0, %v981
          %983 = vmatprep.mubr.f32.mxu0 %v400
          %984 = vmatmul.mubr.f32.gmra.mxu0 %v399
          %v985 = vpop.f32.mrf.mxu0
          %v986 = vadd.f32 0.0, %v985
          %v987 = vpop.f32.mrf.mxu0
          %v988 = vadd.f32 0.0, %v987
          %989 = vmatprep.mubr.f32.mxu0 %v402
          %990 = vmatmul.mubr.f32.gmra.mxu0 %v401
          %v991 = vpop.f32.mrf.mxu0
          %v992 = vadd.f32 0.0, %v991
          %v993 = vpop.f32.mrf.mxu0
          %v994 = vadd.f32 0.0, %v993
          %995 = vmatprep.mubr.f32.mxu0 %v404
          %996 = vmatmul.mubr.f32.gmra.mxu0 %v403
          %v997 = vpop.f32.mrf.mxu0
          %v998 = vadd.f32 0.0, %v997
          %v999 = vpop.f32.mrf.mxu0
          %v1000 = vadd.f32 0.0, %v999
          %1001 = vmatprep.mubr.f32.mxu0 %v406
          %1002 = vmatmul.mubr.f32.gmra.mxu0 %v405
          %v1003 = vpop.f32.mrf.mxu0
          %v1004 = vadd.f32 0.0, %v1003
          %v1005 = vpop.f32.mrf.mxu0
          %v1006 = vadd.f32 0.0, %v1005
          %1007 = vmatprep.mubr.f32.mxu0 %v408
          %1008 = vmatmul.mubr.f32.gmra.mxu0 %v407
          %v1009 = vpop.f32.mrf.mxu0
          %v1010 = vadd.f32 0.0, %v1009
          %v1011 = vpop.f32.mrf.mxu0
          %v1012 = vadd.f32 0.0, %v1011
          %1013 = vmatprep.mubr.f32.mxu0 %v410
          %1014 = vmatmul.mubr.f32.gmra.mxu0 %v409
          %v1015 = vpop.f32.mrf.mxu0
          %v1016 = vadd.f32 0.0, %v1015
          %v1017 = vpop.f32.mrf.mxu0
          %v1018 = vadd.f32 0.0, %v1017
          %1019 = vmatprep.mubr.f32.mxu0 %v412
          %1020 = vmatmul.mubr.f32.gmra.mxu0 %v411
          %v1021 = vpop.f32.mrf.mxu0
          %v1022 = vadd.f32 0.0, %v1021
          %v1023 = vpop.f32.mrf.mxu0
          %v1024 = vadd.f32 0.0, %v1023
          %1025 = vmatprep.mubr.f32.mxu0 %v414
          %1026 = vmatmul.mubr.f32.gmra.mxu0 %v413
          %v1027 = vpop.f32.mrf.mxu0
          %v1028 = vadd.f32 0.0, %v1027
          %v1029 = vpop.f32.mrf.mxu0
          %v1030 = vadd.f32 0.0, %v1029
          %1031 = vmatprep.mubr.f32.mxu0 %v416
          %1032 = vmatmul.mubr.f32.gmra.mxu0 %v415
          %v1033 = vpop.f32.mrf.mxu0
          %v1034 = vadd.f32 0.0, %v1033
          %v1035 = vpop.f32.mrf.mxu0
          %v1036 = vadd.f32 0.0, %v1035
          %1037 = vmatprep.mubr.f32.mxu0 %v418
          %1038 = vmatmul.mubr.f32.gmra.mxu0 %v417
          %v1039 = vpop.f32.mrf.mxu0
          %v1040 = vadd.f32 0.0, %v1039
          %v1041 = vpop.f32.mrf.mxu0
          %v1042 = vadd.f32 0.0, %v1041
          %1043 = vmatprep.mubr.f32.mxu0 %v420
          %1044 = vmatmul.mubr.f32.gmra.mxu0 %v419
          %v1045 = vpop.f32.mrf.mxu0
          %v1046 = vadd.f32 0.0, %v1045
          %v1047 = vpop.f32.mrf.mxu0
          %v1048 = vadd.f32 0.0, %v1047
          %1049 = vmatprep.mubr.f32.mxu0 %v422
          %1050 = vmatmul.mubr.f32.gmra.mxu0 %v421
          %v1051 = vpop.f32.mrf.mxu0
          %v1052 = vadd.f32 0.0, %v1051
          %v1053 = vpop.f32.mrf.mxu0
          %v1054 = vadd.f32 0.0, %v1053
          %1055 = vmatprep.mubr.f32.mxu0 %v424
          %1056 = vmatmul.mubr.f32.gmra.mxu0 %v423
          %v1057 = vpop.f32.mrf.mxu0
          %v1058 = vadd.f32 0.0, %v1057
          %v1059 = vpop.f32.mrf.mxu0
          %v1060 = vadd.f32 0.0, %v1059
          %1061 = vmatprep.mubr.f32.mxu0 %v426
          %1062 = vmatmul.mubr.f32.gmra.mxu0 %v425
          %v1063 = vpop.f32.mrf.mxu0
          %v1064 = vadd.f32 0.0, %v1063
          %v1065 = vpop.f32.mrf.mxu0
          %v1066 = vadd.f32 0.0, %v1065
          %1067 = vmatprep.mubr.f32.mxu0 %v428
          %1068 = vmatmul.mubr.f32.gmra.mxu0 %v427
          %v1069 = vpop.f32.mrf.mxu0
          %v1070 = vadd.f32 0.0, %v1069
          %v1071 = vpop.f32.mrf.mxu0
          %v1072 = vadd.f32 0.0, %v1071
          %1073 = vmatprep.mubr.f32.mxu0 %v430
          %1074 = vmatmul.mubr.f32.gmra.mxu0 %v429
          %v1075 = vpop.f32.mrf.mxu0
          %v1076 = vadd.f32 0.0, %v1075
          %v1077 = vpop.f32.mrf.mxu0
          %v1078 = vadd.f32 0.0, %v1077
          %1079 = vmatprep.mubr.f32.mxu0 %v432
          %1080 = vmatmul.mubr.f32.gmra.mxu0 %v431
          %v1081 = vpop.f32.mrf.mxu0
          %v1082 = vadd.f32 0.0, %v1081
          %v1083 = vpop.f32.mrf.mxu0
          %v1084 = vadd.f32 0.0, %v1083
          %1085 = vmatprep.mubr.f32.mxu0 %v434
          %1086 = vmatmul.mubr.f32.gmra.mxu0 %v433
          %v1087 = vpop.f32.mrf.mxu0
          %v1088 = vadd.f32 0.0, %v1087
          %v1089 = vpop.f32.mrf.mxu0
          %v1090 = vadd.f32 0.0, %v1089
          %1091 = vmatprep.mubr.f32.mxu0 %v436
          %1092 = vmatmul.mubr.f32.gmra.mxu0 %v435
          %v1093 = vpop.f32.mrf.mxu0
          %v1094 = vadd.f32 0.0, %v1093
          %v1095 = vpop.f32.mrf.mxu0
          %v1096 = vadd.f32 0.0, %v1095
          %1097 = vmatprep.mubr.f32.mxu0 %v438
          %1098 = vmatmul.mubr.f32.gmra.mxu0 %v437
          %v1099 = vpop.f32.mrf.mxu0
          %v1100 = vadd.f32 0.0, %v1099
          %v1101 = vpop.f32.mrf.mxu0
          %v1102 = vadd.f32 0.0, %v1101
          %1103 = vmatprep.mubr.f32.mxu0 %v440
          %1104 = vmatmul.mubr.f32.gmra.mxu0 %v439
          %v1105 = vpop.f32.mrf.mxu0
          %v1106 = vadd.f32 0.0, %v1105
          %v1107 = vpop.f32.mrf.mxu0
          %v1108 = vadd.f32 0.0, %v1107
          %1109 = vmatprep.mubr.f32.mxu0 %v442
          %1110 = vmatmul.mubr.f32.gmra.mxu0 %v441
          %v1111 = vpop.f32.mrf.mxu0
          %v1112 = vadd.f32 0.0, %v1111
          %v1113 = vpop.f32.mrf.mxu0
          %v1114 = vadd.f32 0.0, %v1113
          %1115 = vmatprep.mubr.f32.mxu0 %v444
          %1116 = vmatmul.mubr.f32.gmra.mxu0 %v443
          %v1117 = vpop.f32.mrf.mxu0
          %v1118 = vadd.f32 0.0, %v1117
          %v1119 = vpop.f32.mrf.mxu0
          %v1120 = vadd.f32 0.0, %v1119
          %1121 = vmatprep.mubr.f32.mxu0 %v446
          %1122 = vmatmul.mubr.f32.gmra.mxu0 %v445
          %v1123 = vpop.f32.mrf.mxu0
          %v1124 = vadd.f32 0.0, %v1123
          %v1125 = vpop.f32.mrf.mxu0
          %v1126 = vadd.f32 0.0, %v1125
          %1127 = vmatprep.mubr.f32.mxu0 %v448
          %1128 = vmatmul.mubr.f32.gmra.mxu0 %v447
          %v1129 = vpop.f32.mrf.mxu0
          %v1130 = vadd.f32 0.0, %v1129
          %v1131 = vpop.f32.mrf.mxu0
          %v1132 = vadd.f32 0.0, %v1131
          %1133 = vmatprep.mubr.f32.mxu0 %v450
          %1134 = vmatmul.mubr.f32.gmra.mxu0 %v449
          %v1135 = vpop.f32.mrf.mxu0
          %v1136 = vadd.f32 0.0, %v1135
          %v1137 = vpop.f32.mrf.mxu0
          %v1138 = vadd.f32 0.0, %v1137
          %1139 = vmatprep.mubr.f32.mxu0 %v452
          %1140 = vmatmul.mubr.f32.gmra.mxu0 %v451
          %v1141 = vpop.f32.mrf.mxu0
          %v1142 = vadd.f32 0.0, %v1141
          %v1143 = vpop.f32.mrf.mxu0
          %v1144 = vadd.f32 0.0, %v1143
          %1145 = vmatprep.mubr.f32.mxu0 %v454
          %1146 = vmatmul.mubr.f32.gmra.mxu0 %v453
          %v1147 = vpop.f32.mrf.mxu0
          %v1148 = vadd.f32 0.0, %v1147
          %v1149 = vpop.f32.mrf.mxu0
          %v1150 = vadd.f32 0.0, %v1149
          %1151 = vmatprep.mubr.f32.mxu0 %v456
          %1152 = vmatmul.mubr.f32.gmra.mxu0 %v455
          %v1153 = vpop.f32.mrf.mxu0
          %v1154 = vadd.f32 0.0, %v1153
          %v1155 = vpop.f32.mrf.mxu0
          %v1156 = vadd.f32 0.0, %v1155
          %1157 = vmatprep.mubr.f32.mxu0 %v458
          %1158 = vmatmul.mubr.f32.gmra.mxu0 %v457
          %v1159 = vpop.f32.mrf.mxu0
          %v1160 = vadd.f32 0.0, %v1159
          %v1161 = vpop.f32.mrf.mxu0
          %v1162 = vadd.f32 0.0, %v1161
          %1163 = vdwg.mxu0
          %1164 = vst [vmem:[#allocation2] sm:$0xff] %v590
          %1165 = vst [vmem:[#allocation2 + $0x8] sm:$0xff] %v592
          %1166 = vst [vmem:[#allocation2 + $0x10] sm:$0xff] %v596
          %1167 = vst [vmem:[#allocation2 + $0x18] sm:$0xff] %v598
          %1168 = vst [vmem:[#allocation2 + $0x20] sm:$0xff] %v602
          %1169 = vst [vmem:[#allocation2 + $0x28] sm:$0xff] %v604
          %1170 = vst [vmem:[#allocation2 + $0x30] sm:$0xff] %v608
          %1171 = vst [vmem:[#allocation2 + $0x38] sm:$0xff] %v610
          %1172 = vst [vmem:[#allocation2 + $0x40] sm:$0xff] %v614
          %1173 = vst [vmem:[#allocation2 + $0x48] sm:$0xff] %v616
          %1174 = vst [vmem:[#allocation2 + $0x50] sm:$0xff] %v620
          %1175 = vst [vmem:[#allocation2 + $0x58] sm:$0xff] %v622
          %1176 = vst [vmem:[#allocation2 + $0x60] sm:$0xff] %v626
          %1177 = vst [vmem:[#allocation2 + $0x68] sm:$0xff] %v628
          %1178 = vst [vmem:[#allocation2 + $0x70] sm:$0xff] %v632
          %1179 = vst [vmem:[#allocation2 + $0x78] sm:$0xff] %v634
          %1180 = vst [vmem:[#allocation2 + $0x80] sm:$0xff] %v638
          %1181 = vst [vmem:[#allocation2 + $0x88] sm:$0xff] %v640
          %1182 = vst [vmem:[#allocation2 + $0x90] sm:$0xff] %v644
          %1183 = vst [vmem:[#allocation2 + $0x98] sm:$0xff] %v646
          %1184 = vst [vmem:[#allocation2 + $0xa0] sm:$0xff] %v650
          %1185 = vst [vmem:[#allocation2 + $0xa8] sm:$0xff] %v652
          %1186 = vst [vmem:[#allocation2 + $0xb0] sm:$0xff] %v656
          %1187 = vst [vmem:[#allocation2 + $0xb8] sm:$0xff] %v658
          %1188 = vst [vmem:[#allocation2 + $0xc0] sm:$0xff] %v662
          %1189 = vst [vmem:[#allocation2 + $0xc8] sm:$0xff] %v664
          %1190 = vst [vmem:[#allocation2 + $0xd0] sm:$0xff] %v668
          %1191 = vst [vmem:[#allocation2 + $0xd8] sm:$0xff] %v670
          %1192 = vst [vmem:[#allocation2 + $0xe0] sm:$0xff] %v674
          %1193 = vst [vmem:[#allocation2 + $0xe8] sm:$0xff] %v676
          %1194 = vst [vmem:[#allocation2 + $0xf0] sm:$0xff] %v680
          %1195 = vst [vmem:[#allocation2 + $0xf8] sm:$0xff] %v682
          %1196 = vst [vmem:[#allocation2 + $0x100] sm:$0xff] %v686
          %1197 = vst [vmem:[#allocation2 + $0x108] sm:$0xff] %v688
          %1198 = vst [vmem:[#allocation2 + $0x110] sm:$0xff] %v692
          %1199 = vst [vmem:[#allocation2 + $0x118] sm:$0xff] %v694
          %1200 = vst [vmem:[#allocation2 + $0x120] sm:$0xff] %v698
          %1201 = vst [vmem:[#allocation2 + $0x128] sm:$0xff] %v700
          %1202 = vst [vmem:[#allocation2 + $0x130] sm:$0xff] %v704
          %1203 = vst [vmem:[#allocation2 + $0x138] sm:$0xff] %v706
          %1204 = vst [vmem:[#allocation2 + $0x140] sm:$0xff] %v710
          %1205 = vst [vmem:[#allocation2 + $0x148] sm:$0xff] %v712
          %1206 = vst [vmem:[#allocation2 + $0x150] sm:$0xff] %v716
          %1207 = vst [vmem:[#allocation2 + $0x158] sm:$0xff] %v718
          %1208 = vst [vmem:[#allocation2 + $0x160] sm:$0xff] %v722
          %1209 = vst [vmem:[#allocation2 + $0x168] sm:$0xff] %v724
          %1210 = vst [vmem:[#allocation2 + $0x170] sm:$0xff] %v728
          %1211 = vst [vmem:[#allocation2 + $0x178] sm:$0xff] %v730
          %1212 = vst [vmem:[#allocation2 + $0x180] sm:$0xff] %v734
          %1213 = vst [vmem:[#allocation2 + $0x188] sm:$0xff] %v736
          %1214 = vst [vmem:[#allocation2 + $0x190] sm:$0xff] %v740
          %1215 = vst [vmem:[#allocation2 + $0x198] sm:$0xff] %v742
          %1216 = vst [vmem:[#allocation2 + $0x1a0] sm:$0xff] %v746
          %1217 = vst [vmem:[#allocation2 + $0x1a8] sm:$0xff] %v748
          %1218 = vst [vmem:[#allocation2 + $0x1b0] sm:$0xff] %v752
          %1219 = vst [vmem:[#allocation2 + $0x1b8] sm:$0xff] %v754
          %1220 = vst [vmem:[#allocation2 + $0x1c0] sm:$0xff] %v758
          %1221 = vst [vmem:[#allocation2 + $0x1c8] sm:$0xff] %v760
          %1222 = vst [vmem:[#allocation2 + $0x1d0] sm:$0xff] %v764
          %1223 = vst [vmem:[#allocation2 + $0x1d8] sm:$0xff] %v766
          %1224 = vst [vmem:[#allocation2 + $0x1e0] sm:$0xff] %v770
          %1225 = vst [vmem:[#allocation2 + $0x1e8] sm:$0xff] %v772
          %1226 = vst [vmem:[#allocation2 + $0x1f0] sm:$0xff] %v776
          %1227 = vst [vmem:[#allocation2 + $0x1f8] sm:$0xff] %v778
          %1228 = vst [vmem:[#allocation2 + $0x200] sm:$0xff] %v782
          %1229 = vst [vmem:[#allocation2 + $0x208] sm:$0xff] %v784
          %1230 = vst [vmem:[#allocation2 + $0x210] sm:$0xff] %v788
          %1231 = vst [vmem:[#allocation2 + $0x218] sm:$0xff] %v790
          %1232 = vst [vmem:[#allocation2 + $0x220] sm:$0xff] %v794
          %1233 = vst [vmem:[#allocation2 + $0x228] sm:$0xff] %v796
          %1234 = vst [vmem:[#allocation2 + $0x230] sm:$0xff] %v800
          %1235 = vst [vmem:[#allocation2 + $0x238] sm:$0xff] %v802
          %1236 = vst [vmem:[#allocation2 + $0x240] sm:$0xff] %v806
          %1237 = vst [vmem:[#allocation2 + $0x248] sm:$0xff] %v808
          %1238 = vst [vmem:[#allocation2 + $0x250] sm:$0xff] %v812
          %1239 = vst [vmem:[#allocation2 + $0x258] sm:$0xff] %v814
          %1240 = vst [vmem:[#allocation2 + $0x260] sm:$0xff] %v818
          %1241 = vst [vmem:[#allocation2 + $0x268] sm:$0xff] %v820
          %1242 = vst [vmem:[#allocation2 + $0x270] sm:$0xff] %v824
          %1243 = vst [vmem:[#allocation2 + $0x278] sm:$0xff] %v826
          %1244 = vst [vmem:[#allocation2 + $0x280] sm:$0xff] %v830
          %1245 = vst [vmem:[#allocation2 + $0x288] sm:$0xff] %v832
          %1246 = vst [vmem:[#allocation2 + $0x290] sm:$0xff] %v836
          %1247 = vst [vmem:[#allocation2 + $0x298] sm:$0xff] %v838
          %1248 = vst [vmem:[#allocation2 + $0x2a0] sm:$0xff] %v842
          %1249 = vst [vmem:[#allocation2 + $0x2a8] sm:$0xff] %v844
          %1250 = vst [vmem:[#allocation2 + $0x2b0] sm:$0xff] %v848
          %1251 = vst [vmem:[#allocation2 + $0x2b8] sm:$0xff] %v850
          %1252 = vst [vmem:[#allocation2 + $0x2c0] sm:$0xff] %v854
          %1253 = vst [vmem:[#allocation2 + $0x2c8] sm:$0xff] %v856
          %1254 = vst [vmem:[#allocation2 + $0x2d0] sm:$0xff] %v860
          %1255 = vst [vmem:[#allocation2 + $0x2d8] sm:$0xff] %v862
          %1256 = vst [vmem:[#allocation2 + $0x2e0] sm:$0xff] %v866
          %1257 = vst [vmem:[#allocation2 + $0x2e8] sm:$0xff] %v868
          %1258 = vst [vmem:[#allocation2 + $0x2f0] sm:$0xff] %v872
          %1259 = vst [vmem:[#allocation2 + $0x2f8] sm:$0xff] %v874
          %1260 = vst [vmem:[#allocation2 + $0x300] sm:$0xff] %v878
          %1261 = vst [vmem:[#allocation2 + $0x308] sm:$0xff] %v880
          %1262 = vst [vmem:[#allocation2 + $0x310] sm:$0xff] %v884
          %1263 = vst [vmem:[#allocation2 + $0x318] sm:$0xff] %v886
          %1264 = vst [vmem:[#allocation2 + $0x320] sm:$0xff] %v890
          %1265 = vst [vmem:[#allocation2 + $0x328] sm:$0xff] %v892
          %1266 = vst [vmem:[#allocation2 + $0x330] sm:$0xff] %v896
          %1267 = vst [vmem:[#allocation2 + $0x338] sm:$0xff] %v898
          %1268 = vst [vmem:[#allocation2 + $0x340] sm:$0xff] %v902
          %1269 = vst [vmem:[#allocation2 + $0x348] sm:$0xff] %v904
          %1270 = vst [vmem:[#allocation2 + $0x350] sm:$0xff] %v908
          %1271 = vst [vmem:[#allocation2 + $0x358] sm:$0xff] %v910
          %1272 = vst [vmem:[#allocation2 + $0x360] sm:$0xff] %v914
          %1273 = vst [vmem:[#allocation2 + $0x368] sm:$0xff] %v916
          %1274 = vst [vmem:[#allocation2 + $0x370] sm:$0xff] %v920
          %1275 = vst [vmem:[#allocation2 + $0x378] sm:$0xff] %v922
          %1276 = vst [vmem:[#allocation2 + $0x380] sm:$0xff] %v926
          %1277 = vst [vmem:[#allocation2 + $0x388] sm:$0xff] %v928
          %1278 = vst [vmem:[#allocation2 + $0x390] sm:$0xff] %v932
          %1279 = vst [vmem:[#allocation2 + $0x398] sm:$0xff] %v934
          %1280 = vst [vmem:[#allocation2 + $0x3a0] sm:$0xff] %v938
          %1281 = vst [vmem:[#allocation2 + $0x3a8] sm:$0xff] %v940
          %1282 = vst [vmem:[#allocation2 + $0x3b0] sm:$0xff] %v944
          %1283 = vst [vmem:[#allocation2 + $0x3b8] sm:$0xff] %v946
          %1284 = vst [vmem:[#allocation2 + $0x3c0] sm:$0xff] %v950
          %1285 = vst [vmem:[#allocation2 + $0x3c8] sm:$0xff] %v952
          %1286 = vst [vmem:[#allocation2 + $0x3d0] sm:$0xff] %v956
          %1287 = vst [vmem:[#allocation2 + $0x3d8] sm:$0xff] %v958
          %1288 = vst [vmem:[#allocation2 + $0x3e0] sm:$0xff] %v962
          %1289 = vst [vmem:[#allocation2 + $0x3e8] sm:$0xff] %v964
          %1290 = vst [vmem:[#allocation2 + $0x3f0] sm:$0xff] %v968
          %1291 = vst [vmem:[#allocation2 + $0x3f8] sm:$0xff] %v970
          %1292 = vst [vmem:[#allocation2 + $0x400] sm:$0xff] %v974
          %1293 = vst [vmem:[#allocation2 + $0x408] sm:$0xff] %v976
          %1294 = vst [vmem:[#allocation2 + $0x410] sm:$0xff] %v980
          %1295 = vst [vmem:[#allocation2 + $0x418] sm:$0xff] %v982
          %1296 = vst [vmem:[#allocation2 + $0x420] sm:$0xff] %v986
          %1297 = vst [vmem:[#allocation2 + $0x428] sm:$0xff] %v988
          %1298 = vst [vmem:[#allocation2 + $0x430] sm:$0xff] %v992
          %1299 = vst [vmem:[#allocation2 + $0x438] sm:$0xff] %v994
          %1300 = vst [vmem:[#allocation2 + $0x440] sm:$0xff] %v998
          %1301 = vst [vmem:[#allocation2 + $0x448] sm:$0xff] %v1000
          %1302 = vst [vmem:[#allocation2 + $0x450] sm:$0xff] %v1004
          %1303 = vst [vmem:[#allocation2 + $0x458] sm:$0xff] %v1006
          %1304 = vst [vmem:[#allocation2 + $0x460] sm:$0xff] %v1010
          %1305 = vst [vmem:[#allocation2 + $0x468] sm:$0xff] %v1012
          %1306 = vst [vmem:[#allocation2 + $0x470] sm:$0xff] %v1016
          %1307 = vst [vmem:[#allocation2 + $0x478] sm:$0xff] %v1018
          %1308 = vst [vmem:[#allocation2 + $0x480] sm:$0xff] %v1022
          %1309 = vst [vmem:[#allocation2 + $0x488] sm:$0xff] %v1024
          %1310 = vst [vmem:[#allocation2 + $0x490] sm:$0xff] %v1028
          %1311 = vst [vmem:[#allocation2 + $0x498] sm:$0xff] %v1030
          %1312 = vst [vmem:[#allocation2 + $0x4a0] sm:$0xff] %v1034
          %1313 = vst [vmem:[#allocation2 + $0x4a8] sm:$0xff] %v1036
          %1314 = vst [vmem:[#allocation2 + $0x4b0] sm:$0xff] %v1040
          %1315 = vst [vmem:[#allocation2 + $0x4b8] sm:$0xff] %v1042
          %1316 = vst [vmem:[#allocation2 + $0x4c0] sm:$0xff] %v1046
          %1317 = vst [vmem:[#allocation2 + $0x4c8] sm:$0xff] %v1048
          %1318 = vst [vmem:[#allocation2 + $0x4d0] sm:$0xff] %v1052
          %1319 = vst [vmem:[#allocation2 + $0x4d8] sm:$0xff] %v1054
          %1320 = vst [vmem:[#allocation2 + $0x4e0] sm:$0xff] %v1058
          %1321 = vst [vmem:[#allocation2 + $0x4e8] sm:$0xff] %v1060
          %1322 = vst [vmem:[#allocation2 + $0x4f0] sm:$0xff] %v1064
          %1323 = vst [vmem:[#allocation2 + $0x4f8] sm:$0xff] %v1066
          %1324 = vst [vmem:[#allocation2 + $0x500] sm:$0xff] %v1070
          %1325 = vst [vmem:[#allocation2 + $0x508] sm:$0xff] %v1072
          %1326 = vst [vmem:[#allocation2 + $0x510] sm:$0xff] %v1076
          %1327 = vst [vmem:[#allocation2 + $0x518] sm:$0xff] %v1078
          %1328 = vst [vmem:[#allocation2 + $0x520] sm:$0xff] %v1082
          %1329 = vst [vmem:[#allocation2 + $0x528] sm:$0xff] %v1084
          %1330 = vst [vmem:[#allocation2 + $0x530] sm:$0xff] %v1088
          %1331 = vst [vmem:[#allocation2 + $0x538] sm:$0xff] %v1090
          %1332 = vst [vmem:[#allocation2 + $0x540] sm:$0xff] %v1094
          %1333 = vst [vmem:[#allocation2 + $0x548] sm:$0xff] %v1096
          %1334 = vst [vmem:[#allocation2 + $0x550] sm:$0xff] %v1100
          %1335 = vst [vmem:[#allocation2 + $0x558] sm:$0xff] %v1102
          %1336 = vst [vmem:[#allocation2 + $0x560] sm:$0xff] %v1106
          %1337 = vst [vmem:[#allocation2 + $0x568] sm:$0xff] %v1108
          %1338 = vst [vmem:[#allocation2 + $0x570] sm:$0xff] %v1112
          %1339 = vst [vmem:[#allocation2 + $0x578] sm:$0xff] %v1114
          %1340 = vst [vmem:[#allocation2 + $0x580] sm:$0xff] %v1118
          %1341 = vst [vmem:[#allocation2 + $0x588] sm:$0xff] %v1120
          %1342 = vst [vmem:[#allocation2 + $0x590] sm:$0xff] %v1124
          %1343 = vst [vmem:[#allocation2 + $0x598] sm:$0xff] %v1126
          %1344 = vst [vmem:[#allocation2 + $0x5a0] sm:$0xff] %v1130
          %1345 = vst [vmem:[#allocation2 + $0x5a8] sm:$0xff] %v1132
          %1346 = vst [vmem:[#allocation2 + $0x5b0] sm:$0xff] %v1136
          %1347 = vst [vmem:[#allocation2 + $0x5b8] sm:$0xff] %v1138
          %1348 = vst [vmem:[#allocation2 + $0x5c0] sm:$0xff] %v1142
          %1349 = vst [vmem:[#allocation2 + $0x5c8] sm:$0xff] %v1144
          %1350 = vst [vmem:[#allocation2 + $0x5d0] sm:$0xff] %v1148
          %1351 = vst [vmem:[#allocation2 + $0x5d8] sm:$0xff] %v1150
          %1352 = vst [vmem:[#allocation2 + $0x5e0] sm:$0xff] %v1154
          %1353 = vst [vmem:[#allocation2 + $0x5e8] sm:$0xff] %v1156
          %1354 = vst [vmem:[#allocation2 + $0x5f0] sm:$0xff] %v1160
          %1355 = vst [vmem:[#allocation2 + $0x5f8] sm:$0xff] %v1162
        $region48: #{tpu_custom_call.1} parent=31 // pred_fallthru
          _
        %v1356 = vld [vmem:[#allocation2] sm:$0xff]
        %v1357 = vld [vmem:[#allocation2 + $0x8] sm:$0xff]
        %v1358 = vld [vmem:[#allocation2 + $0x10] sm:$0xff]
        %v1359 = vld [vmem:[#allocation2 + $0x18] sm:$0xff]
        %v1360 = vld [vmem:[#allocation2 + $0x20] sm:$0xff]
        %v1361 = vld [vmem:[#allocation2 + $0x28] sm:$0xff]
        %v1362 = vld [vmem:[#allocation2 + $0x30] sm:$0xff]
        %v1363 = vld [vmem:[#allocation2 + $0x38] sm:$0xff]
        %v1364 = vld [vmem:[#allocation2 + $0x40] sm:$0xff]
        %v1365 = vld [vmem:[#allocation2 + $0x48] sm:$0xff]
        %v1366 = vld [vmem:[#allocation2 + $0x50] sm:$0xff]
        %v1367 = vld [vmem:[#allocation2 + $0x58] sm:$0xff]
        %v1368 = vld [vmem:[#allocation2 + $0x60] sm:$0xff]
        %v1369 = vld [vmem:[#allocation2 + $0x68] sm:$0xff]
        %v1370 = vld [vmem:[#allocation2 + $0x70] sm:$0xff]
        %v1371 = vld [vmem:[#allocation2 + $0x78] sm:$0xff]
        %v1372 = vld [vmem:[#allocation2 + $0x80] sm:$0xff]
        %v1373 = vld [vmem:[#allocation2 + $0x88] sm:$0xff]
        %v1374 = vld [vmem:[#allocation2 + $0x90] sm:$0xff]
        %v1375 = vld [vmem:[#allocation2 + $0x98] sm:$0xff]
        %v1376 = vld [vmem:[#allocation2 + $0xa0] sm:$0xff]
        %v1377 = vld [vmem:[#allocation2 + $0xa8] sm:$0xff]
        %v1378 = vld [vmem:[#allocation2 + $0xb0] sm:$0xff]
        %v1379 = vld [vmem:[#allocation2 + $0xb8] sm:$0xff]
        %v1380 = vld [vmem:[#allocation2 + $0xc0] sm:$0xff]
        %v1381 = vld [vmem:[#allocation2 + $0xc8] sm:$0xff]
        %v1382 = vld [vmem:[#allocation2 + $0xd0] sm:$0xff]
        %v1383 = vld [vmem:[#allocation2 + $0xd8] sm:$0xff]
        %v1384 = vld [vmem:[#allocation2 + $0xe0] sm:$0xff]
        %v1385 = vld [vmem:[#allocation2 + $0xe8] sm:$0xff]
        %v1386 = vld [vmem:[#allocation2 + $0xf0] sm:$0xff]
        %v1387 = vld [vmem:[#allocation2 + $0xf8] sm:$0xff]
        %v1388 = vld [vmem:[#allocation2 + $0x100] sm:$0xff]
        %v1389 = vld [vmem:[#allocation2 + $0x108] sm:$0xff]
        %v1390 = vld [vmem:[#allocation2 + $0x110] sm:$0xff]
        %v1391 = vld [vmem:[#allocation2 + $0x118] sm:$0xff]
        %v1392 = vld [vmem:[#allocation2 + $0x120] sm:$0xff]
        %v1393 = vld [vmem:[#allocation2 + $0x128] sm:$0xff]
        %v1394 = vld [vmem:[#allocation2 + $0x130] sm:$0xff]
        %v1395 = vld [vmem:[#allocation2 + $0x138] sm:$0xff]
        %v1396 = vld [vmem:[#allocation2 + $0x140] sm:$0xff]
        %v1397 = vld [vmem:[#allocation2 + $0x148] sm:$0xff]
        %v1398 = vld [vmem:[#allocation2 + $0x150] sm:$0xff]
        %v1399 = vld [vmem:[#allocation2 + $0x158] sm:$0xff]
        %v1400 = vld [vmem:[#allocation2 + $0x160] sm:$0xff]
        %v1401 = vld [vmem:[#allocation2 + $0x168] sm:$0xff]
        %v1402 = vld [vmem:[#allocation2 + $0x170] sm:$0xff]
        %v1403 = vld [vmem:[#allocation2 + $0x178] sm:$0xff]
        %v1404 = vld [vmem:[#allocation2 + $0x180] sm:$0xff]
        %v1405 = vld [vmem:[#allocation2 + $0x188] sm:$0xff]
        %v1406 = vld [vmem:[#allocation2 + $0x190] sm:$0xff]
        %v1407 = vld [vmem:[#allocation2 + $0x198] sm:$0xff]
        %v1408 = vld [vmem:[#allocation2 + $0x1a0] sm:$0xff]
        %v1409 = vld [vmem:[#allocation2 + $0x1a8] sm:$0xff]
        %v1410 = vld [vmem:[#allocation2 + $0x1b0] sm:$0xff]
        %v1411 = vld [vmem:[#allocation2 + $0x1b8] sm:$0xff]
        %v1412 = vld [vmem:[#allocation2 + $0x1c0] sm:$0xff]
        %v1413 = vld [vmem:[#allocation2 + $0x1c8] sm:$0xff]
        %v1414 = vld [vmem:[#allocation2 + $0x1d0] sm:$0xff]
        %v1415 = vld [vmem:[#allocation2 + $0x1d8] sm:$0xff]
        %v1416 = vld [vmem:[#allocation2 + $0x1e0] sm:$0xff]
        %v1417 = vld [vmem:[#allocation2 + $0x1e8] sm:$0xff]
        %v1418 = vld [vmem:[#allocation2 + $0x1f0] sm:$0xff]
        %v1419 = vld [vmem:[#allocation2 + $0x1f8] sm:$0xff]
        %v1420 = vld [vmem:[#allocation2 + $0x200] sm:$0xff]
        %v1421 = vld [vmem:[#allocation2 + $0x208] sm:$0xff]
        %v1422 = vld [vmem:[#allocation2 + $0x210] sm:$0xff]
        %v1423 = vld [vmem:[#allocation2 + $0x218] sm:$0xff]
        %v1424 = vld [vmem:[#allocation2 + $0x220] sm:$0xff]
        %v1425 = vld [vmem:[#allocation2 + $0x228] sm:$0xff]
        %v1426 = vld [vmem:[#allocation2 + $0x230] sm:$0xff]
        %v1427 = vld [vmem:[#allocation2 + $0x238] sm:$0xff]
        %v1428 = vld [vmem:[#allocation2 + $0x240] sm:$0xff]
        %v1429 = vld [vmem:[#allocation2 + $0x248] sm:$0xff]
        %v1430 = vld [vmem:[#allocation2 + $0x250] sm:$0xff]
        %v1431 = vld [vmem:[#allocation2 + $0x258] sm:$0xff]
        %v1432 = vld [vmem:[#allocation2 + $0x260] sm:$0xff]
        %v1433 = vld [vmem:[#allocation2 + $0x268] sm:$0xff]
        %v1434 = vld [vmem:[#allocation2 + $0x270] sm:$0xff]
        %v1435 = vld [vmem:[#allocation2 + $0x278] sm:$0xff]
        %v1436 = vld [vmem:[#allocation2 + $0x280] sm:$0xff]
        %v1437 = vld [vmem:[#allocation2 + $0x288] sm:$0xff]
        %v1438 = vld [vmem:[#allocation2 + $0x290] sm:$0xff]
        %v1439 = vld [vmem:[#allocation2 + $0x298] sm:$0xff]
        %v1440 = vld [vmem:[#allocation2 + $0x2a0] sm:$0xff]
        %v1441 = vld [vmem:[#allocation2 + $0x2a8] sm:$0xff]
        %v1442 = vld [vmem:[#allocation2 + $0x2b0] sm:$0xff]
        %v1443 = vld [vmem:[#allocation2 + $0x2b8] sm:$0xff]
        %v1444 = vld [vmem:[#allocation2 + $0x2c0] sm:$0xff]
        %v1445 = vld [vmem:[#allocation2 + $0x2c8] sm:$0xff]
        %v1446 = vld [vmem:[#allocation2 + $0x2d0] sm:$0xff]
        %v1447 = vld [vmem:[#allocation2 + $0x2d8] sm:$0xff]
        %v1448 = vld [vmem:[#allocation2 + $0x2e0] sm:$0xff]
        %v1449 = vld [vmem:[#allocation2 + $0x2e8] sm:$0xff]
        %v1450 = vld [vmem:[#allocation2 + $0x2f0] sm:$0xff]
        %v1451 = vld [vmem:[#allocation2 + $0x2f8] sm:$0xff]
        %v1452 = vld [vmem:[#allocation2 + $0x300] sm:$0xff]
        %v1453 = vld [vmem:[#allocation2 + $0x308] sm:$0xff]
        %v1454 = vld [vmem:[#allocation2 + $0x310] sm:$0xff]
        %v1455 = vld [vmem:[#allocation2 + $0x318] sm:$0xff]
        %v1456 = vld [vmem:[#allocation2 + $0x320] sm:$0xff]
        %v1457 = vld [vmem:[#allocation2 + $0x328] sm:$0xff]
        %v1458 = vld [vmem:[#allocation2 + $0x330] sm:$0xff]
        %v1459 = vld [vmem:[#allocation2 + $0x338] sm:$0xff]
        %v1460 = vld [vmem:[#allocation2 + $0x340] sm:$0xff]
        %v1461 = vld [vmem:[#allocation2 + $0x348] sm:$0xff]
        %v1462 = vld [vmem:[#allocation2 + $0x350] sm:$0xff]
        %v1463 = vld [vmem:[#allocation2 + $0x358] sm:$0xff]
        %v1464 = vld [vmem:[#allocation2 + $0x360] sm:$0xff]
        %v1465 = vld [vmem:[#allocation2 + $0x368] sm:$0xff]
        %v1466 = vld [vmem:[#allocation2 + $0x370] sm:$0xff]
        %v1467 = vld [vmem:[#allocation2 + $0x378] sm:$0xff]
        %v1468 = vld [vmem:[#allocation2 + $0x380] sm:$0xff]
        %v1469 = vld [vmem:[#allocation2 + $0x388] sm:$0xff]
        %v1470 = vld [vmem:[#allocation2 + $0x390] sm:$0xff]
        %v1471 = vld [vmem:[#allocation2 + $0x398] sm:$0xff]
        %v1472 = vld [vmem:[#allocation2 + $0x3a0] sm:$0xff]
        %v1473 = vld [vmem:[#allocation2 + $0x3a8] sm:$0xff]
        %v1474 = vld [vmem:[#allocation2 + $0x3b0] sm:$0xff]
        %v1475 = vld [vmem:[#allocation2 + $0x3b8] sm:$0xff]
        %v1476 = vld [vmem:[#allocation2 + $0x3c0] sm:$0xff]
        %v1477 = vld [vmem:[#allocation2 + $0x3c8] sm:$0xff]
        %v1478 = vld [vmem:[#allocation2 + $0x3d0] sm:$0xff]
        %v1479 = vld [vmem:[#allocation2 + $0x3d8] sm:$0xff]
        %v1480 = vld [vmem:[#allocation2 + $0x3e0] sm:$0xff]
        %v1481 = vld [vmem:[#allocation2 + $0x3e8] sm:$0xff]
        %v1482 = vld [vmem:[#allocation2 + $0x3f0] sm:$0xff]
        %v1483 = vld [vmem:[#allocation2 + $0x3f8] sm:$0xff]
        %v1484 = vld [vmem:[#allocation2 + $0x400] sm:$0xff]
        %v1485 = vld [vmem:[#allocation2 + $0x408] sm:$0xff]
        %v1486 = vld [vmem:[#allocation2 + $0x410] sm:$0xff]
        %v1487 = vld [vmem:[#allocation2 + $0x418] sm:$0xff]
        %v1488 = vld [vmem:[#allocation2 + $0x420] sm:$0xff]
        %v1489 = vld [vmem:[#allocation2 + $0x428] sm:$0xff]
        %v1490 = vld [vmem:[#allocation2 + $0x430] sm:$0xff]
        %v1491 = vld [vmem:[#allocation2 + $0x438] sm:$0xff]
        %v1492 = vld [vmem:[#allocation2 + $0x440] sm:$0xff]
        %v1493 = vld [vmem:[#allocation2 + $0x448] sm:$0xff]
        %v1494 = vld [vmem:[#allocation2 + $0x450] sm:$0xff]
        %v1495 = vld [vmem:[#allocation2 + $0x458] sm:$0xff]
        %v1496 = vld [vmem:[#allocation2 + $0x460] sm:$0xff]
        %v1497 = vld [vmem:[#allocation2 + $0x468] sm:$0xff]
        %v1498 = vld [vmem:[#allocation2 + $0x470] sm:$0xff]
        %v1499 = vld [vmem:[#allocation2 + $0x478] sm:$0xff]
        %v1500 = vld [vmem:[#allocation2 + $0x480] sm:$0xff]
        %v1501 = vld [vmem:[#allocation2 + $0x488] sm:$0xff]
        %v1502 = vld [vmem:[#allocation2 + $0x490] sm:$0xff]
        %v1503 = vld [vmem:[#allocation2 + $0x498] sm:$0xff]
        %v1504 = vld [vmem:[#allocation2 + $0x4a0] sm:$0xff]
        %v1505 = vld [vmem:[#allocation2 + $0x4a8] sm:$0xff]
        %v1506 = vld [vmem:[#allocation2 + $0x4b0] sm:$0xff]
        %v1507 = vld [vmem:[#allocation2 + $0x4b8] sm:$0xff]
        %v1508 = vld [vmem:[#allocation2 + $0x4c0] sm:$0xff]
        %v1509 = vld [vmem:[#allocation2 + $0x4c8] sm:$0xff]
        %v1510 = vld [vmem:[#allocation2 + $0x4d0] sm:$0xff]
        %v1511 = vld [vmem:[#allocation2 + $0x4d8] sm:$0xff]
        %v1512 = vld [vmem:[#allocation2 + $0x4e0] sm:$0xff]
        %v1513 = vld [vmem:[#allocation2 + $0x4e8] sm:$0xff]
        %v1514 = vld [vmem:[#allocation2 + $0x4f0] sm:$0xff]
        %v1515 = vld [vmem:[#allocation2 + $0x4f8] sm:$0xff]
        %v1516 = vld [vmem:[#allocation2 + $0x500] sm:$0xff]
        %v1517 = vld [vmem:[#allocation2 + $0x508] sm:$0xff]
        %v1518 = vld [vmem:[#allocation2 + $0x510] sm:$0xff]
        %v1519 = vld [vmem:[#allocation2 + $0x518] sm:$0xff]
        %v1520 = vld [vmem:[#allocation2 + $0x520] sm:$0xff]
        %v1521 = vld [vmem:[#allocation2 + $0x528] sm:$0xff]
        %v1522 = vld [vmem:[#allocation2 + $0x530] sm:$0xff]
        %v1523 = vld [vmem:[#allocation2 + $0x538] sm:$0xff]
        %v1524 = vld [vmem:[#allocation2 + $0x540] sm:$0xff]
        %v1525 = vld [vmem:[#allocation2 + $0x548] sm:$0xff]
        %v1526 = vld [vmem:[#allocation2 + $0x550] sm:$0xff]
        %v1527 = vld [vmem:[#allocation2 + $0x558] sm:$0xff]
        %v1528 = vld [vmem:[#allocation2 + $0x560] sm:$0xff]
        %v1529 = vld [vmem:[#allocation2 + $0x568] sm:$0xff]
        %v1530 = vld [vmem:[#allocation2 + $0x570] sm:$0xff]
        %v1531 = vld [vmem:[#allocation2 + $0x578] sm:$0xff]
        %v1532 = vld [vmem:[#allocation2 + $0x580] sm:$0xff]
        %v1533 = vld [vmem:[#allocation2 + $0x588] sm:$0xff]
        %v1534 = vld [vmem:[#allocation2 + $0x590] sm:$0xff]
        %v1535 = vld [vmem:[#allocation2 + $0x598] sm:$0xff]
        %v1536 = vld [vmem:[#allocation2 + $0x5a0] sm:$0xff]
        %v1537 = vld [vmem:[#allocation2 + $0x5a8] sm:$0xff]
        %v1538 = vld [vmem:[#allocation2 + $0x5b0] sm:$0xff]
        %v1539 = vld [vmem:[#allocation2 + $0x5b8] sm:$0xff]
        %v1540 = vld [vmem:[#allocation2 + $0x5c0] sm:$0xff]
        %v1541 = vld [vmem:[#allocation2 + $0x5c8] sm:$0xff]
        %v1542 = vld [vmem:[#allocation2 + $0x5d0] sm:$0xff]
        %v1543 = vld [vmem:[#allocation2 + $0x5d8] sm:$0xff]
        %v1544 = vld [vmem:[#allocation2 + $0x5e0] sm:$0xff]
        %v1545 = vld [vmem:[#allocation2 + $0x5e8] sm:$0xff]
        %v1546 = vld [vmem:[#allocation2 + $0x5f0] sm:$0xff]
        %v1547 = vld [vmem:[#allocation2 + $0x5f8] sm:$0xff]
        %v1548 = vld [vmem:[#allocation8] sm:$0xff]
        %v1549 = vld [vmem:[#allocation8 + $0x8] sm:$0xff]
        %v1550 = vld [vmem:[#allocation8 + $0x10] sm:$0xff]
        %v1551 = vld [vmem:[#allocation8 + $0x18] sm:$0xff]
        %v1552 = vld [vmem:[#allocation8 + $0x20] sm:$0xff]
        %v1553 = vld [vmem:[#allocation8 + $0x28] sm:$0xff]
        %v1554 = vld [vmem:[#allocation8 + $0x30] sm:$0xff]
        %v1555 = vld [vmem:[#allocation8 + $0x38] sm:$0xff]
        %v1556 = vld [vmem:[#allocation8 + $0x40] sm:$0xff]
        %v1557 = vld [vmem:[#allocation8 + $0x48] sm:$0xff]
        %v1558 = vld [vmem:[#allocation8 + $0x50] sm:$0xff]
        %v1559 = vld [vmem:[#allocation8 + $0x58] sm:$0xff]
        %v1560 = vld [vmem:[#allocation8 + $0x60] sm:$0xff]
        %v1561 = vld [vmem:[#allocation8 + $0x68] sm:$0xff]
        %v1562 = vld [vmem:[#allocation8 + $0x70] sm:$0xff]
        %v1563 = vld [vmem:[#allocation8 + $0x78] sm:$0xff]
        %v1564 = vld [vmem:[#allocation8 + $0x80] sm:$0xff]
        %v1565 = vld [vmem:[#allocation8 + $0x88] sm:$0xff]
        %v1566 = vld [vmem:[#allocation8 + $0x90] sm:$0xff]
        %v1567 = vld [vmem:[#allocation8 + $0x98] sm:$0xff]
        %v1568 = vld [vmem:[#allocation8 + $0xa0] sm:$0xff]
        %v1569 = vld [vmem:[#allocation8 + $0xa8] sm:$0xff]
        %v1570 = vld [vmem:[#allocation8 + $0xb0] sm:$0xff]
        %v1571 = vld [vmem:[#allocation8 + $0xb8] sm:$0xff]
        %v1572 = vld [vmem:[#allocation8 + $0xc0] sm:$0xff]
        %v1573 = vld [vmem:[#allocation8 + $0xc8] sm:$0xff]
        %v1574 = vld [vmem:[#allocation8 + $0xd0] sm:$0xff]
        %v1575 = vld [vmem:[#allocation8 + $0xd8] sm:$0xff]
        %v1576 = vld [vmem:[#allocation8 + $0xe0] sm:$0xff]
        %v1577 = vld [vmem:[#allocation8 + $0xe8] sm:$0xff]
        %v1578 = vld [vmem:[#allocation8 + $0xf0] sm:$0xff]
        %v1579 = vld [vmem:[#allocation8 + $0xf8] sm:$0xff]
        %v1580 = vld [vmem:[#allocation8 + $0x100] sm:$0xff]
        %v1581 = vld [vmem:[#allocation8 + $0x108] sm:$0xff]
        %v1582 = vld [vmem:[#allocation8 + $0x110] sm:$0xff]
        %v1583 = vld [vmem:[#allocation8 + $0x118] sm:$0xff]
        %v1584 = vld [vmem:[#allocation8 + $0x120] sm:$0xff]
        %v1585 = vld [vmem:[#allocation8 + $0x128] sm:$0xff]
        %v1586 = vld [vmem:[#allocation8 + $0x130] sm:$0xff]
        %v1587 = vld [vmem:[#allocation8 + $0x138] sm:$0xff]
        %v1588 = vld [vmem:[#allocation8 + $0x140] sm:$0xff]
        %v1589 = vld [vmem:[#allocation8 + $0x148] sm:$0xff]
        %v1590 = vld [vmem:[#allocation8 + $0x150] sm:$0xff]
        %v1591 = vld [vmem:[#allocation8 + $0x158] sm:$0xff]
        %v1592 = vld [vmem:[#allocation8 + $0x160] sm:$0xff]
        %v1593 = vld [vmem:[#allocation8 + $0x168] sm:$0xff]
        %v1594 = vld [vmem:[#allocation8 + $0x170] sm:$0xff]
        %v1595 = vld [vmem:[#allocation8 + $0x178] sm:$0xff]
        %v1596 = vld [vmem:[#allocation8 + $0x180] sm:$0xff]
        %v1597 = vld [vmem:[#allocation8 + $0x188] sm:$0xff]
        %v1598 = vld [vmem:[#allocation8 + $0x190] sm:$0xff]
        %v1599 = vld [vmem:[#allocation8 + $0x198] sm:$0xff]
        %v1600 = vld [vmem:[#allocation8 + $0x1a0] sm:$0xff]
        %v1601 = vld [vmem:[#allocation8 + $0x1a8] sm:$0xff]
        %v1602 = vld [vmem:[#allocation8 + $0x1b0] sm:$0xff]
        %v1603 = vld [vmem:[#allocation8 + $0x1b8] sm:$0xff]
        %v1604 = vld [vmem:[#allocation8 + $0x1c0] sm:$0xff]
        %v1605 = vld [vmem:[#allocation8 + $0x1c8] sm:$0xff]
        %v1606 = vld [vmem:[#allocation8 + $0x1d0] sm:$0xff]
        %v1607 = vld [vmem:[#allocation8 + $0x1d8] sm:$0xff]
        %v1608 = vld [vmem:[#allocation8 + $0x1e0] sm:$0xff]
        %v1609 = vld [vmem:[#allocation8 + $0x1e8] sm:$0xff]
        %v1610 = vld [vmem:[#allocation8 + $0x1f0] sm:$0xff]
        %v1611 = vld [vmem:[#allocation8 + $0x1f8] sm:$0xff]
        %v1612 = vld [vmem:[#allocation8 + $0x200] sm:$0xff]
        %v1613 = vld [vmem:[#allocation8 + $0x208] sm:$0xff]
        %v1614 = vld [vmem:[#allocation8 + $0x210] sm:$0xff]
        %v1615 = vld [vmem:[#allocation8 + $0x218] sm:$0xff]
        %v1616 = vld [vmem:[#allocation8 + $0x220] sm:$0xff]
        %v1617 = vld [vmem:[#allocation8 + $0x228] sm:$0xff]
        %v1618 = vld [vmem:[#allocation8 + $0x230] sm:$0xff]
        %v1619 = vld [vmem:[#allocation8 + $0x238] sm:$0xff]
        %v1620 = vld [vmem:[#allocation8 + $0x240] sm:$0xff]
        %v1621 = vld [vmem:[#allocation8 + $0x248] sm:$0xff]
        %v1622 = vld [vmem:[#allocation8 + $0x250] sm:$0xff]
        %v1623 = vld [vmem:[#allocation8 + $0x258] sm:$0xff]
        %v1624 = vld [vmem:[#allocation8 + $0x260] sm:$0xff]
        %v1625 = vld [vmem:[#allocation8 + $0x268] sm:$0xff]
        %v1626 = vld [vmem:[#allocation8 + $0x270] sm:$0xff]
        %v1627 = vld [vmem:[#allocation8 + $0x278] sm:$0xff]
        %v1628 = vld [vmem:[#allocation8 + $0x280] sm:$0xff]
        %v1629 = vld [vmem:[#allocation8 + $0x288] sm:$0xff]
        %v1630 = vld [vmem:[#allocation8 + $0x290] sm:$0xff]
        %v1631 = vld [vmem:[#allocation8 + $0x298] sm:$0xff]
        %v1632 = vld [vmem:[#allocation8 + $0x2a0] sm:$0xff]
        %v1633 = vld [vmem:[#allocation8 + $0x2a8] sm:$0xff]
        %v1634 = vld [vmem:[#allocation8 + $0x2b0] sm:$0xff]
        %v1635 = vld [vmem:[#allocation8 + $0x2b8] sm:$0xff]
        %v1636 = vld [vmem:[#allocation8 + $0x2c0] sm:$0xff]
        %v1637 = vld [vmem:[#allocation8 + $0x2c8] sm:$0xff]
        %v1638 = vld [vmem:[#allocation8 + $0x2d0] sm:$0xff]
        %v1639 = vld [vmem:[#allocation8 + $0x2d8] sm:$0xff]
        %v1640 = vld [vmem:[#allocation8 + $0x2e0] sm:$0xff]
        %v1641 = vld [vmem:[#allocation8 + $0x2e8] sm:$0xff]
        %v1642 = vld [vmem:[#allocation8 + $0x2f0] sm:$0xff]
        %v1643 = vld [vmem:[#allocation8 + $0x2f8] sm:$0xff]
        %v1644 = vld [vmem:[#allocation8 + $0x300] sm:$0xff]
        %v1645 = vld [vmem:[#allocation8 + $0x308] sm:$0xff]
        %v1646 = vld [vmem:[#allocation8 + $0x310] sm:$0xff]
        %v1647 = vld [vmem:[#allocation8 + $0x318] sm:$0xff]
        %v1648 = vld [vmem:[#allocation8 + $0x320] sm:$0xff]
        %v1649 = vld [vmem:[#allocation8 + $0x328] sm:$0xff]
        %v1650 = vld [vmem:[#allocation8 + $0x330] sm:$0xff]
        %v1651 = vld [vmem:[#allocation8 + $0x338] sm:$0xff]
        %v1652 = vld [vmem:[#allocation8 + $0x340] sm:$0xff]
        %v1653 = vld [vmem:[#allocation8 + $0x348] sm:$0xff]
        %v1654 = vld [vmem:[#allocation8 + $0x350] sm:$0xff]
        %v1655 = vld [vmem:[#allocation8 + $0x358] sm:$0xff]
        %v1656 = vld [vmem:[#allocation8 + $0x360] sm:$0xff]
        %v1657 = vld [vmem:[#allocation8 + $0x368] sm:$0xff]
        %v1658 = vld [vmem:[#allocation8 + $0x370] sm:$0xff]
        %v1659 = vld [vmem:[#allocation8 + $0x378] sm:$0xff]
        %v1660 = vld [vmem:[#allocation8 + $0x380] sm:$0xff]
        %v1661 = vld [vmem:[#allocation8 + $0x388] sm:$0xff]
        %v1662 = vld [vmem:[#allocation8 + $0x390] sm:$0xff]
        %v1663 = vld [vmem:[#allocation8 + $0x398] sm:$0xff]
        %v1664 = vld [vmem:[#allocation8 + $0x3a0] sm:$0xff]
        %v1665 = vld [vmem:[#allocation8 + $0x3a8] sm:$0xff]
        %v1666 = vld [vmem:[#allocation8 + $0x3b0] sm:$0xff]
        %v1667 = vld [vmem:[#allocation8 + $0x3b8] sm:$0xff]
        %v1668 = vld [vmem:[#allocation8 + $0x3c0] sm:$0xff]
        %v1669 = vld [vmem:[#allocation8 + $0x3c8] sm:$0xff]
        %v1670 = vld [vmem:[#allocation8 + $0x3d0] sm:$0xff]
        %v1671 = vld [vmem:[#allocation8 + $0x3d8] sm:$0xff]
        %v1672 = vld [vmem:[#allocation8 + $0x3e0] sm:$0xff]
        %v1673 = vld [vmem:[#allocation8 + $0x3e8] sm:$0xff]
        %v1674 = vld [vmem:[#allocation8 + $0x3f0] sm:$0xff]
        %v1675 = vld [vmem:[#allocation8 + $0x3f8] sm:$0xff]
        %v1676 = vld [vmem:[#allocation8 + $0x400] sm:$0xff]
        %v1677 = vld [vmem:[#allocation8 + $0x408] sm:$0xff]
        %v1678 = vld [vmem:[#allocation8 + $0x410] sm:$0xff]
        %v1679 = vld [vmem:[#allocation8 + $0x418] sm:$0xff]
        %v1680 = vld [vmem:[#allocation8 + $0x420] sm:$0xff]
        %v1681 = vld [vmem:[#allocation8 + $0x428] sm:$0xff]
        %v1682 = vld [vmem:[#allocation8 + $0x430] sm:$0xff]
        %v1683 = vld [vmem:[#allocation8 + $0x438] sm:$0xff]
        %v1684 = vld [vmem:[#allocation8 + $0x440] sm:$0xff]
        %v1685 = vld [vmem:[#allocation8 + $0x448] sm:$0xff]
        %v1686 = vld [vmem:[#allocation8 + $0x450] sm:$0xff]
        %v1687 = vld [vmem:[#allocation8 + $0x458] sm:$0xff]
        %v1688 = vld [vmem:[#allocation8 + $0x460] sm:$0xff]
        %v1689 = vld [vmem:[#allocation8 + $0x468] sm:$0xff]
        %v1690 = vld [vmem:[#allocation8 + $0x470] sm:$0xff]
        %v1691 = vld [vmem:[#allocation8 + $0x478] sm:$0xff]
        %v1692 = vld [vmem:[#allocation8 + $0x480] sm:$0xff]
        %v1693 = vld [vmem:[#allocation8 + $0x488] sm:$0xff]
        %v1694 = vld [vmem:[#allocation8 + $0x490] sm:$0xff]
        %v1695 = vld [vmem:[#allocation8 + $0x498] sm:$0xff]
        %v1696 = vld [vmem:[#allocation8 + $0x4a0] sm:$0xff]
        %v1697 = vld [vmem:[#allocation8 + $0x4a8] sm:$0xff]
        %v1698 = vld [vmem:[#allocation8 + $0x4b0] sm:$0xff]
        %v1699 = vld [vmem:[#allocation8 + $0x4b8] sm:$0xff]
        %v1700 = vld [vmem:[#allocation8 + $0x4c0] sm:$0xff]
        %v1701 = vld [vmem:[#allocation8 + $0x4c8] sm:$0xff]
        %v1702 = vld [vmem:[#allocation8 + $0x4d0] sm:$0xff]
        %v1703 = vld [vmem:[#allocation8 + $0x4d8] sm:$0xff]
        %v1704 = vld [vmem:[#allocation8 + $0x4e0] sm:$0xff]
        %v1705 = vld [vmem:[#allocation8 + $0x4e8] sm:$0xff]
        %v1706 = vld [vmem:[#allocation8 + $0x4f0] sm:$0xff]
        %v1707 = vld [vmem:[#allocation8 + $0x4f8] sm:$0xff]
        %v1708 = vld [vmem:[#allocation8 + $0x500] sm:$0xff]
        %v1709 = vld [vmem:[#allocation8 + $0x508] sm:$0xff]
        %v1710 = vld [vmem:[#allocation8 + $0x510] sm:$0xff]
        %v1711 = vld [vmem:[#allocation8 + $0x518] sm:$0xff]
        %v1712 = vld [vmem:[#allocation8 + $0x520] sm:$0xff]
        %v1713 = vld [vmem:[#allocation8 + $0x528] sm:$0xff]
        %v1714 = vld [vmem:[#allocation8 + $0x530] sm:$0xff]
        %v1715 = vld [vmem:[#allocation8 + $0x538] sm:$0xff]
        %v1716 = vld [vmem:[#allocation8 + $0x540] sm:$0xff]
        %v1717 = vld [vmem:[#allocation8 + $0x548] sm:$0xff]
        %v1718 = vld [vmem:[#allocation8 + $0x550] sm:$0xff]
        %v1719 = vld [vmem:[#allocation8 + $0x558] sm:$0xff]
        %v1720 = vld [vmem:[#allocation8 + $0x560] sm:$0xff]
        %v1721 = vld [vmem:[#allocation8 + $0x568] sm:$0xff]
        %v1722 = vld [vmem:[#allocation8 + $0x570] sm:$0xff]
        %v1723 = vld [vmem:[#allocation8 + $0x578] sm:$0xff]
        %v1724 = vld [vmem:[#allocation8 + $0x580] sm:$0xff]
        %v1725 = vld [vmem:[#allocation8 + $0x588] sm:$0xff]
        %v1726 = vld [vmem:[#allocation8 + $0x590] sm:$0xff]
        %v1727 = vld [vmem:[#allocation8 + $0x598] sm:$0xff]
        %v1728 = vld [vmem:[#allocation8 + $0x5a0] sm:$0xff]
        %v1729 = vld [vmem:[#allocation8 + $0x5a8] sm:$0xff]
        %v1730 = vld [vmem:[#allocation8 + $0x5b0] sm:$0xff]
        %v1731 = vld [vmem:[#allocation8 + $0x5b8] sm:$0xff]
        %v1732 = vld [vmem:[#allocation8 + $0x5c0] sm:$0xff]
        %v1733 = vld [vmem:[#allocation8 + $0x5c8] sm:$0xff]
        %v1734 = vld [vmem:[#allocation8 + $0x5d0] sm:$0xff]
        %v1735 = vld [vmem:[#allocation8 + $0x5d8] sm:$0xff]
        %v1736 = vld [vmem:[#allocation8 + $0x5e0] sm:$0xff]
        %v1737 = vld [vmem:[#allocation8 + $0x5e8] sm:$0xff]
        %v1738 = vld [vmem:[#allocation8 + $0x5f0] sm:$0xff]
        %v1739 = vld [vmem:[#allocation8 + $0x5f8] sm:$0xff]
        %1740 = vmatprep.subr.mxu0 %v1579
        %1741 = vmatpush1.xpose.msra.mxu0 %v1578
        %1742 = vmatprep.subr.mxu0 %v1577
        %1743 = vmatpush1.xpose.msra.mxu0 %v1576
        %1744 = vmatprep.subr.mxu0 %v1575
        %1745 = vmatpush1.xpose.msra.mxu0 %v1574
        %1746 = vmatprep.subr.mxu0 %v1573
        %1747 = vmatpush1.xpose.msra.mxu0 %v1572
        %1748 = vmatprep.subr.mxu0 %v1571
        %1749 = vmatpush1.xpose.msra.mxu0 %v1570
        %1750 = vmatprep.subr.mxu0 %v1569
        %1751 = vmatpush1.xpose.msra.mxu0 %v1568
        %1752 = vmatprep.subr.mxu0 %v1567
        %1753 = vmatpush1.xpose.msra.mxu0 %v1566
        %1754 = vmatprep.subr.mxu0 %v1565
        %1755 = vmatpush1.xpose.msra.mxu0 %v1564
        %1756 = vmatprep.subr.mxu0 %v1563
        %1757 = vmatpush1.xpose.msra.mxu0 %v1562
        %1758 = vmatprep.subr.mxu0 %v1561
        %1759 = vmatpush1.xpose.msra.mxu0 %v1560
        %1760 = vmatprep.subr.mxu0 %v1559
        %1761 = vmatpush1.xpose.msra.mxu0 %v1558
        %1762 = vmatprep.subr.mxu0 %v1557
        %1763 = vmatpush1.xpose.msra.mxu0 %v1556
        %1764 = vmatprep.subr.mxu0 %v1555
        %1765 = vmatpush1.xpose.msra.mxu0 %v1554
        %1766 = vmatprep.subr.mxu0 %v1553
        %1767 = vmatpush1.xpose.msra.mxu0 %v1552
        %1768 = vmatprep.subr.mxu0 %v1551
        %1769 = vmatpush1.xpose.msra.mxu0 %v1550
        %1770 = vmatprep.subr.mxu0 %v1549
        %1771 = vmatpush1.xpose.msra.mxu0 %v1548
        %1772 = vmatprep.subr.mxu0 %v1611
        %1773 = vmatpush2.xpose.msra.mxu0 %v1610
        %1774 = vmatprep.subr.mxu0 %v1609
        %1775 = vmatpush2.xpose.msra.mxu0 %v1608
        %1776 = vmatprep.subr.mxu0 %v1607
        %1777 = vmatpush2.xpose.msra.mxu0 %v1606
        %1778 = vmatprep.subr.mxu0 %v1605
        %1779 = vmatpush2.xpose.msra.mxu0 %v1604
        %1780 = vmatprep.subr.mxu0 %v1603
        %1781 = vmatpush2.xpose.msra.mxu0 %v1602
        %1782 = vmatprep.subr.mxu0 %v1601
        %1783 = vmatpush2.xpose.msra.mxu0 %v1600
        %1784 = vmatprep.subr.mxu0 %v1599
        %1785 = vmatpush2.xpose.msra.mxu0 %v1598
        %1786 = vmatprep.subr.mxu0 %v1597
        %1787 = vmatpush2.xpose.msra.mxu0 %v1596
        %1788 = vmatprep.subr.mxu0 %v1595
        %1789 = vmatpush2.xpose.msra.mxu0 %v1594
        %1790 = vmatprep.subr.mxu0 %v1593
        %1791 = vmatpush2.xpose.msra.mxu0 %v1592
        %1792 = vmatprep.subr.mxu0 %v1591
        %1793 = vmatpush2.xpose.msra.mxu0 %v1590
        %1794 = vmatprep.subr.mxu0 %v1589
        %1795 = vmatpush2.xpose.msra.mxu0 %v1588
        %1796 = vmatprep.subr.mxu0 %v1587
        %1797 = vmatpush2.xpose.msra.mxu0 %v1586
        %1798 = vmatprep.subr.mxu0 %v1585
        %1799 = vmatpush2.xpose.msra.mxu0 %v1584
        %1800 = vmatprep.subr.mxu0 %v1583
        %1801 = vmatpush2.xpose.msra.mxu0 %v1582
        %1802 = vmatprep.subr.mxu0 %v1581
        %1803 = vmatpush2.xpose.msra.mxu0 %v1580
        %1804 = vmatprep.mubr.f32.mxu0 %v1357
        %1805 = vmatmul.mubr.f32.gmra.mxu0 %v1356
        %v1806 = vpop.f32.mrf.mxu0
        %v1807 = vadd.f32 0.0, %v1806
        %v1808 = vpop.f32.mrf.mxu0
        %v1809 = vadd.f32 0.0, %v1808
        %1810 = vmatprep.mubr.f32.mxu0 %v1359
        %1811 = vmatmul.mubr.f32.gmra.mxu0 %v1358
        %v1812 = vpop.f32.mrf.mxu0
        %v1813 = vadd.f32 0.0, %v1812
        %v1814 = vpop.f32.mrf.mxu0
        %v1815 = vadd.f32 0.0, %v1814
        %1816 = vmatprep.mubr.f32.mxu0 %v1361
        %1817 = vmatmul.mubr.f32.gmra.mxu0 %v1360
        %v1818 = vpop.f32.mrf.mxu0
        %v1819 = vadd.f32 0.0, %v1818
        %v1820 = vpop.f32.mrf.mxu0
        %v1821 = vadd.f32 0.0, %v1820
        %1822 = vmatprep.mubr.f32.mxu0 %v1363
        %1823 = vmatmul.mubr.f32.gmra.mxu0 %v1362
        %v1824 = vpop.f32.mrf.mxu0
        %v1825 = vadd.f32 0.0, %v1824
        %v1826 = vpop.f32.mrf.mxu0
        %v1827 = vadd.f32 0.0, %v1826
        %1828 = vmatprep.mubr.f32.mxu0 %v1365
        %1829 = vmatmul.mubr.f32.gmra.mxu0 %v1364
        %v1830 = vpop.f32.mrf.mxu0
        %v1831 = vadd.f32 0.0, %v1830
        %v1832 = vpop.f32.mrf.mxu0
        %v1833 = vadd.f32 0.0, %v1832
        %1834 = vmatprep.mubr.f32.mxu0 %v1367
        %1835 = vmatmul.mubr.f32.gmra.mxu0 %v1366
        %v1836 = vpop.f32.mrf.mxu0
        %v1837 = vadd.f32 0.0, %v1836
        %v1838 = vpop.f32.mrf.mxu0
        %v1839 = vadd.f32 0.0, %v1838
        %1840 = vmatprep.mubr.f32.mxu0 %v1369
        %1841 = vmatmul.mubr.f32.gmra.mxu0 %v1368
        %v1842 = vpop.f32.mrf.mxu0
        %v1843 = vadd.f32 0.0, %v1842
        %v1844 = vpop.f32.mrf.mxu0
        %v1845 = vadd.f32 0.0, %v1844
        %1846 = vmatprep.mubr.f32.mxu0 %v1371
        %1847 = vmatmul.mubr.f32.gmra.mxu0 %v1370
        %v1848 = vpop.f32.mrf.mxu0
        %v1849 = vadd.f32 0.0, %v1848
        %v1850 = vpop.f32.mrf.mxu0
        %v1851 = vadd.f32 0.0, %v1850
        %1852 = vmatprep.mubr.f32.mxu0 %v1373
        %1853 = vmatmul.mubr.f32.gmra.mxu0 %v1372
        %v1854 = vpop.f32.mrf.mxu0
        %v1855 = vadd.f32 0.0, %v1854
        %v1856 = vpop.f32.mrf.mxu0
        %v1857 = vadd.f32 0.0, %v1856
        %1858 = vmatprep.mubr.f32.mxu0 %v1375
        %1859 = vmatmul.mubr.f32.gmra.mxu0 %v1374
        %v1860 = vpop.f32.mrf.mxu0
        %v1861 = vadd.f32 0.0, %v1860
        %v1862 = vpop.f32.mrf.mxu0
        %v1863 = vadd.f32 0.0, %v1862
        %1864 = vmatprep.mubr.f32.mxu0 %v1377
        %1865 = vmatmul.mubr.f32.gmra.mxu0 %v1376
        %v1866 = vpop.f32.mrf.mxu0
        %v1867 = vadd.f32 0.0, %v1866
        %v1868 = vpop.f32.mrf.mxu0
        %v1869 = vadd.f32 0.0, %v1868
        %1870 = vmatprep.mubr.f32.mxu0 %v1379
        %1871 = vmatmul.mubr.f32.gmra.mxu0 %v1378
        %v1872 = vpop.f32.mrf.mxu0
        %v1873 = vadd.f32 0.0, %v1872
        %v1874 = vpop.f32.mrf.mxu0
        %v1875 = vadd.f32 0.0, %v1874
        %1876 = vmatprep.mubr.f32.mxu0 %v1381
        %1877 = vmatmul.mubr.f32.gmra.mxu0 %v1380
        %v1878 = vpop.f32.mrf.mxu0
        %v1879 = vadd.f32 0.0, %v1878
        %v1880 = vpop.f32.mrf.mxu0
        %v1881 = vadd.f32 0.0, %v1880
        %1882 = vmatprep.mubr.f32.mxu0 %v1383
        %1883 = vmatmul.mubr.f32.gmra.mxu0 %v1382
        %v1884 = vpop.f32.mrf.mxu0
        %v1885 = vadd.f32 0.0, %v1884
        %v1886 = vpop.f32.mrf.mxu0
        %v1887 = vadd.f32 0.0, %v1886
        %1888 = vmatprep.mubr.f32.mxu0 %v1385
        %1889 = vmatmul.mubr.f32.gmra.mxu0 %v1384
        %v1890 = vpop.f32.mrf.mxu0
        %v1891 = vadd.f32 0.0, %v1890
        %v1892 = vpop.f32.mrf.mxu0
        %v1893 = vadd.f32 0.0, %v1892
        %1894 = vmatprep.mubr.f32.mxu0 %v1387
        %1895 = vmatmul.mubr.f32.gmra.mxu0 %v1386
        %v1896 = vpop.f32.mrf.mxu0
        %v1897 = vadd.f32 0.0, %v1896
        %v1898 = vpop.f32.mrf.mxu0
        %v1899 = vadd.f32 0.0, %v1898
        %1900 = vmatprep.mubr.f32.mxu0 %v1389
        %1901 = vmatmul.mubr.f32.gmra.mxu0 %v1388
        %v1902 = vpop.f32.mrf.mxu0
        %v1903 = vadd.f32 0.0, %v1902
        %v1904 = vpop.f32.mrf.mxu0
        %v1905 = vadd.f32 0.0, %v1904
        %1906 = vmatprep.mubr.f32.mxu0 %v1391
        %1907 = vmatmul.mubr.f32.gmra.mxu0 %v1390
        %v1908 = vpop.f32.mrf.mxu0
        %v1909 = vadd.f32 0.0, %v1908
        %v1910 = vpop.f32.mrf.mxu0
        %v1911 = vadd.f32 0.0, %v1910
        %1912 = vmatprep.mubr.f32.mxu0 %v1393
        %1913 = vmatmul.mubr.f32.gmra.mxu0 %v1392
        %v1914 = vpop.f32.mrf.mxu0
        %v1915 = vadd.f32 0.0, %v1914
        %v1916 = vpop.f32.mrf.mxu0
        %v1917 = vadd.f32 0.0, %v1916
        %1918 = vmatprep.mubr.f32.mxu0 %v1395
        %1919 = vmatmul.mubr.f32.gmra.mxu0 %v1394
        %v1920 = vpop.f32.mrf.mxu0
        %v1921 = vadd.f32 0.0, %v1920
        %v1922 = vpop.f32.mrf.mxu0
        %v1923 = vadd.f32 0.0, %v1922
        %1924 = vmatprep.mubr.f32.mxu0 %v1397
        %1925 = vmatmul.mubr.f32.gmra.mxu0 %v1396
        %v1926 = vpop.f32.mrf.mxu0
        %v1927 = vadd.f32 0.0, %v1926
        %v1928 = vpop.f32.mrf.mxu0
        %v1929 = vadd.f32 0.0, %v1928
        %1930 = vmatprep.mubr.f32.mxu0 %v1399
        %1931 = vmatmul.mubr.f32.gmra.mxu0 %v1398
        %v1932 = vpop.f32.mrf.mxu0
        %v1933 = vadd.f32 0.0, %v1932
        %v1934 = vpop.f32.mrf.mxu0
        %v1935 = vadd.f32 0.0, %v1934
        %1936 = vmatprep.mubr.f32.mxu0 %v1401
        %1937 = vmatmul.mubr.f32.gmra.mxu0 %v1400
        %v1938 = vpop.f32.mrf.mxu0
        %v1939 = vadd.f32 0.0, %v1938
        %v1940 = vpop.f32.mrf.mxu0
        %v1941 = vadd.f32 0.0, %v1940
        %1942 = vmatprep.mubr.f32.mxu0 %v1403
        %1943 = vmatmul.mubr.f32.gmra.mxu0 %v1402
        %v1944 = vpop.f32.mrf.mxu0
        %v1945 = vadd.f32 0.0, %v1944
        %v1946 = vpop.f32.mrf.mxu0
        %v1947 = vadd.f32 0.0, %v1946
        %1948 = vmatprep.mubr.f32.mxu0 %v1405
        %1949 = vmatmul.mubr.f32.gmra.mxu0 %v1404
        %v1950 = vpop.f32.mrf.mxu0
        %v1951 = vadd.f32 0.0, %v1950
        %v1952 = vpop.f32.mrf.mxu0
        %v1953 = vadd.f32 0.0, %v1952
        %1954 = vmatprep.mubr.f32.mxu0 %v1407
        %1955 = vmatmul.mubr.f32.gmra.mxu0 %v1406
        %v1956 = vpop.f32.mrf.mxu0
        %v1957 = vadd.f32 0.0, %v1956
        %v1958 = vpop.f32.mrf.mxu0
        %v1959 = vadd.f32 0.0, %v1958
        %1960 = vmatprep.mubr.f32.mxu0 %v1409
        %1961 = vmatmul.mubr.f32.gmra.mxu0 %v1408
        %v1962 = vpop.f32.mrf.mxu0
        %v1963 = vadd.f32 0.0, %v1962
        %v1964 = vpop.f32.mrf.mxu0
        %v1965 = vadd.f32 0.0, %v1964
        %1966 = vmatprep.mubr.f32.mxu0 %v1411
        %1967 = vmatmul.mubr.f32.gmra.mxu0 %v1410
        %v1968 = vpop.f32.mrf.mxu0
        %v1969 = vadd.f32 0.0, %v1968
        %v1970 = vpop.f32.mrf.mxu0
        %v1971 = vadd.f32 0.0, %v1970
        %1972 = vmatprep.mubr.f32.mxu0 %v1413
        %1973 = vmatmul.mubr.f32.gmra.mxu0 %v1412
        %v1974 = vpop.f32.mrf.mxu0
        %v1975 = vadd.f32 0.0, %v1974
        %v1976 = vpop.f32.mrf.mxu0
        %v1977 = vadd.f32 0.0, %v1976
        %1978 = vmatprep.mubr.f32.mxu0 %v1415
        %1979 = vmatmul.mubr.f32.gmra.mxu0 %v1414
        %v1980 = vpop.f32.mrf.mxu0
        %v1981 = vadd.f32 0.0, %v1980
        %v1982 = vpop.f32.mrf.mxu0
        %v1983 = vadd.f32 0.0, %v1982
        %1984 = vmatprep.mubr.f32.mxu0 %v1417
        %1985 = vmatmul.mubr.f32.gmra.mxu0 %v1416
        %v1986 = vpop.f32.mrf.mxu0
        %v1987 = vadd.f32 0.0, %v1986
        %v1988 = vpop.f32.mrf.mxu0
        %v1989 = vadd.f32 0.0, %v1988
        %1990 = vmatprep.mubr.f32.mxu0 %v1419
        %1991 = vmatmul.mubr.f32.gmra.mxu0 %v1418
        %v1992 = vpop.f32.mrf.mxu0
        %v1993 = vadd.f32 0.0, %v1992
        %v1994 = vpop.f32.mrf.mxu0
        %v1995 = vadd.f32 0.0, %v1994
        %1996 = vmatprep.mubr.f32.mxu0 %v1421
        %1997 = vmatmul.mubr.f32.gmra.mxu0 %v1420
        %v1998 = vpop.f32.mrf.mxu0
        %v1999 = vadd.f32 0.0, %v1998
        %v2000 = vpop.f32.mrf.mxu0
        %v2001 = vadd.f32 0.0, %v2000
        %2002 = vmatprep.mubr.f32.mxu0 %v1423
        %2003 = vmatmul.mubr.f32.gmra.mxu0 %v1422
        %v2004 = vpop.f32.mrf.mxu0
        %v2005 = vadd.f32 0.0, %v2004
        %v2006 = vpop.f32.mrf.mxu0
        %v2007 = vadd.f32 0.0, %v2006
        %2008 = vmatprep.mubr.f32.mxu0 %v1425
        %2009 = vmatmul.mubr.f32.gmra.mxu0 %v1424
        %v2010 = vpop.f32.mrf.mxu0
        %v2011 = vadd.f32 0.0, %v2010
        %v2012 = vpop.f32.mrf.mxu0
        %v2013 = vadd.f32 0.0, %v2012
        %2014 = vmatprep.mubr.f32.mxu0 %v1427
        %2015 = vmatmul.mubr.f32.gmra.mxu0 %v1426
        %v2016 = vpop.f32.mrf.mxu0
        %v2017 = vadd.f32 0.0, %v2016
        %v2018 = vpop.f32.mrf.mxu0
        %v2019 = vadd.f32 0.0, %v2018
        %2020 = vmatprep.mubr.f32.mxu0 %v1429
        %2021 = vmatmul.mubr.f32.gmra.mxu0 %v1428
        %v2022 = vpop.f32.mrf.mxu0
        %v2023 = vadd.f32 0.0, %v2022
        %v2024 = vpop.f32.mrf.mxu0
        %v2025 = vadd.f32 0.0, %v2024
        %2026 = vmatprep.mubr.f32.mxu0 %v1431
        %2027 = vmatmul.mubr.f32.gmra.mxu0 %v1430
        %v2028 = vpop.f32.mrf.mxu0
        %v2029 = vadd.f32 0.0, %v2028
        %v2030 = vpop.f32.mrf.mxu0
        %v2031 = vadd.f32 0.0, %v2030
        %2032 = vmatprep.mubr.f32.mxu0 %v1433
        %2033 = vmatmul.mubr.f32.gmra.mxu0 %v1432
        %v2034 = vpop.f32.mrf.mxu0
        %v2035 = vadd.f32 0.0, %v2034
        %v2036 = vpop.f32.mrf.mxu0
        %v2037 = vadd.f32 0.0, %v2036
        %2038 = vmatprep.mubr.f32.mxu0 %v1435
        %2039 = vmatmul.mubr.f32.gmra.mxu0 %v1434
        %v2040 = vpop.f32.mrf.mxu0
        %v2041 = vadd.f32 0.0, %v2040
        %v2042 = vpop.f32.mrf.mxu0
        %v2043 = vadd.f32 0.0, %v2042
        %2044 = vmatprep.mubr.f32.mxu0 %v1437
        %2045 = vmatmul.mubr.f32.gmra.mxu0 %v1436
        %v2046 = vpop.f32.mrf.mxu0
        %v2047 = vadd.f32 0.0, %v2046
        %v2048 = vpop.f32.mrf.mxu0
        %v2049 = vadd.f32 0.0, %v2048
        %2050 = vmatprep.mubr.f32.mxu0 %v1439
        %2051 = vmatmul.mubr.f32.gmra.mxu0 %v1438
        %v2052 = vpop.f32.mrf.mxu0
        %v2053 = vadd.f32 0.0, %v2052
        %v2054 = vpop.f32.mrf.mxu0
        %v2055 = vadd.f32 0.0, %v2054
        %2056 = vmatprep.mubr.f32.mxu0 %v1441
        %2057 = vmatmul.mubr.f32.gmra.mxu0 %v1440
        %v2058 = vpop.f32.mrf.mxu0
        %v2059 = vadd.f32 0.0, %v2058
        %v2060 = vpop.f32.mrf.mxu0
        %v2061 = vadd.f32 0.0, %v2060
        %2062 = vmatprep.mubr.f32.mxu0 %v1443
        %2063 = vmatmul.mubr.f32.gmra.mxu0 %v1442
        %v2064 = vpop.f32.mrf.mxu0
        %v2065 = vadd.f32 0.0, %v2064
        %v2066 = vpop.f32.mrf.mxu0
        %v2067 = vadd.f32 0.0, %v2066
        %2068 = vmatprep.mubr.f32.mxu0 %v1445
        %2069 = vmatmul.mubr.f32.gmra.mxu0 %v1444
        %v2070 = vpop.f32.mrf.mxu0
        %v2071 = vadd.f32 0.0, %v2070
        %v2072 = vpop.f32.mrf.mxu0
        %v2073 = vadd.f32 0.0, %v2072
        %2074 = vmatprep.mubr.f32.mxu0 %v1447
        %2075 = vmatmul.mubr.f32.gmra.mxu0 %v1446
        %v2076 = vpop.f32.mrf.mxu0
        %v2077 = vadd.f32 0.0, %v2076
        %v2078 = vpop.f32.mrf.mxu0
        %v2079 = vadd.f32 0.0, %v2078
        %2080 = vmatprep.mubr.f32.mxu0 %v1449
        %2081 = vmatmul.mubr.f32.gmra.mxu0 %v1448
        %v2082 = vpop.f32.mrf.mxu0
        %v2083 = vadd.f32 0.0, %v2082
        %v2084 = vpop.f32.mrf.mxu0
        %v2085 = vadd.f32 0.0, %v2084
        %2086 = vmatprep.mubr.f32.mxu0 %v1451
        %2087 = vmatmul.mubr.f32.gmra.mxu0 %v1450
        %v2088 = vpop.f32.mrf.mxu0
        %v2089 = vadd.f32 0.0, %v2088
        %v2090 = vpop.f32.mrf.mxu0
        %v2091 = vadd.f32 0.0, %v2090
        %2092 = vmatprep.mubr.f32.mxu0 %v1453
        %2093 = vmatmul.mubr.f32.gmra.mxu0 %v1452
        %v2094 = vpop.f32.mrf.mxu0
        %v2095 = vadd.f32 0.0, %v2094
        %v2096 = vpop.f32.mrf.mxu0
        %v2097 = vadd.f32 0.0, %v2096
        %2098 = vmatprep.mubr.f32.mxu0 %v1455
        %2099 = vmatmul.mubr.f32.gmra.mxu0 %v1454
        %v2100 = vpop.f32.mrf.mxu0
        %v2101 = vadd.f32 0.0, %v2100
        %v2102 = vpop.f32.mrf.mxu0
        %v2103 = vadd.f32 0.0, %v2102
        %2104 = vmatprep.mubr.f32.mxu0 %v1457
        %2105 = vmatmul.mubr.f32.gmra.mxu0 %v1456
        %v2106 = vpop.f32.mrf.mxu0
        %v2107 = vadd.f32 0.0, %v2106
        %v2108 = vpop.f32.mrf.mxu0
        %v2109 = vadd.f32 0.0, %v2108
        %2110 = vmatprep.mubr.f32.mxu0 %v1459
        %2111 = vmatmul.mubr.f32.gmra.mxu0 %v1458
        %v2112 = vpop.f32.mrf.mxu0
        %v2113 = vadd.f32 0.0, %v2112
        %v2114 = vpop.f32.mrf.mxu0
        %v2115 = vadd.f32 0.0, %v2114
        %2116 = vmatprep.mubr.f32.mxu0 %v1461
        %2117 = vmatmul.mubr.f32.gmra.mxu0 %v1460
        %v2118 = vpop.f32.mrf.mxu0
        %v2119 = vadd.f32 0.0, %v2118
        %v2120 = vpop.f32.mrf.mxu0
        %v2121 = vadd.f32 0.0, %v2120
        %2122 = vmatprep.mubr.f32.mxu0 %v1463
        %2123 = vmatmul.mubr.f32.gmra.mxu0 %v1462
        %v2124 = vpop.f32.mrf.mxu0
        %v2125 = vadd.f32 0.0, %v2124
        %v2126 = vpop.f32.mrf.mxu0
        %v2127 = vadd.f32 0.0, %v2126
        %2128 = vmatprep.mubr.f32.mxu0 %v1465
        %2129 = vmatmul.mubr.f32.gmra.mxu0 %v1464
        %v2130 = vpop.f32.mrf.mxu0
        %v2131 = vadd.f32 0.0, %v2130
        %v2132 = vpop.f32.mrf.mxu0
        %v2133 = vadd.f32 0.0, %v2132
        %2134 = vmatprep.mubr.f32.mxu0 %v1467
        %2135 = vmatmul.mubr.f32.gmra.mxu0 %v1466
        %v2136 = vpop.f32.mrf.mxu0
        %v2137 = vadd.f32 0.0, %v2136
        %v2138 = vpop.f32.mrf.mxu0
        %v2139 = vadd.f32 0.0, %v2138
        %2140 = vmatprep.mubr.f32.mxu0 %v1469
        %2141 = vmatmul.mubr.f32.gmra.mxu0 %v1468
        %v2142 = vpop.f32.mrf.mxu0
        %v2143 = vadd.f32 0.0, %v2142
        %v2144 = vpop.f32.mrf.mxu0
        %v2145 = vadd.f32 0.0, %v2144
        %2146 = vmatprep.mubr.f32.mxu0 %v1471
        %2147 = vmatmul.mubr.f32.gmra.mxu0 %v1470
        %v2148 = vpop.f32.mrf.mxu0
        %v2149 = vadd.f32 0.0, %v2148
        %v2150 = vpop.f32.mrf.mxu0
        %v2151 = vadd.f32 0.0, %v2150
        %2152 = vmatprep.mubr.f32.mxu0 %v1473
        %2153 = vmatmul.mubr.f32.gmra.mxu0 %v1472
        %v2154 = vpop.f32.mrf.mxu0
        %v2155 = vadd.f32 0.0, %v2154
        %v2156 = vpop.f32.mrf.mxu0
        %v2157 = vadd.f32 0.0, %v2156
        %2158 = vmatprep.mubr.f32.mxu0 %v1475
        %2159 = vmatmul.mubr.f32.gmra.mxu0 %v1474
        %v2160 = vpop.f32.mrf.mxu0
        %v2161 = vadd.f32 0.0, %v2160
        %v2162 = vpop.f32.mrf.mxu0
        %v2163 = vadd.f32 0.0, %v2162
        %2164 = vmatprep.mubr.f32.mxu0 %v1477
        %2165 = vmatmul.mubr.f32.gmra.mxu0 %v1476
        %v2166 = vpop.f32.mrf.mxu0
        %v2167 = vadd.f32 0.0, %v2166
        %v2168 = vpop.f32.mrf.mxu0
        %v2169 = vadd.f32 0.0, %v2168
        %2170 = vmatprep.mubr.f32.mxu0 %v1479
        %2171 = vmatmul.mubr.f32.gmra.mxu0 %v1478
        %v2172 = vpop.f32.mrf.mxu0
        %v2173 = vadd.f32 0.0, %v2172
        %v2174 = vpop.f32.mrf.mxu0
        %v2175 = vadd.f32 0.0, %v2174
        %2176 = vmatprep.mubr.f32.mxu0 %v1481
        %2177 = vmatmul.mubr.f32.gmra.mxu0 %v1480
        %v2178 = vpop.f32.mrf.mxu0
        %v2179 = vadd.f32 0.0, %v2178
        %v2180 = vpop.f32.mrf.mxu0
        %v2181 = vadd.f32 0.0, %v2180
        %2182 = vmatprep.mubr.f32.mxu0 %v1483
        %2183 = vmatmul.mubr.f32.gmra.mxu0 %v1482
        %v2184 = vpop.f32.mrf.mxu0
        %v2185 = vadd.f32 0.0, %v2184
        %v2186 = vpop.f32.mrf.mxu0
        %v2187 = vadd.f32 0.0, %v2186
        %2188 = vmatprep.mubr.f32.mxu0 %v1485
        %2189 = vmatmul.mubr.f32.gmra.mxu0 %v1484
        %v2190 = vpop.f32.mrf.mxu0
        %v2191 = vadd.f32 0.0, %v2190
        %v2192 = vpop.f32.mrf.mxu0
        %v2193 = vadd.f32 0.0, %v2192
        %2194 = vmatprep.mubr.f32.mxu0 %v1487
        %2195 = vmatmul.mubr.f32.gmra.mxu0 %v1486
        %v2196 = vpop.f32.mrf.mxu0
        %v2197 = vadd.f32 0.0, %v2196
        %v2198 = vpop.f32.mrf.mxu0
        %v2199 = vadd.f32 0.0, %v2198
        %2200 = vmatprep.mubr.f32.mxu0 %v1489
        %2201 = vmatmul.mubr.f32.gmra.mxu0 %v1488
        %v2202 = vpop.f32.mrf.mxu0
        %v2203 = vadd.f32 0.0, %v2202
        %v2204 = vpop.f32.mrf.mxu0
        %v2205 = vadd.f32 0.0, %v2204
        %2206 = vmatprep.mubr.f32.mxu0 %v1491
        %2207 = vmatmul.mubr.f32.gmra.mxu0 %v1490
        %v2208 = vpop.f32.mrf.mxu0
        %v2209 = vadd.f32 0.0, %v2208
        %v2210 = vpop.f32.mrf.mxu0
        %v2211 = vadd.f32 0.0, %v2210
        %2212 = vmatprep.mubr.f32.mxu0 %v1493
        %2213 = vmatmul.mubr.f32.gmra.mxu0 %v1492
        %v2214 = vpop.f32.mrf.mxu0
        %v2215 = vadd.f32 0.0, %v2214
        %v2216 = vpop.f32.mrf.mxu0
        %v2217 = vadd.f32 0.0, %v2216
        %2218 = vmatprep.mubr.f32.mxu0 %v1495
        %2219 = vmatmul.mubr.f32.gmra.mxu0 %v1494
        %v2220 = vpop.f32.mrf.mxu0
        %v2221 = vadd.f32 0.0, %v2220
        %v2222 = vpop.f32.mrf.mxu0
        %v2223 = vadd.f32 0.0, %v2222
        %2224 = vmatprep.mubr.f32.mxu0 %v1497
        %2225 = vmatmul.mubr.f32.gmra.mxu0 %v1496
        %v2226 = vpop.f32.mrf.mxu0
        %v2227 = vadd.f32 0.0, %v2226
        %v2228 = vpop.f32.mrf.mxu0
        %v2229 = vadd.f32 0.0, %v2228
        %2230 = vmatprep.mubr.f32.mxu0 %v1499
        %2231 = vmatmul.mubr.f32.gmra.mxu0 %v1498
        %v2232 = vpop.f32.mrf.mxu0
        %v2233 = vadd.f32 0.0, %v2232
        %v2234 = vpop.f32.mrf.mxu0
        %v2235 = vadd.f32 0.0, %v2234
        %2236 = vmatprep.mubr.f32.mxu0 %v1501
        %2237 = vmatmul.mubr.f32.gmra.mxu0 %v1500
        %v2238 = vpop.f32.mrf.mxu0
        %v2239 = vadd.f32 0.0, %v2238
        %v2240 = vpop.f32.mrf.mxu0
        %v2241 = vadd.f32 0.0, %v2240
        %2242 = vmatprep.mubr.f32.mxu0 %v1503
        %2243 = vmatmul.mubr.f32.gmra.mxu0 %v1502
        %v2244 = vpop.f32.mrf.mxu0
        %v2245 = vadd.f32 0.0, %v2244
        %v2246 = vpop.f32.mrf.mxu0
        %v2247 = vadd.f32 0.0, %v2246
        %2248 = vmatprep.mubr.f32.mxu0 %v1505
        %2249 = vmatmul.mubr.f32.gmra.mxu0 %v1504
        %v2250 = vpop.f32.mrf.mxu0
        %v2251 = vadd.f32 0.0, %v2250
        %v2252 = vpop.f32.mrf.mxu0
        %v2253 = vadd.f32 0.0, %v2252
        %2254 = vmatprep.mubr.f32.mxu0 %v1507
        %2255 = vmatmul.mubr.f32.gmra.mxu0 %v1506
        %v2256 = vpop.f32.mrf.mxu0
        %v2257 = vadd.f32 0.0, %v2256
        %v2258 = vpop.f32.mrf.mxu0
        %v2259 = vadd.f32 0.0, %v2258
        %2260 = vmatprep.mubr.f32.mxu0 %v1509
        %2261 = vmatmul.mubr.f32.gmra.mxu0 %v1508
        %v2262 = vpop.f32.mrf.mxu0
        %v2263 = vadd.f32 0.0, %v2262
        %v2264 = vpop.f32.mrf.mxu0
        %v2265 = vadd.f32 0.0, %v2264
        %2266 = vmatprep.mubr.f32.mxu0 %v1511
        %2267 = vmatmul.mubr.f32.gmra.mxu0 %v1510
        %v2268 = vpop.f32.mrf.mxu0
        %v2269 = vadd.f32 0.0, %v2268
        %v2270 = vpop.f32.mrf.mxu0
        %v2271 = vadd.f32 0.0, %v2270
        %2272 = vmatprep.mubr.f32.mxu0 %v1513
        %2273 = vmatmul.mubr.f32.gmra.mxu0 %v1512
        %v2274 = vpop.f32.mrf.mxu0
        %v2275 = vadd.f32 0.0, %v2274
        %v2276 = vpop.f32.mrf.mxu0
        %v2277 = vadd.f32 0.0, %v2276
        %2278 = vmatprep.mubr.f32.mxu0 %v1515
        %2279 = vmatmul.mubr.f32.gmra.mxu0 %v1514
        %v2280 = vpop.f32.mrf.mxu0
        %v2281 = vadd.f32 0.0, %v2280
        %v2282 = vpop.f32.mrf.mxu0
        %v2283 = vadd.f32 0.0, %v2282
        %2284 = vmatprep.mubr.f32.mxu0 %v1517
        %2285 = vmatmul.mubr.f32.gmra.mxu0 %v1516
        %v2286 = vpop.f32.mrf.mxu0
        %v2287 = vadd.f32 0.0, %v2286
        %v2288 = vpop.f32.mrf.mxu0
        %v2289 = vadd.f32 0.0, %v2288
        %2290 = vmatprep.mubr.f32.mxu0 %v1519
        %2291 = vmatmul.mubr.f32.gmra.mxu0 %v1518
        %v2292 = vpop.f32.mrf.mxu0
        %v2293 = vadd.f32 0.0, %v2292
        %v2294 = vpop.f32.mrf.mxu0
        %v2295 = vadd.f32 0.0, %v2294
        %2296 = vmatprep.mubr.f32.mxu0 %v1521
        %2297 = vmatmul.mubr.f32.gmra.mxu0 %v1520
        %v2298 = vpop.f32.mrf.mxu0
        %v2299 = vadd.f32 0.0, %v2298
        %v2300 = vpop.f32.mrf.mxu0
        %v2301 = vadd.f32 0.0, %v2300
        %2302 = vmatprep.mubr.f32.mxu0 %v1523
        %2303 = vmatmul.mubr.f32.gmra.mxu0 %v1522
        %v2304 = vpop.f32.mrf.mxu0
        %v2305 = vadd.f32 0.0, %v2304
        %v2306 = vpop.f32.mrf.mxu0
        %v2307 = vadd.f32 0.0, %v2306
        %2308 = vmatprep.mubr.f32.mxu0 %v1525
        %2309 = vmatmul.mubr.f32.gmra.mxu0 %v1524
        %v2310 = vpop.f32.mrf.mxu0
        %v2311 = vadd.f32 0.0, %v2310
        %v2312 = vpop.f32.mrf.mxu0
        %v2313 = vadd.f32 0.0, %v2312
        %2314 = vmatprep.mubr.f32.mxu0 %v1527
        %2315 = vmatmul.mubr.f32.gmra.mxu0 %v1526
        %v2316 = vpop.f32.mrf.mxu0
        %v2317 = vadd.f32 0.0, %v2316
        %v2318 = vpop.f32.mrf.mxu0
        %v2319 = vadd.f32 0.0, %v2318
        %2320 = vmatprep.mubr.f32.mxu0 %v1529
        %2321 = vmatmul.mubr.f32.gmra.mxu0 %v1528
        %v2322 = vpop.f32.mrf.mxu0
        %v2323 = vadd.f32 0.0, %v2322
        %v2324 = vpop.f32.mrf.mxu0
        %v2325 = vadd.f32 0.0, %v2324
        %2326 = vmatprep.mubr.f32.mxu0 %v1531
        %2327 = vmatmul.mubr.f32.gmra.mxu0 %v1530
        %v2328 = vpop.f32.mrf.mxu0
        %v2329 = vadd.f32 0.0, %v2328
        %v2330 = vpop.f32.mrf.mxu0
        %v2331 = vadd.f32 0.0, %v2330
        %2332 = vmatprep.mubr.f32.mxu0 %v1533
        %2333 = vmatmul.mubr.f32.gmra.mxu0 %v1532
        %v2334 = vpop.f32.mrf.mxu0
        %v2335 = vadd.f32 0.0, %v2334
        %v2336 = vpop.f32.mrf.mxu0
        %v2337 = vadd.f32 0.0, %v2336
        %2338 = vmatprep.mubr.f32.mxu0 %v1535
        %2339 = vmatmul.mubr.f32.gmra.mxu0 %v1534
        %v2340 = vpop.f32.mrf.mxu0
        %v2341 = vadd.f32 0.0, %v2340
        %v2342 = vpop.f32.mrf.mxu0
        %v2343 = vadd.f32 0.0, %v2342
        %2344 = vmatprep.mubr.f32.mxu0 %v1537
        %2345 = vmatmul.mubr.f32.gmra.mxu0 %v1536
        %v2346 = vpop.f32.mrf.mxu0
        %v2347 = vadd.f32 0.0, %v2346
        %v2348 = vpop.f32.mrf.mxu0
        %v2349 = vadd.f32 0.0, %v2348
        %2350 = vmatprep.mubr.f32.mxu0 %v1539
        %2351 = vmatmul.mubr.f32.gmra.mxu0 %v1538
        %v2352 = vpop.f32.mrf.mxu0
        %v2353 = vadd.f32 0.0, %v2352
        %v2354 = vpop.f32.mrf.mxu0
        %v2355 = vadd.f32 0.0, %v2354
        %2356 = vmatprep.mubr.f32.mxu0 %v1541
        %2357 = vmatmul.mubr.f32.gmra.mxu0 %v1540
        %v2358 = vpop.f32.mrf.mxu0
        %v2359 = vadd.f32 0.0, %v2358
        %v2360 = vpop.f32.mrf.mxu0
        %v2361 = vadd.f32 0.0, %v2360
        %2362 = vmatprep.mubr.f32.mxu0 %v1543
        %2363 = vmatmul.mubr.f32.gmra.mxu0 %v1542
        %v2364 = vpop.f32.mrf.mxu0
        %v2365 = vadd.f32 0.0, %v2364
        %v2366 = vpop.f32.mrf.mxu0
        %v2367 = vadd.f32 0.0, %v2366
        %2368 = vmatprep.mubr.f32.mxu0 %v1545
        %2369 = vmatmul.mubr.f32.gmra.mxu0 %v1544
        %v2370 = vpop.f32.mrf.mxu0
        %v2371 = vadd.f32 0.0, %v2370
        %v2372 = vpop.f32.mrf.mxu0
        %v2373 = vadd.f32 0.0, %v2372
        %2374 = vmatprep.mubr.f32.mxu0 %v1547
        %2375 = vmatmul.mubr.f32.gmra.mxu0 %v1546
        %v2376 = vpop.f32.mrf.mxu0
        %v2377 = vadd.f32 0.0, %v2376
        %v2378 = vpop.f32.mrf.mxu0
        %v2379 = vadd.f32 0.0, %v2378
        %2380 = vdwg.mxu0
        %2381 = vmatprep.subr.mxu0 %v1643
        %2382 = vmatpush1.xpose.msra.mxu0 %v1642
        %2383 = vmatprep.subr.mxu0 %v1641
        %2384 = vmatpush1.xpose.msra.mxu0 %v1640
        %2385 = vmatprep.subr.mxu0 %v1639
        %2386 = vmatpush1.xpose.msra.mxu0 %v1638
        %2387 = vmatprep.subr.mxu0 %v1637
        %2388 = vmatpush1.xpose.msra.mxu0 %v1636
        %2389 = vmatprep.subr.mxu0 %v1635
        %2390 = vmatpush1.xpose.msra.mxu0 %v1634
        %2391 = vmatprep.subr.mxu0 %v1633
        %2392 = vmatpush1.xpose.msra.mxu0 %v1632
        %2393 = vmatprep.subr.mxu0 %v1631
        %2394 = vmatpush1.xpose.msra.mxu0 %v1630
        %2395 = vmatprep.subr.mxu0 %v1629
        %2396 = vmatpush1.xpose.msra.mxu0 %v1628
        %2397 = vmatprep.subr.mxu0 %v1627
        %2398 = vmatpush1.xpose.msra.mxu0 %v1626
        %2399 = vmatprep.subr.mxu0 %v1625
        %2400 = vmatpush1.xpose.msra.mxu0 %v1624
        %2401 = vmatprep.subr.mxu0 %v1623
        %2402 = vmatpush1.xpose.msra.mxu0 %v1622
        %2403 = vmatprep.subr.mxu0 %v1621
        %2404 = vmatpush1.xpose.msra.mxu0 %v1620
        %2405 = vmatprep.subr.mxu0 %v1619
        %2406 = vmatpush1.xpose.msra.mxu0 %v1618
        %2407 = vmatprep.subr.mxu0 %v1617
        %2408 = vmatpush1.xpose.msra.mxu0 %v1616
        %2409 = vmatprep.subr.mxu0 %v1615
        %2410 = vmatpush1.xpose.msra.mxu0 %v1614
        %2411 = vmatprep.subr.mxu0 %v1613
        %2412 = vmatpush1.xpose.msra.mxu0 %v1612
        %2413 = vmatprep.subr.mxu0 %v1675
        %2414 = vmatpush2.xpose.msra.mxu0 %v1674
        %2415 = vmatprep.subr.mxu0 %v1673
        %2416 = vmatpush2.xpose.msra.mxu0 %v1672
        %2417 = vmatprep.subr.mxu0 %v1671
        %2418 = vmatpush2.xpose.msra.mxu0 %v1670
        %2419 = vmatprep.subr.mxu0 %v1669
        %2420 = vmatpush2.xpose.msra.mxu0 %v1668
        %2421 = vmatprep.subr.mxu0 %v1667
        %2422 = vmatpush2.xpose.msra.mxu0 %v1666
        %2423 = vmatprep.subr.mxu0 %v1665
        %2424 = vmatpush2.xpose.msra.mxu0 %v1664
        %2425 = vmatprep.subr.mxu0 %v1663
        %2426 = vmatpush2.xpose.msra.mxu0 %v1662
        %2427 = vmatprep.subr.mxu0 %v1661
        %2428 = vmatpush2.xpose.msra.mxu0 %v1660
        %2429 = vmatprep.subr.mxu0 %v1659
        %2430 = vmatpush2.xpose.msra.mxu0 %v1658
        %2431 = vmatprep.subr.mxu0 %v1657
        %2432 = vmatpush2.xpose.msra.mxu0 %v1656
        %2433 = vmatprep.subr.mxu0 %v1655
        %2434 = vmatpush2.xpose.msra.mxu0 %v1654
        %2435 = vmatprep.subr.mxu0 %v1653
        %2436 = vmatpush2.xpose.msra.mxu0 %v1652
        %2437 = vmatprep.subr.mxu0 %v1651
        %2438 = vmatpush2.xpose.msra.mxu0 %v1650
        %2439 = vmatprep.subr.mxu0 %v1649
        %2440 = vmatpush2.xpose.msra.mxu0 %v1648
        %2441 = vmatprep.subr.mxu0 %v1647
        %2442 = vmatpush2.xpose.msra.mxu0 %v1646
        %2443 = vmatprep.subr.mxu0 %v1645
        %2444 = vmatpush2.xpose.msra.mxu0 %v1644
        %2445 = vmatprep.mubr.f32.mxu0 %v1357
        %2446 = vmatmul.mubr.f32.gmra.mxu0 %v1356
        %v2447 = vpop.f32.mrf.mxu0
        %v2448 = vadd.f32 0.0, %v2447
        %v2449 = vpop.f32.mrf.mxu0
        %v2450 = vadd.f32 0.0, %v2449
        %2451 = vmatprep.mubr.f32.mxu0 %v1359
        %2452 = vmatmul.mubr.f32.gmra.mxu0 %v1358
        %v2453 = vpop.f32.mrf.mxu0
        %v2454 = vadd.f32 0.0, %v2453
        %v2455 = vpop.f32.mrf.mxu0
        %v2456 = vadd.f32 0.0, %v2455
        %2457 = vmatprep.mubr.f32.mxu0 %v1361
        %2458 = vmatmul.mubr.f32.gmra.mxu0 %v1360
        %v2459 = vpop.f32.mrf.mxu0
        %v2460 = vadd.f32 0.0, %v2459
        %v2461 = vpop.f32.mrf.mxu0
        %v2462 = vadd.f32 0.0, %v2461
        %2463 = vmatprep.mubr.f32.mxu0 %v1363
        %2464 = vmatmul.mubr.f32.gmra.mxu0 %v1362
        %v2465 = vpop.f32.mrf.mxu0
        %v2466 = vadd.f32 0.0, %v2465
        %v2467 = vpop.f32.mrf.mxu0
        %v2468 = vadd.f32 0.0, %v2467
        %2469 = vmatprep.mubr.f32.mxu0 %v1365
        %2470 = vmatmul.mubr.f32.gmra.mxu0 %v1364
        %v2471 = vpop.f32.mrf.mxu0
        %v2472 = vadd.f32 0.0, %v2471
        %v2473 = vpop.f32.mrf.mxu0
        %v2474 = vadd.f32 0.0, %v2473
        %2475 = vmatprep.mubr.f32.mxu0 %v1367
        %2476 = vmatmul.mubr.f32.gmra.mxu0 %v1366
        %v2477 = vpop.f32.mrf.mxu0
        %v2478 = vadd.f32 0.0, %v2477
        %v2479 = vpop.f32.mrf.mxu0
        %v2480 = vadd.f32 0.0, %v2479
        %2481 = vmatprep.mubr.f32.mxu0 %v1369
        %2482 = vmatmul.mubr.f32.gmra.mxu0 %v1368
        %v2483 = vpop.f32.mrf.mxu0
        %v2484 = vadd.f32 0.0, %v2483
        %v2485 = vpop.f32.mrf.mxu0
        %v2486 = vadd.f32 0.0, %v2485
        %2487 = vmatprep.mubr.f32.mxu0 %v1371
        %2488 = vmatmul.mubr.f32.gmra.mxu0 %v1370
        %v2489 = vpop.f32.mrf.mxu0
        %v2490 = vadd.f32 0.0, %v2489
        %v2491 = vpop.f32.mrf.mxu0
        %v2492 = vadd.f32 0.0, %v2491
        %2493 = vmatprep.mubr.f32.mxu0 %v1373
        %2494 = vmatmul.mubr.f32.gmra.mxu0 %v1372
        %v2495 = vpop.f32.mrf.mxu0
        %v2496 = vadd.f32 0.0, %v2495
        %v2497 = vpop.f32.mrf.mxu0
        %v2498 = vadd.f32 0.0, %v2497
        %2499 = vmatprep.mubr.f32.mxu0 %v1375
        %2500 = vmatmul.mubr.f32.gmra.mxu0 %v1374
        %v2501 = vpop.f32.mrf.mxu0
        %v2502 = vadd.f32 0.0, %v2501
        %v2503 = vpop.f32.mrf.mxu0
        %v2504 = vadd.f32 0.0, %v2503
        %2505 = vmatprep.mubr.f32.mxu0 %v1377
        %2506 = vmatmul.mubr.f32.gmra.mxu0 %v1376
        %v2507 = vpop.f32.mrf.mxu0
        %v2508 = vadd.f32 0.0, %v2507
        %v2509 = vpop.f32.mrf.mxu0
        %v2510 = vadd.f32 0.0, %v2509
        %2511 = vmatprep.mubr.f32.mxu0 %v1379
        %2512 = vmatmul.mubr.f32.gmra.mxu0 %v1378
        %v2513 = vpop.f32.mrf.mxu0
        %v2514 = vadd.f32 0.0, %v2513
        %v2515 = vpop.f32.mrf.mxu0
        %v2516 = vadd.f32 0.0, %v2515
        %2517 = vmatprep.mubr.f32.mxu0 %v1381
        %2518 = vmatmul.mubr.f32.gmra.mxu0 %v1380
        %v2519 = vpop.f32.mrf.mxu0
        %v2520 = vadd.f32 0.0, %v2519
        %v2521 = vpop.f32.mrf.mxu0
        %v2522 = vadd.f32 0.0, %v2521
        %2523 = vmatprep.mubr.f32.mxu0 %v1383
        %2524 = vmatmul.mubr.f32.gmra.mxu0 %v1382
        %v2525 = vpop.f32.mrf.mxu0
        %v2526 = vadd.f32 0.0, %v2525
        %v2527 = vpop.f32.mrf.mxu0
        %v2528 = vadd.f32 0.0, %v2527
        %2529 = vmatprep.mubr.f32.mxu0 %v1385
        %2530 = vmatmul.mubr.f32.gmra.mxu0 %v1384
        %v2531 = vpop.f32.mrf.mxu0
        %v2532 = vadd.f32 0.0, %v2531
        %v2533 = vpop.f32.mrf.mxu0
        %v2534 = vadd.f32 0.0, %v2533
        %2535 = vmatprep.mubr.f32.mxu0 %v1387
        %2536 = vmatmul.mubr.f32.gmra.mxu0 %v1386
        %v2537 = vpop.f32.mrf.mxu0
        %v2538 = vadd.f32 0.0, %v2537
        %v2539 = vpop.f32.mrf.mxu0
        %v2540 = vadd.f32 0.0, %v2539
        %2541 = vmatprep.mubr.f32.mxu0 %v1389
        %2542 = vmatmul.mubr.f32.gmra.mxu0 %v1388
        %v2543 = vpop.f32.mrf.mxu0
        %v2544 = vadd.f32 0.0, %v2543
        %v2545 = vpop.f32.mrf.mxu0
        %v2546 = vadd.f32 0.0, %v2545
        %2547 = vmatprep.mubr.f32.mxu0 %v1391
        %2548 = vmatmul.mubr.f32.gmra.mxu0 %v1390
        %v2549 = vpop.f32.mrf.mxu0
        %v2550 = vadd.f32 0.0, %v2549
        %v2551 = vpop.f32.mrf.mxu0
        %v2552 = vadd.f32 0.0, %v2551
        %2553 = vmatprep.mubr.f32.mxu0 %v1393
        %2554 = vmatmul.mubr.f32.gmra.mxu0 %v1392
        %v2555 = vpop.f32.mrf.mxu0
        %v2556 = vadd.f32 0.0, %v2555
        %v2557 = vpop.f32.mrf.mxu0
        %v2558 = vadd.f32 0.0, %v2557
        %2559 = vmatprep.mubr.f32.mxu0 %v1395
        %2560 = vmatmul.mubr.f32.gmra.mxu0 %v1394
        %v2561 = vpop.f32.mrf.mxu0
        %v2562 = vadd.f32 0.0, %v2561
        %v2563 = vpop.f32.mrf.mxu0
        %v2564 = vadd.f32 0.0, %v2563
        %2565 = vmatprep.mubr.f32.mxu0 %v1397
        %2566 = vmatmul.mubr.f32.gmra.mxu0 %v1396
        %v2567 = vpop.f32.mrf.mxu0
        %v2568 = vadd.f32 0.0, %v2567
        %v2569 = vpop.f32.mrf.mxu0
        %v2570 = vadd.f32 0.0, %v2569
        %2571 = vmatprep.mubr.f32.mxu0 %v1399
        %2572 = vmatmul.mubr.f32.gmra.mxu0 %v1398
        %v2573 = vpop.f32.mrf.mxu0
        %v2574 = vadd.f32 0.0, %v2573
        %v2575 = vpop.f32.mrf.mxu0
        %v2576 = vadd.f32 0.0, %v2575
        %2577 = vmatprep.mubr.f32.mxu0 %v1401
        %2578 = vmatmul.mubr.f32.gmra.mxu0 %v1400
        %v2579 = vpop.f32.mrf.mxu0
        %v2580 = vadd.f32 0.0, %v2579
        %v2581 = vpop.f32.mrf.mxu0
        %v2582 = vadd.f32 0.0, %v2581
        %2583 = vmatprep.mubr.f32.mxu0 %v1403
        %2584 = vmatmul.mubr.f32.gmra.mxu0 %v1402
        %v2585 = vpop.f32.mrf.mxu0
        %v2586 = vadd.f32 0.0, %v2585
        %v2587 = vpop.f32.mrf.mxu0
        %v2588 = vadd.f32 0.0, %v2587
        %2589 = vmatprep.mubr.f32.mxu0 %v1405
        %2590 = vmatmul.mubr.f32.gmra.mxu0 %v1404
        %v2591 = vpop.f32.mrf.mxu0
        %v2592 = vadd.f32 0.0, %v2591
        %v2593 = vpop.f32.mrf.mxu0
        %v2594 = vadd.f32 0.0, %v2593
        %2595 = vmatprep.mubr.f32.mxu0 %v1407
        %2596 = vmatmul.mubr.f32.gmra.mxu0 %v1406
        %v2597 = vpop.f32.mrf.mxu0
        %v2598 = vadd.f32 0.0, %v2597
        %v2599 = vpop.f32.mrf.mxu0
        %v2600 = vadd.f32 0.0, %v2599
        %2601 = vmatprep.mubr.f32.mxu0 %v1409
        %2602 = vmatmul.mubr.f32.gmra.mxu0 %v1408
        %v2603 = vpop.f32.mrf.mxu0
        %v2604 = vadd.f32 0.0, %v2603
        %v2605 = vpop.f32.mrf.mxu0
        %v2606 = vadd.f32 0.0, %v2605
        %2607 = vmatprep.mubr.f32.mxu0 %v1411
        %2608 = vmatmul.mubr.f32.gmra.mxu0 %v1410
        %v2609 = vpop.f32.mrf.mxu0
        %v2610 = vadd.f32 0.0, %v2609
        %v2611 = vpop.f32.mrf.mxu0
        %v2612 = vadd.f32 0.0, %v2611
        %2613 = vmatprep.mubr.f32.mxu0 %v1413
        %2614 = vmatmul.mubr.f32.gmra.mxu0 %v1412
        %v2615 = vpop.f32.mrf.mxu0
        %v2616 = vadd.f32 0.0, %v2615
        %v2617 = vpop.f32.mrf.mxu0
        %v2618 = vadd.f32 0.0, %v2617
        %2619 = vmatprep.mubr.f32.mxu0 %v1415
        %2620 = vmatmul.mubr.f32.gmra.mxu0 %v1414
        %v2621 = vpop.f32.mrf.mxu0
        %v2622 = vadd.f32 0.0, %v2621
        %v2623 = vpop.f32.mrf.mxu0
        %v2624 = vadd.f32 0.0, %v2623
        %2625 = vmatprep.mubr.f32.mxu0 %v1417
        %2626 = vmatmul.mubr.f32.gmra.mxu0 %v1416
        %v2627 = vpop.f32.mrf.mxu0
        %v2628 = vadd.f32 0.0, %v2627
        %v2629 = vpop.f32.mrf.mxu0
        %v2630 = vadd.f32 0.0, %v2629
        %2631 = vmatprep.mubr.f32.mxu0 %v1419
        %2632 = vmatmul.mubr.f32.gmra.mxu0 %v1418
        %v2633 = vpop.f32.mrf.mxu0
        %v2634 = vadd.f32 0.0, %v2633
        %v2635 = vpop.f32.mrf.mxu0
        %v2636 = vadd.f32 0.0, %v2635
        %2637 = vmatprep.mubr.f32.mxu0 %v1421
        %2638 = vmatmul.mubr.f32.gmra.mxu0 %v1420
        %v2639 = vpop.f32.mrf.mxu0
        %v2640 = vadd.f32 0.0, %v2639
        %v2641 = vpop.f32.mrf.mxu0
        %v2642 = vadd.f32 0.0, %v2641
        %2643 = vmatprep.mubr.f32.mxu0 %v1423
        %2644 = vmatmul.mubr.f32.gmra.mxu0 %v1422
        %v2645 = vpop.f32.mrf.mxu0
        %v2646 = vadd.f32 0.0, %v2645
        %v2647 = vpop.f32.mrf.mxu0
        %v2648 = vadd.f32 0.0, %v2647
        %2649 = vmatprep.mubr.f32.mxu0 %v1425
        %2650 = vmatmul.mubr.f32.gmra.mxu0 %v1424
        %v2651 = vpop.f32.mrf.mxu0
        %v2652 = vadd.f32 0.0, %v2651
        %v2653 = vpop.f32.mrf.mxu0
        %v2654 = vadd.f32 0.0, %v2653
        %2655 = vmatprep.mubr.f32.mxu0 %v1427
        %2656 = vmatmul.mubr.f32.gmra.mxu0 %v1426
        %v2657 = vpop.f32.mrf.mxu0
        %v2658 = vadd.f32 0.0, %v2657
        %v2659 = vpop.f32.mrf.mxu0
        %v2660 = vadd.f32 0.0, %v2659
        %2661 = vmatprep.mubr.f32.mxu0 %v1429
        %2662 = vmatmul.mubr.f32.gmra.mxu0 %v1428
        %v2663 = vpop.f32.mrf.mxu0
        %v2664 = vadd.f32 0.0, %v2663
        %v2665 = vpop.f32.mrf.mxu0
        %v2666 = vadd.f32 0.0, %v2665
        %2667 = vmatprep.mubr.f32.mxu0 %v1431
        %2668 = vmatmul.mubr.f32.gmra.mxu0 %v1430
        %v2669 = vpop.f32.mrf.mxu0
        %v2670 = vadd.f32 0.0, %v2669
        %v2671 = vpop.f32.mrf.mxu0
        %v2672 = vadd.f32 0.0, %v2671
        %2673 = vmatprep.mubr.f32.mxu0 %v1433
        %2674 = vmatmul.mubr.f32.gmra.mxu0 %v1432
        %v2675 = vpop.f32.mrf.mxu0
        %v2676 = vadd.f32 0.0, %v2675
        %v2677 = vpop.f32.mrf.mxu0
        %v2678 = vadd.f32 0.0, %v2677
        %2679 = vmatprep.mubr.f32.mxu0 %v1435
        %2680 = vmatmul.mubr.f32.gmra.mxu0 %v1434
        %v2681 = vpop.f32.mrf.mxu0
        %v2682 = vadd.f32 0.0, %v2681
        %v2683 = vpop.f32.mrf.mxu0
        %v2684 = vadd.f32 0.0, %v2683
        %2685 = vmatprep.mubr.f32.mxu0 %v1437
        %2686 = vmatmul.mubr.f32.gmra.mxu0 %v1436
        %v2687 = vpop.f32.mrf.mxu0
        %v2688 = vadd.f32 0.0, %v2687
        %v2689 = vpop.f32.mrf.mxu0
        %v2690 = vadd.f32 0.0, %v2689
        %2691 = vmatprep.mubr.f32.mxu0 %v1439
        %2692 = vmatmul.mubr.f32.gmra.mxu0 %v1438
        %v2693 = vpop.f32.mrf.mxu0
        %v2694 = vadd.f32 0.0, %v2693
        %v2695 = vpop.f32.mrf.mxu0
        %v2696 = vadd.f32 0.0, %v2695
        %2697 = vmatprep.mubr.f32.mxu0 %v1441
        %2698 = vmatmul.mubr.f32.gmra.mxu0 %v1440
        %v2699 = vpop.f32.mrf.mxu0
        %v2700 = vadd.f32 0.0, %v2699
        %v2701 = vpop.f32.mrf.mxu0
        %v2702 = vadd.f32 0.0, %v2701
        %2703 = vmatprep.mubr.f32.mxu0 %v1443
        %2704 = vmatmul.mubr.f32.gmra.mxu0 %v1442
        %v2705 = vpop.f32.mrf.mxu0
        %v2706 = vadd.f32 0.0, %v2705
        %v2707 = vpop.f32.mrf.mxu0
        %v2708 = vadd.f32 0.0, %v2707
        %2709 = vmatprep.mubr.f32.mxu0 %v1445
        %2710 = vmatmul.mubr.f32.gmra.mxu0 %v1444
        %v2711 = vpop.f32.mrf.mxu0
        %v2712 = vadd.f32 0.0, %v2711
        %v2713 = vpop.f32.mrf.mxu0
        %v2714 = vadd.f32 0.0, %v2713
        %2715 = vmatprep.mubr.f32.mxu0 %v1447
        %2716 = vmatmul.mubr.f32.gmra.mxu0 %v1446
        %v2717 = vpop.f32.mrf.mxu0
        %v2718 = vadd.f32 0.0, %v2717
        %v2719 = vpop.f32.mrf.mxu0
        %v2720 = vadd.f32 0.0, %v2719
        %2721 = vmatprep.mubr.f32.mxu0 %v1449
        %2722 = vmatmul.mubr.f32.gmra.mxu0 %v1448
        %v2723 = vpop.f32.mrf.mxu0
        %v2724 = vadd.f32 0.0, %v2723
        %v2725 = vpop.f32.mrf.mxu0
        %v2726 = vadd.f32 0.0, %v2725
        %2727 = vmatprep.mubr.f32.mxu0 %v1451
        %2728 = vmatmul.mubr.f32.gmra.mxu0 %v1450
        %v2729 = vpop.f32.mrf.mxu0
        %v2730 = vadd.f32 0.0, %v2729
        %v2731 = vpop.f32.mrf.mxu0
        %v2732 = vadd.f32 0.0, %v2731
        %2733 = vmatprep.mubr.f32.mxu0 %v1453
        %2734 = vmatmul.mubr.f32.gmra.mxu0 %v1452
        %v2735 = vpop.f32.mrf.mxu0
        %v2736 = vadd.f32 0.0, %v2735
        %v2737 = vpop.f32.mrf.mxu0
        %v2738 = vadd.f32 0.0, %v2737
        %2739 = vmatprep.mubr.f32.mxu0 %v1455
        %2740 = vmatmul.mubr.f32.gmra.mxu0 %v1454
        %v2741 = vpop.f32.mrf.mxu0
        %v2742 = vadd.f32 0.0, %v2741
        %v2743 = vpop.f32.mrf.mxu0
        %v2744 = vadd.f32 0.0, %v2743
        %2745 = vmatprep.mubr.f32.mxu0 %v1457
        %2746 = vmatmul.mubr.f32.gmra.mxu0 %v1456
        %v2747 = vpop.f32.mrf.mxu0
        %v2748 = vadd.f32 0.0, %v2747
        %v2749 = vpop.f32.mrf.mxu0
        %v2750 = vadd.f32 0.0, %v2749
        %2751 = vmatprep.mubr.f32.mxu0 %v1459
        %2752 = vmatmul.mubr.f32.gmra.mxu0 %v1458
        %v2753 = vpop.f32.mrf.mxu0
        %v2754 = vadd.f32 0.0, %v2753
        %v2755 = vpop.f32.mrf.mxu0
        %v2756 = vadd.f32 0.0, %v2755
        %2757 = vmatprep.mubr.f32.mxu0 %v1461
        %2758 = vmatmul.mubr.f32.gmra.mxu0 %v1460
        %v2759 = vpop.f32.mrf.mxu0
        %v2760 = vadd.f32 0.0, %v2759
        %v2761 = vpop.f32.mrf.mxu0
        %v2762 = vadd.f32 0.0, %v2761
        %2763 = vmatprep.mubr.f32.mxu0 %v1463
        %2764 = vmatmul.mubr.f32.gmra.mxu0 %v1462
        %v2765 = vpop.f32.mrf.mxu0
        %v2766 = vadd.f32 0.0, %v2765
        %v2767 = vpop.f32.mrf.mxu0
        %v2768 = vadd.f32 0.0, %v2767
        %2769 = vmatprep.mubr.f32.mxu0 %v1465
        %2770 = vmatmul.mubr.f32.gmra.mxu0 %v1464
        %v2771 = vpop.f32.mrf.mxu0
        %v2772 = vadd.f32 0.0, %v2771
        %v2773 = vpop.f32.mrf.mxu0
        %v2774 = vadd.f32 0.0, %v2773
        %2775 = vmatprep.mubr.f32.mxu0 %v1467
        %2776 = vmatmul.mubr.f32.gmra.mxu0 %v1466
        %v2777 = vpop.f32.mrf.mxu0
        %v2778 = vadd.f32 0.0, %v2777
        %v2779 = vpop.f32.mrf.mxu0
        %v2780 = vadd.f32 0.0, %v2779
        %2781 = vmatprep.mubr.f32.mxu0 %v1469
        %2782 = vmatmul.mubr.f32.gmra.mxu0 %v1468
        %v2783 = vpop.f32.mrf.mxu0
        %v2784 = vadd.f32 0.0, %v2783
        %v2785 = vpop.f32.mrf.mxu0
        %v2786 = vadd.f32 0.0, %v2785
        %2787 = vmatprep.mubr.f32.mxu0 %v1471
        %2788 = vmatmul.mubr.f32.gmra.mxu0 %v1470
        %v2789 = vpop.f32.mrf.mxu0
        %v2790 = vadd.f32 0.0, %v2789
        %v2791 = vpop.f32.mrf.mxu0
        %v2792 = vadd.f32 0.0, %v2791
        %2793 = vmatprep.mubr.f32.mxu0 %v1473
        %2794 = vmatmul.mubr.f32.gmra.mxu0 %v1472
        %v2795 = vpop.f32.mrf.mxu0
        %v2796 = vadd.f32 0.0, %v2795
        %v2797 = vpop.f32.mrf.mxu0
        %v2798 = vadd.f32 0.0, %v2797
        %2799 = vmatprep.mubr.f32.mxu0 %v1475
        %2800 = vmatmul.mubr.f32.gmra.mxu0 %v1474
        %v2801 = vpop.f32.mrf.mxu0
        %v2802 = vadd.f32 0.0, %v2801
        %v2803 = vpop.f32.mrf.mxu0
        %v2804 = vadd.f32 0.0, %v2803
        %2805 = vmatprep.mubr.f32.mxu0 %v1477
        %2806 = vmatmul.mubr.f32.gmra.mxu0 %v1476
        %v2807 = vpop.f32.mrf.mxu0
        %v2808 = vadd.f32 0.0, %v2807
        %v2809 = vpop.f32.mrf.mxu0
        %v2810 = vadd.f32 0.0, %v2809
        %2811 = vmatprep.mubr.f32.mxu0 %v1479
        %2812 = vmatmul.mubr.f32.gmra.mxu0 %v1478
        %v2813 = vpop.f32.mrf.mxu0
        %v2814 = vadd.f32 0.0, %v2813
        %v2815 = vpop.f32.mrf.mxu0
        %v2816 = vadd.f32 0.0, %v2815
        %2817 = vmatprep.mubr.f32.mxu0 %v1481
        %2818 = vmatmul.mubr.f32.gmra.mxu0 %v1480
        %v2819 = vpop.f32.mrf.mxu0
        %v2820 = vadd.f32 0.0, %v2819
        %v2821 = vpop.f32.mrf.mxu0
        %v2822 = vadd.f32 0.0, %v2821
        %2823 = vmatprep.mubr.f32.mxu0 %v1483
        %2824 = vmatmul.mubr.f32.gmra.mxu0 %v1482
        %v2825 = vpop.f32.mrf.mxu0
        %v2826 = vadd.f32 0.0, %v2825
        %v2827 = vpop.f32.mrf.mxu0
        %v2828 = vadd.f32 0.0, %v2827
        %2829 = vmatprep.mubr.f32.mxu0 %v1485
        %2830 = vmatmul.mubr.f32.gmra.mxu0 %v1484
        %v2831 = vpop.f32.mrf.mxu0
        %v2832 = vadd.f32 0.0, %v2831
        %v2833 = vpop.f32.mrf.mxu0
        %v2834 = vadd.f32 0.0, %v2833
        %2835 = vmatprep.mubr.f32.mxu0 %v1487
        %2836 = vmatmul.mubr.f32.gmra.mxu0 %v1486
        %v2837 = vpop.f32.mrf.mxu0
        %v2838 = vadd.f32 0.0, %v2837
        %v2839 = vpop.f32.mrf.mxu0
        %v2840 = vadd.f32 0.0, %v2839
        %2841 = vmatprep.mubr.f32.mxu0 %v1489
        %2842 = vmatmul.mubr.f32.gmra.mxu0 %v1488
        %v2843 = vpop.f32.mrf.mxu0
        %v2844 = vadd.f32 0.0, %v2843
        %v2845 = vpop.f32.mrf.mxu0
        %v2846 = vadd.f32 0.0, %v2845
        %2847 = vmatprep.mubr.f32.mxu0 %v1491
        %2848 = vmatmul.mubr.f32.gmra.mxu0 %v1490
        %v2849 = vpop.f32.mrf.mxu0
        %v2850 = vadd.f32 0.0, %v2849
        %v2851 = vpop.f32.mrf.mxu0
        %v2852 = vadd.f32 0.0, %v2851
        %2853 = vmatprep.mubr.f32.mxu0 %v1493
        %2854 = vmatmul.mubr.f32.gmra.mxu0 %v1492
        %v2855 = vpop.f32.mrf.mxu0
        %v2856 = vadd.f32 0.0, %v2855
        %v2857 = vpop.f32.mrf.mxu0
        %v2858 = vadd.f32 0.0, %v2857
        %2859 = vmatprep.mubr.f32.mxu0 %v1495
        %2860 = vmatmul.mubr.f32.gmra.mxu0 %v1494
        %v2861 = vpop.f32.mrf.mxu0
        %v2862 = vadd.f32 0.0, %v2861
        %v2863 = vpop.f32.mrf.mxu0
        %v2864 = vadd.f32 0.0, %v2863
        %2865 = vmatprep.mubr.f32.mxu0 %v1497
        %2866 = vmatmul.mubr.f32.gmra.mxu0 %v1496
        %v2867 = vpop.f32.mrf.mxu0
        %v2868 = vadd.f32 0.0, %v2867
        %v2869 = vpop.f32.mrf.mxu0
        %v2870 = vadd.f32 0.0, %v2869
        %2871 = vmatprep.mubr.f32.mxu0 %v1499
        %2872 = vmatmul.mubr.f32.gmra.mxu0 %v1498
        %v2873 = vpop.f32.mrf.mxu0
        %v2874 = vadd.f32 0.0, %v2873
        %v2875 = vpop.f32.mrf.mxu0
        %v2876 = vadd.f32 0.0, %v2875
        %2877 = vmatprep.mubr.f32.mxu0 %v1501
        %2878 = vmatmul.mubr.f32.gmra.mxu0 %v1500
        %v2879 = vpop.f32.mrf.mxu0
        %v2880 = vadd.f32 0.0, %v2879
        %v2881 = vpop.f32.mrf.mxu0
        %v2882 = vadd.f32 0.0, %v2881
        %2883 = vmatprep.mubr.f32.mxu0 %v1503
        %2884 = vmatmul.mubr.f32.gmra.mxu0 %v1502
        %v2885 = vpop.f32.mrf.mxu0
        %v2886 = vadd.f32 0.0, %v2885
        %v2887 = vpop.f32.mrf.mxu0
        %v2888 = vadd.f32 0.0, %v2887
        %2889 = vmatprep.mubr.f32.mxu0 %v1505
        %2890 = vmatmul.mubr.f32.gmra.mxu0 %v1504
        %v2891 = vpop.f32.mrf.mxu0
        %v2892 = vadd.f32 0.0, %v2891
        %v2893 = vpop.f32.mrf.mxu0
        %v2894 = vadd.f32 0.0, %v2893
        %2895 = vmatprep.mubr.f32.mxu0 %v1507
        %2896 = vmatmul.mubr.f32.gmra.mxu0 %v1506
        %v2897 = vpop.f32.mrf.mxu0
        %v2898 = vadd.f32 0.0, %v2897
        %v2899 = vpop.f32.mrf.mxu0
        %v2900 = vadd.f32 0.0, %v2899
        %2901 = vmatprep.mubr.f32.mxu0 %v1509
        %2902 = vmatmul.mubr.f32.gmra.mxu0 %v1508
        %v2903 = vpop.f32.mrf.mxu0
        %v2904 = vadd.f32 0.0, %v2903
        %v2905 = vpop.f32.mrf.mxu0
        %v2906 = vadd.f32 0.0, %v2905
        %2907 = vmatprep.mubr.f32.mxu0 %v1511
        %2908 = vmatmul.mubr.f32.gmra.mxu0 %v1510
        %v2909 = vpop.f32.mrf.mxu0
        %v2910 = vadd.f32 0.0, %v2909
        %v2911 = vpop.f32.mrf.mxu0
        %v2912 = vadd.f32 0.0, %v2911
        %2913 = vmatprep.mubr.f32.mxu0 %v1513
        %2914 = vmatmul.mubr.f32.gmra.mxu0 %v1512
        %v2915 = vpop.f32.mrf.mxu0
        %v2916 = vadd.f32 0.0, %v2915
        %v2917 = vpop.f32.mrf.mxu0
        %v2918 = vadd.f32 0.0, %v2917
        %2919 = vmatprep.mubr.f32.mxu0 %v1515
        %2920 = vmatmul.mubr.f32.gmra.mxu0 %v1514
        %v2921 = vpop.f32.mrf.mxu0
        %v2922 = vadd.f32 0.0, %v2921
        %v2923 = vpop.f32.mrf.mxu0
        %v2924 = vadd.f32 0.0, %v2923
        %2925 = vmatprep.mubr.f32.mxu0 %v1517
        %2926 = vmatmul.mubr.f32.gmra.mxu0 %v1516
        %v2927 = vpop.f32.mrf.mxu0
        %v2928 = vadd.f32 0.0, %v2927
        %v2929 = vpop.f32.mrf.mxu0
        %v2930 = vadd.f32 0.0, %v2929
        %2931 = vmatprep.mubr.f32.mxu0 %v1519
        %2932 = vmatmul.mubr.f32.gmra.mxu0 %v1518
        %v2933 = vpop.f32.mrf.mxu0
        %v2934 = vadd.f32 0.0, %v2933
        %v2935 = vpop.f32.mrf.mxu0
        %v2936 = vadd.f32 0.0, %v2935
        %2937 = vmatprep.mubr.f32.mxu0 %v1521
        %2938 = vmatmul.mubr.f32.gmra.mxu0 %v1520
        %v2939 = vpop.f32.mrf.mxu0
        %v2940 = vadd.f32 0.0, %v2939
        %v2941 = vpop.f32.mrf.mxu0
        %v2942 = vadd.f32 0.0, %v2941
        %2943 = vmatprep.mubr.f32.mxu0 %v1523
        %2944 = vmatmul.mubr.f32.gmra.mxu0 %v1522
        %v2945 = vpop.f32.mrf.mxu0
        %v2946 = vadd.f32 0.0, %v2945
        %v2947 = vpop.f32.mrf.mxu0
        %v2948 = vadd.f32 0.0, %v2947
        %2949 = vmatprep.mubr.f32.mxu0 %v1525
        %2950 = vmatmul.mubr.f32.gmra.mxu0 %v1524
        %v2951 = vpop.f32.mrf.mxu0
        %v2952 = vadd.f32 0.0, %v2951
        %v2953 = vpop.f32.mrf.mxu0
        %v2954 = vadd.f32 0.0, %v2953
        %2955 = vmatprep.mubr.f32.mxu0 %v1527
        %2956 = vmatmul.mubr.f32.gmra.mxu0 %v1526
        %v2957 = vpop.f32.mrf.mxu0
        %v2958 = vadd.f32 0.0, %v2957
        %v2959 = vpop.f32.mrf.mxu0
        %v2960 = vadd.f32 0.0, %v2959
        %2961 = vmatprep.mubr.f32.mxu0 %v1529
        %2962 = vmatmul.mubr.f32.gmra.mxu0 %v1528
        %v2963 = vpop.f32.mrf.mxu0
        %v2964 = vadd.f32 0.0, %v2963
        %v2965 = vpop.f32.mrf.mxu0
        %v2966 = vadd.f32 0.0, %v2965
        %2967 = vmatprep.mubr.f32.mxu0 %v1531
        %2968 = vmatmul.mubr.f32.gmra.mxu0 %v1530
        %v2969 = vpop.f32.mrf.mxu0
        %v2970 = vadd.f32 0.0, %v2969
        %v2971 = vpop.f32.mrf.mxu0
        %v2972 = vadd.f32 0.0, %v2971
        %2973 = vmatprep.mubr.f32.mxu0 %v1533
        %2974 = vmatmul.mubr.f32.gmra.mxu0 %v1532
        %v2975 = vpop.f32.mrf.mxu0
        %v2976 = vadd.f32 0.0, %v2975
        %v2977 = vpop.f32.mrf.mxu0
        %v2978 = vadd.f32 0.0, %v2977
        %2979 = vmatprep.mubr.f32.mxu0 %v1535
        %2980 = vmatmul.mubr.f32.gmra.mxu0 %v1534
        %v2981 = vpop.f32.mrf.mxu0
        %v2982 = vadd.f32 0.0, %v2981
        %v2983 = vpop.f32.mrf.mxu0
        %v2984 = vadd.f32 0.0, %v2983
        %2985 = vmatprep.mubr.f32.mxu0 %v1537
        %2986 = vmatmul.mubr.f32.gmra.mxu0 %v1536
        %v2987 = vpop.f32.mrf.mxu0
        %v2988 = vadd.f32 0.0, %v2987
        %v2989 = vpop.f32.mrf.mxu0
        %v2990 = vadd.f32 0.0, %v2989
        %2991 = vmatprep.mubr.f32.mxu0 %v1539
        %2992 = vmatmul.mubr.f32.gmra.mxu0 %v1538
        %v2993 = vpop.f32.mrf.mxu0
        %v2994 = vadd.f32 0.0, %v2993
        %v2995 = vpop.f32.mrf.mxu0
        %v2996 = vadd.f32 0.0, %v2995
        %2997 = vmatprep.mubr.f32.mxu0 %v1541
        %2998 = vmatmul.mubr.f32.gmra.mxu0 %v1540
        %v2999 = vpop.f32.mrf.mxu0
        %v3000 = vadd.f32 0.0, %v2999
        %v3001 = vpop.f32.mrf.mxu0
        %v3002 = vadd.f32 0.0, %v3001
        %3003 = vmatprep.mubr.f32.mxu0 %v1543
        %3004 = vmatmul.mubr.f32.gmra.mxu0 %v1542
        %v3005 = vpop.f32.mrf.mxu0
        %v3006 = vadd.f32 0.0, %v3005
        %v3007 = vpop.f32.mrf.mxu0
        %v3008 = vadd.f32 0.0, %v3007
        %3009 = vmatprep.mubr.f32.mxu0 %v1545
        %3010 = vmatmul.mubr.f32.gmra.mxu0 %v1544
        %v3011 = vpop.f32.mrf.mxu0
        %v3012 = vadd.f32 0.0, %v3011
        %v3013 = vpop.f32.mrf.mxu0
        %v3014 = vadd.f32 0.0, %v3013
        %3015 = vmatprep.mubr.f32.mxu0 %v1547
        %3016 = vmatmul.mubr.f32.gmra.mxu0 %v1546
        %v3017 = vpop.f32.mrf.mxu0
        %v3018 = vadd.f32 0.0, %v3017
        %v3019 = vpop.f32.mrf.mxu0
        %v3020 = vadd.f32 0.0, %v3019
        %3021 = vdwg.mxu0
        %3022 = vmatprep.subr.mxu0 %v1707
        %3023 = vmatpush1.xpose.msra.mxu0 %v1706
        %3024 = vmatprep.subr.mxu0 %v1705
        %3025 = vmatpush1.xpose.msra.mxu0 %v1704
        %3026 = vmatprep.subr.mxu0 %v1703
        %3027 = vmatpush1.xpose.msra.mxu0 %v1702
        %3028 = vmatprep.subr.mxu0 %v1701
        %3029 = vmatpush1.xpose.msra.mxu0 %v1700
        %3030 = vmatprep.subr.mxu0 %v1699
        %3031 = vmatpush1.xpose.msra.mxu0 %v1698
        %3032 = vmatprep.subr.mxu0 %v1697
        %3033 = vmatpush1.xpose.msra.mxu0 %v1696
        %3034 = vmatprep.subr.mxu0 %v1695
        %3035 = vmatpush1.xpose.msra.mxu0 %v1694
        %3036 = vmatprep.subr.mxu0 %v1693
        %3037 = vmatpush1.xpose.msra.mxu0 %v1692
        %3038 = vmatprep.subr.mxu0 %v1691
        %3039 = vmatpush1.xpose.msra.mxu0 %v1690
        %3040 = vmatprep.subr.mxu0 %v1689
        %3041 = vmatpush1.xpose.msra.mxu0 %v1688
        %3042 = vmatprep.subr.mxu0 %v1687
        %3043 = vmatpush1.xpose.msra.mxu0 %v1686
        %3044 = vmatprep.subr.mxu0 %v1685
        %3045 = vmatpush1.xpose.msra.mxu0 %v1684
        %3046 = vmatprep.subr.mxu0 %v1683
        %3047 = vmatpush1.xpose.msra.mxu0 %v1682
        %3048 = vmatprep.subr.mxu0 %v1681
        %3049 = vmatpush1.xpose.msra.mxu0 %v1680
        %3050 = vmatprep.subr.mxu0 %v1679
        %3051 = vmatpush1.xpose.msra.mxu0 %v1678
        %3052 = vmatprep.subr.mxu0 %v1677
        %3053 = vmatpush1.xpose.msra.mxu0 %v1676
        %3054 = vmatprep.subr.mxu0 %v1739
        %3055 = vmatpush2.xpose.msra.mxu0 %v1738
        %3056 = vmatprep.subr.mxu0 %v1737
        %3057 = vmatpush2.xpose.msra.mxu0 %v1736
        %3058 = vmatprep.subr.mxu0 %v1735
        %3059 = vmatpush2.xpose.msra.mxu0 %v1734
        %3060 = vmatprep.subr.mxu0 %v1733
        %3061 = vmatpush2.xpose.msra.mxu0 %v1732
        %3062 = vmatprep.subr.mxu0 %v1731
        %3063 = vmatpush2.xpose.msra.mxu0 %v1730
        %3064 = vmatprep.subr.mxu0 %v1729
        %3065 = vmatpush2.xpose.msra.mxu0 %v1728
        %3066 = vmatprep.subr.mxu0 %v1727
        %3067 = vmatpush2.xpose.msra.mxu0 %v1726
        %3068 = vmatprep.subr.mxu0 %v1725
        %3069 = vmatpush2.xpose.msra.mxu0 %v1724
        %3070 = vmatprep.subr.mxu0 %v1723
        %3071 = vmatpush2.xpose.msra.mxu0 %v1722
        %3072 = vmatprep.subr.mxu0 %v1721
        %3073 = vmatpush2.xpose.msra.mxu0 %v1720
        %3074 = vmatprep.subr.mxu0 %v1719
        %3075 = vmatpush2.xpose.msra.mxu0 %v1718
        %3076 = vmatprep.subr.mxu0 %v1717
        %3077 = vmatpush2.xpose.msra.mxu0 %v1716
        %3078 = vmatprep.subr.mxu0 %v1715
        %3079 = vmatpush2.xpose.msra.mxu0 %v1714
        %3080 = vmatprep.subr.mxu0 %v1713
        %3081 = vmatpush2.xpose.msra.mxu0 %v1712
        %3082 = vmatprep.subr.mxu0 %v1711
        %3083 = vmatpush2.xpose.msra.mxu0 %v1710
        %3084 = vmatprep.subr.mxu0 %v1709
        %3085 = vmatpush2.xpose.msra.mxu0 %v1708
        %3086 = vmatprep.mubr.f32.mxu0 %v1357
        %3087 = vmatmul.mubr.f32.gmra.mxu0 %v1356
        %v3088 = vpop.f32.mrf.mxu0
        %v3089 = vadd.f32 0.0, %v3088
        %v3090 = vpop.f32.mrf.mxu0
        %v3091 = vadd.f32 0.0, %v3090
        %3092 = vmatprep.mubr.f32.mxu0 %v1359
        %3093 = vmatmul.mubr.f32.gmra.mxu0 %v1358
        %v3094 = vpop.f32.mrf.mxu0
        %v3095 = vadd.f32 0.0, %v3094
        %v3096 = vpop.f32.mrf.mxu0
        %v3097 = vadd.f32 0.0, %v3096
        %3098 = vmatprep.mubr.f32.mxu0 %v1361
        %3099 = vmatmul.mubr.f32.gmra.mxu0 %v1360
        %v3100 = vpop.f32.mrf.mxu0
        %v3101 = vadd.f32 0.0, %v3100
        %v3102 = vpop.f32.mrf.mxu0
        %v3103 = vadd.f32 0.0, %v3102
        %3104 = vmatprep.mubr.f32.mxu0 %v1363
        %3105 = vmatmul.mubr.f32.gmra.mxu0 %v1362
        %v3106 = vpop.f32.mrf.mxu0
        %v3107 = vadd.f32 0.0, %v3106
        %v3108 = vpop.f32.mrf.mxu0
        %v3109 = vadd.f32 0.0, %v3108
        %3110 = vmatprep.mubr.f32.mxu0 %v1365
        %3111 = vmatmul.mubr.f32.gmra.mxu0 %v1364
        %v3112 = vpop.f32.mrf.mxu0
        %v3113 = vadd.f32 0.0, %v3112
        %v3114 = vpop.f32.mrf.mxu0
        %v3115 = vadd.f32 0.0, %v3114
        %3116 = vmatprep.mubr.f32.mxu0 %v1367
        %3117 = vmatmul.mubr.f32.gmra.mxu0 %v1366
        %v3118 = vpop.f32.mrf.mxu0
        %v3119 = vadd.f32 0.0, %v3118
        %v3120 = vpop.f32.mrf.mxu0
        %v3121 = vadd.f32 0.0, %v3120
        %3122 = vmatprep.mubr.f32.mxu0 %v1369
        %3123 = vmatmul.mubr.f32.gmra.mxu0 %v1368
        %v3124 = vpop.f32.mrf.mxu0
        %v3125 = vadd.f32 0.0, %v3124
        %v3126 = vpop.f32.mrf.mxu0
        %v3127 = vadd.f32 0.0, %v3126
        %3128 = vmatprep.mubr.f32.mxu0 %v1371
        %3129 = vmatmul.mubr.f32.gmra.mxu0 %v1370
        %v3130 = vpop.f32.mrf.mxu0
        %v3131 = vadd.f32 0.0, %v3130
        %v3132 = vpop.f32.mrf.mxu0
        %v3133 = vadd.f32 0.0, %v3132
        %3134 = vmatprep.mubr.f32.mxu0 %v1373
        %3135 = vmatmul.mubr.f32.gmra.mxu0 %v1372
        %v3136 = vpop.f32.mrf.mxu0
        %v3137 = vadd.f32 0.0, %v3136
        %v3138 = vpop.f32.mrf.mxu0
        %v3139 = vadd.f32 0.0, %v3138
        %3140 = vmatprep.mubr.f32.mxu0 %v1375
        %3141 = vmatmul.mubr.f32.gmra.mxu0 %v1374
        %v3142 = vpop.f32.mrf.mxu0
        %v3143 = vadd.f32 0.0, %v3142
        %v3144 = vpop.f32.mrf.mxu0
        %v3145 = vadd.f32 0.0, %v3144
        %3146 = vmatprep.mubr.f32.mxu0 %v1377
        %3147 = vmatmul.mubr.f32.gmra.mxu0 %v1376
        %v3148 = vpop.f32.mrf.mxu0
        %v3149 = vadd.f32 0.0, %v3148
        %v3150 = vpop.f32.mrf.mxu0
        %v3151 = vadd.f32 0.0, %v3150
        %3152 = vmatprep.mubr.f32.mxu0 %v1379
        %3153 = vmatmul.mubr.f32.gmra.mxu0 %v1378
        %v3154 = vpop.f32.mrf.mxu0
        %v3155 = vadd.f32 0.0, %v3154
        %v3156 = vpop.f32.mrf.mxu0
        %v3157 = vadd.f32 0.0, %v3156
        %3158 = vmatprep.mubr.f32.mxu0 %v1381
        %3159 = vmatmul.mubr.f32.gmra.mxu0 %v1380
        %v3160 = vpop.f32.mrf.mxu0
        %v3161 = vadd.f32 0.0, %v3160
        %v3162 = vpop.f32.mrf.mxu0
        %v3163 = vadd.f32 0.0, %v3162
        %3164 = vmatprep.mubr.f32.mxu0 %v1383
        %3165 = vmatmul.mubr.f32.gmra.mxu0 %v1382
        %v3166 = vpop.f32.mrf.mxu0
        %v3167 = vadd.f32 0.0, %v3166
        %v3168 = vpop.f32.mrf.mxu0
        %v3169 = vadd.f32 0.0, %v3168
        %3170 = vmatprep.mubr.f32.mxu0 %v1385
        %3171 = vmatmul.mubr.f32.gmra.mxu0 %v1384
        %v3172 = vpop.f32.mrf.mxu0
        %v3173 = vadd.f32 0.0, %v3172
        %v3174 = vpop.f32.mrf.mxu0
        %v3175 = vadd.f32 0.0, %v3174
        %3176 = vmatprep.mubr.f32.mxu0 %v1387
        %3177 = vmatmul.mubr.f32.gmra.mxu0 %v1386
        %v3178 = vpop.f32.mrf.mxu0
        %v3179 = vadd.f32 0.0, %v3178
        %v3180 = vpop.f32.mrf.mxu0
        %v3181 = vadd.f32 0.0, %v3180
        %3182 = vmatprep.mubr.f32.mxu0 %v1389
        %3183 = vmatmul.mubr.f32.gmra.mxu0 %v1388
        %v3184 = vpop.f32.mrf.mxu0
        %v3185 = vadd.f32 0.0, %v3184
        %v3186 = vpop.f32.mrf.mxu0
        %v3187 = vadd.f32 0.0, %v3186
        %3188 = vmatprep.mubr.f32.mxu0 %v1391
        %3189 = vmatmul.mubr.f32.gmra.mxu0 %v1390
        %v3190 = vpop.f32.mrf.mxu0
        %v3191 = vadd.f32 0.0, %v3190
        %v3192 = vpop.f32.mrf.mxu0
        %v3193 = vadd.f32 0.0, %v3192
        %3194 = vmatprep.mubr.f32.mxu0 %v1393
        %3195 = vmatmul.mubr.f32.gmra.mxu0 %v1392
        %v3196 = vpop.f32.mrf.mxu0
        %v3197 = vadd.f32 0.0, %v3196
        %v3198 = vpop.f32.mrf.mxu0
        %v3199 = vadd.f32 0.0, %v3198
        %3200 = vmatprep.mubr.f32.mxu0 %v1395
        %3201 = vmatmul.mubr.f32.gmra.mxu0 %v1394
        %v3202 = vpop.f32.mrf.mxu0
        %v3203 = vadd.f32 0.0, %v3202
        %v3204 = vpop.f32.mrf.mxu0
        %v3205 = vadd.f32 0.0, %v3204
        %3206 = vmatprep.mubr.f32.mxu0 %v1397
        %3207 = vmatmul.mubr.f32.gmra.mxu0 %v1396
        %v3208 = vpop.f32.mrf.mxu0
        %v3209 = vadd.f32 0.0, %v3208
        %v3210 = vpop.f32.mrf.mxu0
        %v3211 = vadd.f32 0.0, %v3210
        %3212 = vmatprep.mubr.f32.mxu0 %v1399
        %3213 = vmatmul.mubr.f32.gmra.mxu0 %v1398
        %v3214 = vpop.f32.mrf.mxu0
        %v3215 = vadd.f32 0.0, %v3214
        %v3216 = vpop.f32.mrf.mxu0
        %v3217 = vadd.f32 0.0, %v3216
        %3218 = vmatprep.mubr.f32.mxu0 %v1401
        %3219 = vmatmul.mubr.f32.gmra.mxu0 %v1400
        %v3220 = vpop.f32.mrf.mxu0
        %v3221 = vadd.f32 0.0, %v3220
        %v3222 = vpop.f32.mrf.mxu0
        %v3223 = vadd.f32 0.0, %v3222
        %3224 = vmatprep.mubr.f32.mxu0 %v1403
        %3225 = vmatmul.mubr.f32.gmra.mxu0 %v1402
        %v3226 = vpop.f32.mrf.mxu0
        %v3227 = vadd.f32 0.0, %v3226
        %v3228 = vpop.f32.mrf.mxu0
        %v3229 = vadd.f32 0.0, %v3228
        %3230 = vmatprep.mubr.f32.mxu0 %v1405
        %3231 = vmatmul.mubr.f32.gmra.mxu0 %v1404
        %v3232 = vpop.f32.mrf.mxu0
        %v3233 = vadd.f32 0.0, %v3232
        %v3234 = vpop.f32.mrf.mxu0
        %v3235 = vadd.f32 0.0, %v3234
        %3236 = vmatprep.mubr.f32.mxu0 %v1407
        %3237 = vmatmul.mubr.f32.gmra.mxu0 %v1406
        %v3238 = vpop.f32.mrf.mxu0
        %v3239 = vadd.f32 0.0, %v3238
        %v3240 = vpop.f32.mrf.mxu0
        %v3241 = vadd.f32 0.0, %v3240
        %3242 = vmatprep.mubr.f32.mxu0 %v1409
        %3243 = vmatmul.mubr.f32.gmra.mxu0 %v1408
        %v3244 = vpop.f32.mrf.mxu0
        %v3245 = vadd.f32 0.0, %v3244
        %v3246 = vpop.f32.mrf.mxu0
        %v3247 = vadd.f32 0.0, %v3246
        %3248 = vmatprep.mubr.f32.mxu0 %v1411
        %3249 = vmatmul.mubr.f32.gmra.mxu0 %v1410
        %v3250 = vpop.f32.mrf.mxu0
        %v3251 = vadd.f32 0.0, %v3250
        %v3252 = vpop.f32.mrf.mxu0
        %v3253 = vadd.f32 0.0, %v3252
        %3254 = vmatprep.mubr.f32.mxu0 %v1413
        %3255 = vmatmul.mubr.f32.gmra.mxu0 %v1412
        %v3256 = vpop.f32.mrf.mxu0
        %v3257 = vadd.f32 0.0, %v3256
        %v3258 = vpop.f32.mrf.mxu0
        %v3259 = vadd.f32 0.0, %v3258
        %3260 = vmatprep.mubr.f32.mxu0 %v1415
        %3261 = vmatmul.mubr.f32.gmra.mxu0 %v1414
        %v3262 = vpop.f32.mrf.mxu0
        %v3263 = vadd.f32 0.0, %v3262
        %v3264 = vpop.f32.mrf.mxu0
        %v3265 = vadd.f32 0.0, %v3264
        %3266 = vmatprep.mubr.f32.mxu0 %v1417
        %3267 = vmatmul.mubr.f32.gmra.mxu0 %v1416
        %v3268 = vpop.f32.mrf.mxu0
        %v3269 = vadd.f32 0.0, %v3268
        %v3270 = vpop.f32.mrf.mxu0
        %v3271 = vadd.f32 0.0, %v3270
        %3272 = vmatprep.mubr.f32.mxu0 %v1419
        %3273 = vmatmul.mubr.f32.gmra.mxu0 %v1418
        %v3274 = vpop.f32.mrf.mxu0
        %v3275 = vadd.f32 0.0, %v3274
        %v3276 = vpop.f32.mrf.mxu0
        %v3277 = vadd.f32 0.0, %v3276
        %3278 = vmatprep.mubr.f32.mxu0 %v1421
        %3279 = vmatmul.mubr.f32.gmra.mxu0 %v1420
        %v3280 = vpop.f32.mrf.mxu0
        %v3281 = vadd.f32 0.0, %v3280
        %v3282 = vpop.f32.mrf.mxu0
        %v3283 = vadd.f32 0.0, %v3282
        %3284 = vmatprep.mubr.f32.mxu0 %v1423
        %3285 = vmatmul.mubr.f32.gmra.mxu0 %v1422
        %v3286 = vpop.f32.mrf.mxu0
        %v3287 = vadd.f32 0.0, %v3286
        %v3288 = vpop.f32.mrf.mxu0
        %v3289 = vadd.f32 0.0, %v3288
        %3290 = vmatprep.mubr.f32.mxu0 %v1425
        %3291 = vmatmul.mubr.f32.gmra.mxu0 %v1424
        %v3292 = vpop.f32.mrf.mxu0
        %v3293 = vadd.f32 0.0, %v3292
        %v3294 = vpop.f32.mrf.mxu0
        %v3295 = vadd.f32 0.0, %v3294
        %3296 = vmatprep.mubr.f32.mxu0 %v1427
        %3297 = vmatmul.mubr.f32.gmra.mxu0 %v1426
        %v3298 = vpop.f32.mrf.mxu0
        %v3299 = vadd.f32 0.0, %v3298
        %v3300 = vpop.f32.mrf.mxu0
        %v3301 = vadd.f32 0.0, %v3300
        %3302 = vmatprep.mubr.f32.mxu0 %v1429
        %3303 = vmatmul.mubr.f32.gmra.mxu0 %v1428
        %v3304 = vpop.f32.mrf.mxu0
        %v3305 = vadd.f32 0.0, %v3304
        %v3306 = vpop.f32.mrf.mxu0
        %v3307 = vadd.f32 0.0, %v3306
        %3308 = vmatprep.mubr.f32.mxu0 %v1431
        %3309 = vmatmul.mubr.f32.gmra.mxu0 %v1430
        %v3310 = vpop.f32.mrf.mxu0
        %v3311 = vadd.f32 0.0, %v3310
        %v3312 = vpop.f32.mrf.mxu0
        %v3313 = vadd.f32 0.0, %v3312
        %3314 = vmatprep.mubr.f32.mxu0 %v1433
        %3315 = vmatmul.mubr.f32.gmra.mxu0 %v1432
        %v3316 = vpop.f32.mrf.mxu0
        %v3317 = vadd.f32 0.0, %v3316
        %v3318 = vpop.f32.mrf.mxu0
        %v3319 = vadd.f32 0.0, %v3318
        %3320 = vmatprep.mubr.f32.mxu0 %v1435
        %3321 = vmatmul.mubr.f32.gmra.mxu0 %v1434
        %v3322 = vpop.f32.mrf.mxu0
        %v3323 = vadd.f32 0.0, %v3322
        %v3324 = vpop.f32.mrf.mxu0
        %v3325 = vadd.f32 0.0, %v3324
        %3326 = vmatprep.mubr.f32.mxu0 %v1437
        %3327 = vmatmul.mubr.f32.gmra.mxu0 %v1436
        %v3328 = vpop.f32.mrf.mxu0
        %v3329 = vadd.f32 0.0, %v3328
        %v3330 = vpop.f32.mrf.mxu0
        %v3331 = vadd.f32 0.0, %v3330
        %3332 = vmatprep.mubr.f32.mxu0 %v1439
        %3333 = vmatmul.mubr.f32.gmra.mxu0 %v1438
        %v3334 = vpop.f32.mrf.mxu0
        %v3335 = vadd.f32 0.0, %v3334
        %v3336 = vpop.f32.mrf.mxu0
        %v3337 = vadd.f32 0.0, %v3336
        %3338 = vmatprep.mubr.f32.mxu0 %v1441
        %3339 = vmatmul.mubr.f32.gmra.mxu0 %v1440
        %v3340 = vpop.f32.mrf.mxu0
        %v3341 = vadd.f32 0.0, %v3340
        %v3342 = vpop.f32.mrf.mxu0
        %v3343 = vadd.f32 0.0, %v3342
        %3344 = vmatprep.mubr.f32.mxu0 %v1443
        %3345 = vmatmul.mubr.f32.gmra.mxu0 %v1442
        %v3346 = vpop.f32.mrf.mxu0
        %v3347 = vadd.f32 0.0, %v3346
        %v3348 = vpop.f32.mrf.mxu0
        %v3349 = vadd.f32 0.0, %v3348
        %3350 = vmatprep.mubr.f32.mxu0 %v1445
        %3351 = vmatmul.mubr.f32.gmra.mxu0 %v1444
        %v3352 = vpop.f32.mrf.mxu0
        %v3353 = vadd.f32 0.0, %v3352
        %v3354 = vpop.f32.mrf.mxu0
        %v3355 = vadd.f32 0.0, %v3354
        %3356 = vmatprep.mubr.f32.mxu0 %v1447
        %3357 = vmatmul.mubr.f32.gmra.mxu0 %v1446
        %v3358 = vpop.f32.mrf.mxu0
        %v3359 = vadd.f32 0.0, %v3358
        %v3360 = vpop.f32.mrf.mxu0
        %v3361 = vadd.f32 0.0, %v3360
        %3362 = vmatprep.mubr.f32.mxu0 %v1449
        %3363 = vmatmul.mubr.f32.gmra.mxu0 %v1448
        %v3364 = vpop.f32.mrf.mxu0
        %v3365 = vadd.f32 0.0, %v3364
        %v3366 = vpop.f32.mrf.mxu0
        %v3367 = vadd.f32 0.0, %v3366
        %3368 = vmatprep.mubr.f32.mxu0 %v1451
        %3369 = vmatmul.mubr.f32.gmra.mxu0 %v1450
        %v3370 = vpop.f32.mrf.mxu0
        %v3371 = vadd.f32 0.0, %v3370
        %v3372 = vpop.f32.mrf.mxu0
        %v3373 = vadd.f32 0.0, %v3372
        %3374 = vmatprep.mubr.f32.mxu0 %v1453
        %3375 = vmatmul.mubr.f32.gmra.mxu0 %v1452
        %v3376 = vpop.f32.mrf.mxu0
        %v3377 = vadd.f32 0.0, %v3376
        %v3378 = vpop.f32.mrf.mxu0
        %v3379 = vadd.f32 0.0, %v3378
        %3380 = vmatprep.mubr.f32.mxu0 %v1455
        %3381 = vmatmul.mubr.f32.gmra.mxu0 %v1454
        %v3382 = vpop.f32.mrf.mxu0
        %v3383 = vadd.f32 0.0, %v3382
        %v3384 = vpop.f32.mrf.mxu0
        %v3385 = vadd.f32 0.0, %v3384
        %3386 = vmatprep.mubr.f32.mxu0 %v1457
        %3387 = vmatmul.mubr.f32.gmra.mxu0 %v1456
        %v3388 = vpop.f32.mrf.mxu0
        %v3389 = vadd.f32 0.0, %v3388
        %v3390 = vpop.f32.mrf.mxu0
        %v3391 = vadd.f32 0.0, %v3390
        %3392 = vmatprep.mubr.f32.mxu0 %v1459
        %3393 = vmatmul.mubr.f32.gmra.mxu0 %v1458
        %v3394 = vpop.f32.mrf.mxu0
        %v3395 = vadd.f32 0.0, %v3394
        %v3396 = vpop.f32.mrf.mxu0
        %v3397 = vadd.f32 0.0, %v3396
        %3398 = vmatprep.mubr.f32.mxu0 %v1461
        %3399 = vmatmul.mubr.f32.gmra.mxu0 %v1460
        %v3400 = vpop.f32.mrf.mxu0
        %v3401 = vadd.f32 0.0, %v3400
        %v3402 = vpop.f32.mrf.mxu0
        %v3403 = vadd.f32 0.0, %v3402
        %3404 = vmatprep.mubr.f32.mxu0 %v1463
        %3405 = vmatmul.mubr.f32.gmra.mxu0 %v1462
        %v3406 = vpop.f32.mrf.mxu0
        %v3407 = vadd.f32 0.0, %v3406
        %v3408 = vpop.f32.mrf.mxu0
        %v3409 = vadd.f32 0.0, %v3408
        %3410 = vmatprep.mubr.f32.mxu0 %v1465
        %3411 = vmatmul.mubr.f32.gmra.mxu0 %v1464
        %v3412 = vpop.f32.mrf.mxu0
        %v3413 = vadd.f32 0.0, %v3412
        %v3414 = vpop.f32.mrf.mxu0
        %v3415 = vadd.f32 0.0, %v3414
        %3416 = vmatprep.mubr.f32.mxu0 %v1467
        %3417 = vmatmul.mubr.f32.gmra.mxu0 %v1466
        %v3418 = vpop.f32.mrf.mxu0
        %v3419 = vadd.f32 0.0, %v3418
        %v3420 = vpop.f32.mrf.mxu0
        %v3421 = vadd.f32 0.0, %v3420
        %3422 = vmatprep.mubr.f32.mxu0 %v1469
        %3423 = vmatmul.mubr.f32.gmra.mxu0 %v1468
        %v3424 = vpop.f32.mrf.mxu0
        %v3425 = vadd.f32 0.0, %v3424
        %v3426 = vpop.f32.mrf.mxu0
        %v3427 = vadd.f32 0.0, %v3426
        %3428 = vmatprep.mubr.f32.mxu0 %v1471
        %3429 = vmatmul.mubr.f32.gmra.mxu0 %v1470
        %v3430 = vpop.f32.mrf.mxu0
        %v3431 = vadd.f32 0.0, %v3430
        %v3432 = vpop.f32.mrf.mxu0
        %v3433 = vadd.f32 0.0, %v3432
        %3434 = vmatprep.mubr.f32.mxu0 %v1473
        %3435 = vmatmul.mubr.f32.gmra.mxu0 %v1472
        %v3436 = vpop.f32.mrf.mxu0
        %v3437 = vadd.f32 0.0, %v3436
        %v3438 = vpop.f32.mrf.mxu0
        %v3439 = vadd.f32 0.0, %v3438
        %3440 = vmatprep.mubr.f32.mxu0 %v1475
        %3441 = vmatmul.mubr.f32.gmra.mxu0 %v1474
        %v3442 = vpop.f32.mrf.mxu0
        %v3443 = vadd.f32 0.0, %v3442
        %v3444 = vpop.f32.mrf.mxu0
        %v3445 = vadd.f32 0.0, %v3444
        %3446 = vmatprep.mubr.f32.mxu0 %v1477
        %3447 = vmatmul.mubr.f32.gmra.mxu0 %v1476
        %v3448 = vpop.f32.mrf.mxu0
        %v3449 = vadd.f32 0.0, %v3448
        %v3450 = vpop.f32.mrf.mxu0
        %v3451 = vadd.f32 0.0, %v3450
        %3452 = vmatprep.mubr.f32.mxu0 %v1479
        %3453 = vmatmul.mubr.f32.gmra.mxu0 %v1478
        %v3454 = vpop.f32.mrf.mxu0
        %v3455 = vadd.f32 0.0, %v3454
        %v3456 = vpop.f32.mrf.mxu0
        %v3457 = vadd.f32 0.0, %v3456
        %3458 = vmatprep.mubr.f32.mxu0 %v1481
        %3459 = vmatmul.mubr.f32.gmra.mxu0 %v1480
        %v3460 = vpop.f32.mrf.mxu0
        %v3461 = vadd.f32 0.0, %v3460
        %v3462 = vpop.f32.mrf.mxu0
        %v3463 = vadd.f32 0.0, %v3462
        %3464 = vmatprep.mubr.f32.mxu0 %v1483
        %3465 = vmatmul.mubr.f32.gmra.mxu0 %v1482
        %v3466 = vpop.f32.mrf.mxu0
        %v3467 = vadd.f32 0.0, %v3466
        %v3468 = vpop.f32.mrf.mxu0
        %v3469 = vadd.f32 0.0, %v3468
        %3470 = vmatprep.mubr.f32.mxu0 %v1485
        %3471 = vmatmul.mubr.f32.gmra.mxu0 %v1484
        %v3472 = vpop.f32.mrf.mxu0
        %v3473 = vadd.f32 0.0, %v3472
        %v3474 = vpop.f32.mrf.mxu0
        %v3475 = vadd.f32 0.0, %v3474
        %3476 = vmatprep.mubr.f32.mxu0 %v1487
        %3477 = vmatmul.mubr.f32.gmra.mxu0 %v1486
        %v3478 = vpop.f32.mrf.mxu0
        %v3479 = vadd.f32 0.0, %v3478
        %v3480 = vpop.f32.mrf.mxu0
        %v3481 = vadd.f32 0.0, %v3480
        %3482 = vmatprep.mubr.f32.mxu0 %v1489
        %3483 = vmatmul.mubr.f32.gmra.mxu0 %v1488
        %v3484 = vpop.f32.mrf.mxu0
        %v3485 = vadd.f32 0.0, %v3484
        %v3486 = vpop.f32.mrf.mxu0
        %v3487 = vadd.f32 0.0, %v3486
        %3488 = vmatprep.mubr.f32.mxu0 %v1491
        %3489 = vmatmul.mubr.f32.gmra.mxu0 %v1490
        %v3490 = vpop.f32.mrf.mxu0
        %v3491 = vadd.f32 0.0, %v3490
        %v3492 = vpop.f32.mrf.mxu0
        %v3493 = vadd.f32 0.0, %v3492
        %3494 = vmatprep.mubr.f32.mxu0 %v1493
        %3495 = vmatmul.mubr.f32.gmra.mxu0 %v1492
        %v3496 = vpop.f32.mrf.mxu0
        %v3497 = vadd.f32 0.0, %v3496
        %v3498 = vpop.f32.mrf.mxu0
        %v3499 = vadd.f32 0.0, %v3498
        %3500 = vmatprep.mubr.f32.mxu0 %v1495
        %3501 = vmatmul.mubr.f32.gmra.mxu0 %v1494
        %v3502 = vpop.f32.mrf.mxu0
        %v3503 = vadd.f32 0.0, %v3502
        %v3504 = vpop.f32.mrf.mxu0
        %v3505 = vadd.f32 0.0, %v3504
        %3506 = vmatprep.mubr.f32.mxu0 %v1497
        %3507 = vmatmul.mubr.f32.gmra.mxu0 %v1496
        %v3508 = vpop.f32.mrf.mxu0
        %v3509 = vadd.f32 0.0, %v3508
        %v3510 = vpop.f32.mrf.mxu0
        %v3511 = vadd.f32 0.0, %v3510
        %3512 = vmatprep.mubr.f32.mxu0 %v1499
        %3513 = vmatmul.mubr.f32.gmra.mxu0 %v1498
        %v3514 = vpop.f32.mrf.mxu0
        %v3515 = vadd.f32 0.0, %v3514
        %v3516 = vpop.f32.mrf.mxu0
        %v3517 = vadd.f32 0.0, %v3516
        %3518 = vmatprep.mubr.f32.mxu0 %v1501
        %3519 = vmatmul.mubr.f32.gmra.mxu0 %v1500
        %v3520 = vpop.f32.mrf.mxu0
        %v3521 = vadd.f32 0.0, %v3520
        %v3522 = vpop.f32.mrf.mxu0
        %v3523 = vadd.f32 0.0, %v3522
        %3524 = vmatprep.mubr.f32.mxu0 %v1503
        %3525 = vmatmul.mubr.f32.gmra.mxu0 %v1502
        %v3526 = vpop.f32.mrf.mxu0
        %v3527 = vadd.f32 0.0, %v3526
        %v3528 = vpop.f32.mrf.mxu0
        %v3529 = vadd.f32 0.0, %v3528
        %3530 = vmatprep.mubr.f32.mxu0 %v1505
        %3531 = vmatmul.mubr.f32.gmra.mxu0 %v1504
        %v3532 = vpop.f32.mrf.mxu0
        %v3533 = vadd.f32 0.0, %v3532
        %v3534 = vpop.f32.mrf.mxu0
        %v3535 = vadd.f32 0.0, %v3534
        %3536 = vmatprep.mubr.f32.mxu0 %v1507
        %3537 = vmatmul.mubr.f32.gmra.mxu0 %v1506
        %v3538 = vpop.f32.mrf.mxu0
        %v3539 = vadd.f32 0.0, %v3538
        %v3540 = vpop.f32.mrf.mxu0
        %v3541 = vadd.f32 0.0, %v3540
        %3542 = vmatprep.mubr.f32.mxu0 %v1509
        %3543 = vmatmul.mubr.f32.gmra.mxu0 %v1508
        %v3544 = vpop.f32.mrf.mxu0
        %v3545 = vadd.f32 0.0, %v3544
        %v3546 = vpop.f32.mrf.mxu0
        %v3547 = vadd.f32 0.0, %v3546
        %3548 = vmatprep.mubr.f32.mxu0 %v1511
        %3549 = vmatmul.mubr.f32.gmra.mxu0 %v1510
        %v3550 = vpop.f32.mrf.mxu0
        %v3551 = vadd.f32 0.0, %v3550
        %v3552 = vpop.f32.mrf.mxu0
        %v3553 = vadd.f32 0.0, %v3552
        %3554 = vmatprep.mubr.f32.mxu0 %v1513
        %3555 = vmatmul.mubr.f32.gmra.mxu0 %v1512
        %v3556 = vpop.f32.mrf.mxu0
        %v3557 = vadd.f32 0.0, %v3556
        %v3558 = vpop.f32.mrf.mxu0
        %v3559 = vadd.f32 0.0, %v3558
        %3560 = vmatprep.mubr.f32.mxu0 %v1515
        %3561 = vmatmul.mubr.f32.gmra.mxu0 %v1514
        %v3562 = vpop.f32.mrf.mxu0
        %v3563 = vadd.f32 0.0, %v3562
        %v3564 = vpop.f32.mrf.mxu0
        %v3565 = vadd.f32 0.0, %v3564
        %3566 = vmatprep.mubr.f32.mxu0 %v1517
        %3567 = vmatmul.mubr.f32.gmra.mxu0 %v1516
        %v3568 = vpop.f32.mrf.mxu0
        %v3569 = vadd.f32 0.0, %v3568
        %v3570 = vpop.f32.mrf.mxu0
        %v3571 = vadd.f32 0.0, %v3570
        %3572 = vmatprep.mubr.f32.mxu0 %v1519
        %3573 = vmatmul.mubr.f32.gmra.mxu0 %v1518
        %v3574 = vpop.f32.mrf.mxu0
        %v3575 = vadd.f32 0.0, %v3574
        %v3576 = vpop.f32.mrf.mxu0
        %v3577 = vadd.f32 0.0, %v3576
        %3578 = vmatprep.mubr.f32.mxu0 %v1521
        %3579 = vmatmul.mubr.f32.gmra.mxu0 %v1520
        %v3580 = vpop.f32.mrf.mxu0
        %v3581 = vadd.f32 0.0, %v3580
        %v3582 = vpop.f32.mrf.mxu0
        %v3583 = vadd.f32 0.0, %v3582
        %3584 = vmatprep.mubr.f32.mxu0 %v1523
        %3585 = vmatmul.mubr.f32.gmra.mxu0 %v1522
        %v3586 = vpop.f32.mrf.mxu0
        %v3587 = vadd.f32 0.0, %v3586
        %v3588 = vpop.f32.mrf.mxu0
        %v3589 = vadd.f32 0.0, %v3588
        %3590 = vmatprep.mubr.f32.mxu0 %v1525
        %3591 = vmatmul.mubr.f32.gmra.mxu0 %v1524
        %v3592 = vpop.f32.mrf.mxu0
        %v3593 = vadd.f32 0.0, %v3592
        %v3594 = vpop.f32.mrf.mxu0
        %v3595 = vadd.f32 0.0, %v3594
        %3596 = vmatprep.mubr.f32.mxu0 %v1527
        %3597 = vmatmul.mubr.f32.gmra.mxu0 %v1526
        %v3598 = vpop.f32.mrf.mxu0
        %v3599 = vadd.f32 0.0, %v3598
        %v3600 = vpop.f32.mrf.mxu0
        %v3601 = vadd.f32 0.0, %v3600
        %3602 = vmatprep.mubr.f32.mxu0 %v1529
        %3603 = vmatmul.mubr.f32.gmra.mxu0 %v1528
        %v3604 = vpop.f32.mrf.mxu0
        %v3605 = vadd.f32 0.0, %v3604
        %v3606 = vpop.f32.mrf.mxu0
        %v3607 = vadd.f32 0.0, %v3606
        %3608 = vmatprep.mubr.f32.mxu0 %v1531
        %3609 = vmatmul.mubr.f32.gmra.mxu0 %v1530
        %v3610 = vpop.f32.mrf.mxu0
        %v3611 = vadd.f32 0.0, %v3610
        %v3612 = vpop.f32.mrf.mxu0
        %v3613 = vadd.f32 0.0, %v3612
        %3614 = vmatprep.mubr.f32.mxu0 %v1533
        %3615 = vmatmul.mubr.f32.gmra.mxu0 %v1532
        %v3616 = vpop.f32.mrf.mxu0
        %v3617 = vadd.f32 0.0, %v3616
        %v3618 = vpop.f32.mrf.mxu0
        %v3619 = vadd.f32 0.0, %v3618
        %3620 = vmatprep.mubr.f32.mxu0 %v1535
        %3621 = vmatmul.mubr.f32.gmra.mxu0 %v1534
        %v3622 = vpop.f32.mrf.mxu0
        %v3623 = vadd.f32 0.0, %v3622
        %v3624 = vpop.f32.mrf.mxu0
        %v3625 = vadd.f32 0.0, %v3624
        %3626 = vmatprep.mubr.f32.mxu0 %v1537
        %3627 = vmatmul.mubr.f32.gmra.mxu0 %v1536
        %v3628 = vpop.f32.mrf.mxu0
        %v3629 = vadd.f32 0.0, %v3628
        %v3630 = vpop.f32.mrf.mxu0
        %v3631 = vadd.f32 0.0, %v3630
        %3632 = vmatprep.mubr.f32.mxu0 %v1539
        %3633 = vmatmul.mubr.f32.gmra.mxu0 %v1538
        %v3634 = vpop.f32.mrf.mxu0
        %v3635 = vadd.f32 0.0, %v3634
        %v3636 = vpop.f32.mrf.mxu0
        %v3637 = vadd.f32 0.0, %v3636
        %3638 = vmatprep.mubr.f32.mxu0 %v1541
        %3639 = vmatmul.mubr.f32.gmra.mxu0 %v1540
        %v3640 = vpop.f32.mrf.mxu0
        %v3641 = vadd.f32 0.0, %v3640
        %v3642 = vpop.f32.mrf.mxu0
        %v3643 = vadd.f32 0.0, %v3642
        %3644 = vmatprep.mubr.f32.mxu0 %v1543
        %3645 = vmatmul.mubr.f32.gmra.mxu0 %v1542
        %v3646 = vpop.f32.mrf.mxu0
        %v3647 = vadd.f32 0.0, %v3646
        %v3648 = vpop.f32.mrf.mxu0
        %v3649 = vadd.f32 0.0, %v3648
        %3650 = vmatprep.mubr.f32.mxu0 %v1545
        %3651 = vmatmul.mubr.f32.gmra.mxu0 %v1544
        %v3652 = vpop.f32.mrf.mxu0
        %v3653 = vadd.f32 0.0, %v3652
        %v3654 = vpop.f32.mrf.mxu0
        %v3655 = vadd.f32 0.0, %v3654
        %3656 = vmatprep.mubr.f32.mxu0 %v1547
        %3657 = vmatmul.mubr.f32.gmra.mxu0 %v1546
        %v3658 = vpop.f32.mrf.mxu0
        %v3659 = vadd.f32 0.0, %v3658
        %v3660 = vpop.f32.mrf.mxu0
        %v3661 = vadd.f32 0.0, %v3660
        %3662 = vdwg.mxu0
        %3663 = vst [vmem:[%s258] sm:$0xff] %v1807
        %3664 = vst [vmem:[%s258 + $0x8] sm:$0xff] %v1809
        %3665 = vst [vmem:[%s258 + $0x10] sm:$0xff] %v2448
        %3666 = vst [vmem:[%s258 + $0x18] sm:$0xff] %v2450
        %3667 = vst [vmem:[%s258 + $0x20] sm:$0xff] %v3089
        %3668 = vst [vmem:[%s258 + $0x28] sm:$0xff] %v3091
        %3669 = vst [vmem:[%s258 + $0x30] sm:$0xff] %v1813
        %3670 = vst [vmem:[%s258 + $0x38] sm:$0xff] %v1815
        %3671 = vst [vmem:[%s258 + $0x40] sm:$0xff] %v2454
        %3672 = vst [vmem:[%s258 + $0x48] sm:$0xff] %v2456
        %3673 = vst [vmem:[%s258 + $0x50] sm:$0xff] %v3095
        %3674 = vst [vmem:[%s258 + $0x58] sm:$0xff] %v3097
        %3675 = vst [vmem:[%s258 + $0x60] sm:$0xff] %v1819
        %3676 = vst [vmem:[%s258 + $0x68] sm:$0xff] %v1821
        %3677 = vst [vmem:[%s258 + $0x70] sm:$0xff] %v2460
        %3678 = vst [vmem:[%s258 + $0x78] sm:$0xff] %v2462
        %3679 = vst [vmem:[%s258 + $0x80] sm:$0xff] %v3101
        %3680 = vst [vmem:[%s258 + $0x88] sm:$0xff] %v3103
        %3681 = vst [vmem:[%s258 + $0x90] sm:$0xff] %v1825
        %3682 = vst [vmem:[%s258 + $0x98] sm:$0xff] %v1827
        %3683 = vst [vmem:[%s258 + $0xa0] sm:$0xff] %v2466
        %3684 = vst [vmem:[%s258 + $0xa8] sm:$0xff] %v2468
        %3685 = vst [vmem:[%s258 + $0xb0] sm:$0xff] %v3107
        %3686 = vst [vmem:[%s258 + $0xb8] sm:$0xff] %v3109
        %3687 = vst [vmem:[%s258 + $0xc0] sm:$0xff] %v1831
        %3688 = vst [vmem:[%s258 + $0xc8] sm:$0xff] %v1833
        %3689 = vst [vmem:[%s258 + $0xd0] sm:$0xff] %v2472
        %3690 = vst [vmem:[%s258 + $0xd8] sm:$0xff] %v2474
        %3691 = vst [vmem:[%s258 + $0xe0] sm:$0xff] %v3113
        %3692 = vst [vmem:[%s258 + $0xe8] sm:$0xff] %v3115
        %3693 = vst [vmem:[%s258 + $0xf0] sm:$0xff] %v1837
        %3694 = vst [vmem:[%s258 + $0xf8] sm:$0xff] %v1839
        %3695 = vst [vmem:[%s258 + $0x100] sm:$0xff] %v2478
        %3696 = vst [vmem:[%s258 + $0x108] sm:$0xff] %v2480
        %3697 = vst [vmem:[%s258 + $0x110] sm:$0xff] %v3119
        %3698 = vst [vmem:[%s258 + $0x118] sm:$0xff] %v3121
        %3699 = vst [vmem:[%s258 + $0x120] sm:$0xff] %v1843
        %3700 = vst [vmem:[%s258 + $0x128] sm:$0xff] %v1845
        %3701 = vst [vmem:[%s258 + $0x130] sm:$0xff] %v2484
        %3702 = vst [vmem:[%s258 + $0x138] sm:$0xff] %v2486
        %3703 = vst [vmem:[%s258 + $0x140] sm:$0xff] %v3125
        %3704 = vst [vmem:[%s258 + $0x148] sm:$0xff] %v3127
        %3705 = vst [vmem:[%s258 + $0x150] sm:$0xff] %v1849
        %3706 = vst [vmem:[%s258 + $0x158] sm:$0xff] %v1851
        %3707 = vst [vmem:[%s258 + $0x160] sm:$0xff] %v2490
        %3708 = vst [vmem:[%s258 + $0x168] sm:$0xff] %v2492
        %3709 = vst [vmem:[%s258 + $0x170] sm:$0xff] %v3131
        %3710 = vst [vmem:[%s258 + $0x178] sm:$0xff] %v3133
        %3711 = vst [vmem:[%s258 + $0x180] sm:$0xff] %v1855
        %3712 = vst [vmem:[%s258 + $0x188] sm:$0xff] %v1857
        %3713 = vst [vmem:[%s258 + $0x190] sm:$0xff] %v2496
        %3714 = vst [vmem:[%s258 + $0x198] sm:$0xff] %v2498
        %3715 = vst [vmem:[%s258 + $0x1a0] sm:$0xff] %v3137
        %3716 = vst [vmem:[%s258 + $0x1a8] sm:$0xff] %v3139
        %3717 = vst [vmem:[%s258 + $0x1b0] sm:$0xff] %v1861
        %3718 = vst [vmem:[%s258 + $0x1b8] sm:$0xff] %v1863
        %3719 = vst [vmem:[%s258 + $0x1c0] sm:$0xff] %v2502
        %3720 = vst [vmem:[%s258 + $0x1c8] sm:$0xff] %v2504
        %3721 = vst [vmem:[%s258 + $0x1d0] sm:$0xff] %v3143
        %3722 = vst [vmem:[%s258 + $0x1d8] sm:$0xff] %v3145
        %3723 = vst [vmem:[%s258 + $0x1e0] sm:$0xff] %v1867
        %3724 = vst [vmem:[%s258 + $0x1e8] sm:$0xff] %v1869
        %3725 = vst [vmem:[%s258 + $0x1f0] sm:$0xff] %v2508
        %3726 = vst [vmem:[%s258 + $0x1f8] sm:$0xff] %v2510
        %3727 = vst [vmem:[%s258 + $0x200] sm:$0xff] %v3149
        %3728 = vst [vmem:[%s258 + $0x208] sm:$0xff] %v3151
        %3729 = vst [vmem:[%s258 + $0x210] sm:$0xff] %v1873
        %3730 = vst [vmem:[%s258 + $0x218] sm:$0xff] %v1875
        %3731 = vst [vmem:[%s258 + $0x220] sm:$0xff] %v2514
        %3732 = vst [vmem:[%s258 + $0x228] sm:$0xff] %v2516
        %3733 = vst [vmem:[%s258 + $0x230] sm:$0xff] %v3155
        %3734 = vst [vmem:[%s258 + $0x238] sm:$0xff] %v3157
        %3735 = vst [vmem:[%s258 + $0x240] sm:$0xff] %v1879
        %3736 = vst [vmem:[%s258 + $0x248] sm:$0xff] %v1881
        %3737 = vst [vmem:[%s258 + $0x250] sm:$0xff] %v2520
        %3738 = vst [vmem:[%s258 + $0x258] sm:$0xff] %v2522
        %3739 = vst [vmem:[%s258 + $0x260] sm:$0xff] %v3161
        %3740 = vst [vmem:[%s258 + $0x268] sm:$0xff] %v3163
        %3741 = vst [vmem:[%s258 + $0x270] sm:$0xff] %v1885
        %3742 = vst [vmem:[%s258 + $0x278] sm:$0xff] %v1887
        %3743 = vst [vmem:[%s258 + $0x280] sm:$0xff] %v2526
        %3744 = vst [vmem:[%s258 + $0x288] sm:$0xff] %v2528
        %3745 = vst [vmem:[%s258 + $0x290] sm:$0xff] %v3167
        %3746 = vst [vmem:[%s258 + $0x298] sm:$0xff] %v3169
        %3747 = vst [vmem:[%s258 + $0x2a0] sm:$0xff] %v1891
        %3748 = vst [vmem:[%s258 + $0x2a8] sm:$0xff] %v1893
        %3749 = vst [vmem:[%s258 + $0x2b0] sm:$0xff] %v2532
        %3750 = vst [vmem:[%s258 + $0x2b8] sm:$0xff] %v2534
        %3751 = vst [vmem:[%s258 + $0x2c0] sm:$0xff] %v3173
        %3752 = vst [vmem:[%s258 + $0x2c8] sm:$0xff] %v3175
        %3753 = vst [vmem:[%s258 + $0x2d0] sm:$0xff] %v1897
        %3754 = vst [vmem:[%s258 + $0x2d8] sm:$0xff] %v1899
        %3755 = vst [vmem:[%s258 + $0x2e0] sm:$0xff] %v2538
        %3756 = vst [vmem:[%s258 + $0x2e8] sm:$0xff] %v2540
        %3757 = vst [vmem:[%s258 + $0x2f0] sm:$0xff] %v3179
        %3758 = vst [vmem:[%s258 + $0x2f8] sm:$0xff] %v3181
        %3759 = vst [vmem:[%s258 + $0x300] sm:$0xff] %v1903
        %3760 = vst [vmem:[%s258 + $0x308] sm:$0xff] %v1905
        %3761 = vst [vmem:[%s258 + $0x310] sm:$0xff] %v2544
        %3762 = vst [vmem:[%s258 + $0x318] sm:$0xff] %v2546
        %3763 = vst [vmem:[%s258 + $0x320] sm:$0xff] %v3185
        %3764 = vst [vmem:[%s258 + $0x328] sm:$0xff] %v3187
        %3765 = vst [vmem:[%s258 + $0x330] sm:$0xff] %v1909
        %3766 = vst [vmem:[%s258 + $0x338] sm:$0xff] %v1911
        %3767 = vst [vmem:[%s258 + $0x340] sm:$0xff] %v2550
        %3768 = vst [vmem:[%s258 + $0x348] sm:$0xff] %v2552
        %3769 = vst [vmem:[%s258 + $0x350] sm:$0xff] %v3191
        %3770 = vst [vmem:[%s258 + $0x358] sm:$0xff] %v3193
        %3771 = vst [vmem:[%s258 + $0x360] sm:$0xff] %v1915
        %3772 = vst [vmem:[%s258 + $0x368] sm:$0xff] %v1917
        %3773 = vst [vmem:[%s258 + $0x370] sm:$0xff] %v2556
        %3774 = vst [vmem:[%s258 + $0x378] sm:$0xff] %v2558
        %3775 = vst [vmem:[%s258 + $0x380] sm:$0xff] %v3197
        %3776 = vst [vmem:[%s258 + $0x388] sm:$0xff] %v3199
        %3777 = vst [vmem:[%s258 + $0x390] sm:$0xff] %v1921
        %3778 = vst [vmem:[%s258 + $0x398] sm:$0xff] %v1923
        %3779 = vst [vmem:[%s258 + $0x3a0] sm:$0xff] %v2562
        %3780 = vst [vmem:[%s258 + $0x3a8] sm:$0xff] %v2564
        %3781 = vst [vmem:[%s258 + $0x3b0] sm:$0xff] %v3203
        %3782 = vst [vmem:[%s258 + $0x3b8] sm:$0xff] %v3205
        %3783 = vst [vmem:[%s258 + $0x3c0] sm:$0xff] %v1927
        %3784 = vst [vmem:[%s258 + $0x3c8] sm:$0xff] %v1929
        %3785 = vst [vmem:[%s258 + $0x3d0] sm:$0xff] %v2568
        %3786 = vst [vmem:[%s258 + $0x3d8] sm:$0xff] %v2570
        %3787 = vst [vmem:[%s258 + $0x3e0] sm:$0xff] %v3209
        %3788 = vst [vmem:[%s258 + $0x3e8] sm:$0xff] %v3211
        %3789 = vst [vmem:[%s258 + $0x3f0] sm:$0xff] %v1933
        %3790 = vst [vmem:[%s258 + $0x3f8] sm:$0xff] %v1935
        %3791 = vst [vmem:[%s258 + $0x400] sm:$0xff] %v2574
        %3792 = vst [vmem:[%s258 + $0x408] sm:$0xff] %v2576
        %3793 = vst [vmem:[%s258 + $0x410] sm:$0xff] %v3215
        %3794 = vst [vmem:[%s258 + $0x418] sm:$0xff] %v3217
        %3795 = vst [vmem:[%s258 + $0x420] sm:$0xff] %v1939
        %3796 = vst [vmem:[%s258 + $0x428] sm:$0xff] %v1941
        %3797 = vst [vmem:[%s258 + $0x430] sm:$0xff] %v2580
        %3798 = vst [vmem:[%s258 + $0x438] sm:$0xff] %v2582
        %3799 = vst [vmem:[%s258 + $0x440] sm:$0xff] %v3221
        %3800 = vst [vmem:[%s258 + $0x448] sm:$0xff] %v3223
        %3801 = vst [vmem:[%s258 + $0x450] sm:$0xff] %v1945
        %3802 = vst [vmem:[%s258 + $0x458] sm:$0xff] %v1947
        %3803 = vst [vmem:[%s258 + $0x460] sm:$0xff] %v2586
        %3804 = vst [vmem:[%s258 + $0x468] sm:$0xff] %v2588
        %3805 = vst [vmem:[%s258 + $0x470] sm:$0xff] %v3227
        %3806 = vst [vmem:[%s258 + $0x478] sm:$0xff] %v3229
        %3807 = vst [vmem:[%s258 + $0x480] sm:$0xff] %v1951
        %3808 = vst [vmem:[%s258 + $0x488] sm:$0xff] %v1953
        %3809 = vst [vmem:[%s258 + $0x490] sm:$0xff] %v2592
        %3810 = vst [vmem:[%s258 + $0x498] sm:$0xff] %v2594
        %3811 = vst [vmem:[%s258 + $0x4a0] sm:$0xff] %v3233
        %3812 = vst [vmem:[%s258 + $0x4a8] sm:$0xff] %v3235
        %3813 = vst [vmem:[%s258 + $0x4b0] sm:$0xff] %v1957
        %3814 = vst [vmem:[%s258 + $0x4b8] sm:$0xff] %v1959
        %3815 = vst [vmem:[%s258 + $0x4c0] sm:$0xff] %v2598
        %3816 = vst [vmem:[%s258 + $0x4c8] sm:$0xff] %v2600
        %3817 = vst [vmem:[%s258 + $0x4d0] sm:$0xff] %v3239
        %3818 = vst [vmem:[%s258 + $0x4d8] sm:$0xff] %v3241
        %3819 = vst [vmem:[%s258 + $0x4e0] sm:$0xff] %v1963
        %3820 = vst [vmem:[%s258 + $0x4e8] sm:$0xff] %v1965
        %3821 = vst [vmem:[%s258 + $0x4f0] sm:$0xff] %v2604
        %3822 = vst [vmem:[%s258 + $0x4f8] sm:$0xff] %v2606
        %3823 = vst [vmem:[%s258 + $0x500] sm:$0xff] %v3245
        %3824 = vst [vmem:[%s258 + $0x508] sm:$0xff] %v3247
        %3825 = vst [vmem:[%s258 + $0x510] sm:$0xff] %v1969
        %3826 = vst [vmem:[%s258 + $0x518] sm:$0xff] %v1971
        %3827 = vst [vmem:[%s258 + $0x520] sm:$0xff] %v2610
        %3828 = vst [vmem:[%s258 + $0x528] sm:$0xff] %v2612
        %3829 = vst [vmem:[%s258 + $0x530] sm:$0xff] %v3251
        %3830 = vst [vmem:[%s258 + $0x538] sm:$0xff] %v3253
        %3831 = vst [vmem:[%s258 + $0x540] sm:$0xff] %v1975
        %3832 = vst [vmem:[%s258 + $0x548] sm:$0xff] %v1977
        %3833 = vst [vmem:[%s258 + $0x550] sm:$0xff] %v2616
        %3834 = vst [vmem:[%s258 + $0x558] sm:$0xff] %v2618
        %3835 = vst [vmem:[%s258 + $0x560] sm:$0xff] %v3257
        %3836 = vst [vmem:[%s258 + $0x568] sm:$0xff] %v3259
        %3837 = vst [vmem:[%s258 + $0x570] sm:$0xff] %v1981
        %3838 = vst [vmem:[%s258 + $0x578] sm:$0xff] %v1983
        %3839 = vst [vmem:[%s258 + $0x580] sm:$0xff] %v2622
        %3840 = vst [vmem:[%s258 + $0x588] sm:$0xff] %v2624
        %3841 = vst [vmem:[%s258 + $0x590] sm:$0xff] %v3263
        %3842 = vst [vmem:[%s258 + $0x598] sm:$0xff] %v3265
        %3843 = vst [vmem:[%s258 + $0x5a0] sm:$0xff] %v1987
        %3844 = vst [vmem:[%s258 + $0x5a8] sm:$0xff] %v1989
        %3845 = vst [vmem:[%s258 + $0x5b0] sm:$0xff] %v2628
        %3846 = vst [vmem:[%s258 + $0x5b8] sm:$0xff] %v2630
        %3847 = vst [vmem:[%s258 + $0x5c0] sm:$0xff] %v3269
        %3848 = vst [vmem:[%s258 + $0x5c8] sm:$0xff] %v3271
        %3849 = vst [vmem:[%s258 + $0x5d0] sm:$0xff] %v1993
        %3850 = vst [vmem:[%s258 + $0x5d8] sm:$0xff] %v1995
        %3851 = vst [vmem:[%s258 + $0x5e0] sm:$0xff] %v2634
        %3852 = vst [vmem:[%s258 + $0x5e8] sm:$0xff] %v2636
        %3853 = vst [vmem:[%s258 + $0x5f0] sm:$0xff] %v3275
        %3854 = vst [vmem:[%s258 + $0x5f8] sm:$0xff] %v3277
        %3855 = vst [vmem:[%s258 + $0x600] sm:$0xff] %v1999
        %3856 = vst [vmem:[%s258 + $0x608] sm:$0xff] %v2001
        %3857 = vst [vmem:[%s258 + $0x610] sm:$0xff] %v2640
        %3858 = vst [vmem:[%s258 + $0x618] sm:$0xff] %v2642
        %3859 = vst [vmem:[%s258 + $0x620] sm:$0xff] %v3281
        %3860 = vst [vmem:[%s258 + $0x628] sm:$0xff] %v3283
        %3861 = vst [vmem:[%s258 + $0x630] sm:$0xff] %v2005
        %3862 = vst [vmem:[%s258 + $0x638] sm:$0xff] %v2007
        %3863 = vst [vmem:[%s258 + $0x640] sm:$0xff] %v2646
        %3864 = vst [vmem:[%s258 + $0x648] sm:$0xff] %v2648
        %3865 = vst [vmem:[%s258 + $0x650] sm:$0xff] %v3287
        %3866 = vst [vmem:[%s258 + $0x658] sm:$0xff] %v3289
        %3867 = vst [vmem:[%s258 + $0x660] sm:$0xff] %v2011
        %3868 = vst [vmem:[%s258 + $0x668] sm:$0xff] %v2013
        %3869 = vst [vmem:[%s258 + $0x670] sm:$0xff] %v2652
        %3870 = vst [vmem:[%s258 + $0x678] sm:$0xff] %v2654
        %3871 = vst [vmem:[%s258 + $0x680] sm:$0xff] %v3293
        %3872 = vst [vmem:[%s258 + $0x688] sm:$0xff] %v3295
        %3873 = vst [vmem:[%s258 + $0x690] sm:$0xff] %v2017
        %3874 = vst [vmem:[%s258 + $0x698] sm:$0xff] %v2019
        %3875 = vst [vmem:[%s258 + $0x6a0] sm:$0xff] %v2658
        %3876 = vst [vmem:[%s258 + $0x6a8] sm:$0xff] %v2660
        %3877 = vst [vmem:[%s258 + $0x6b0] sm:$0xff] %v3299
        %3878 = vst [vmem:[%s258 + $0x6b8] sm:$0xff] %v3301
        %3879 = vst [vmem:[%s258 + $0x6c0] sm:$0xff] %v2023
        %3880 = vst [vmem:[%s258 + $0x6c8] sm:$0xff] %v2025
        %3881 = vst [vmem:[%s258 + $0x6d0] sm:$0xff] %v2664
        %3882 = vst [vmem:[%s258 + $0x6d8] sm:$0xff] %v2666
        %3883 = vst [vmem:[%s258 + $0x6e0] sm:$0xff] %v3305
        %3884 = vst [vmem:[%s258 + $0x6e8] sm:$0xff] %v3307
        %3885 = vst [vmem:[%s258 + $0x6f0] sm:$0xff] %v2029
        %3886 = vst [vmem:[%s258 + $0x6f8] sm:$0xff] %v2031
        %3887 = vst [vmem:[%s258 + $0x700] sm:$0xff] %v2670
        %3888 = vst [vmem:[%s258 + $0x708] sm:$0xff] %v2672
        %3889 = vst [vmem:[%s258 + $0x710] sm:$0xff] %v3311
        %3890 = vst [vmem:[%s258 + $0x718] sm:$0xff] %v3313
        %3891 = vst [vmem:[%s258 + $0x720] sm:$0xff] %v2035
        %3892 = vst [vmem:[%s258 + $0x728] sm:$0xff] %v2037
        %3893 = vst [vmem:[%s258 + $0x730] sm:$0xff] %v2676
        %3894 = vst [vmem:[%s258 + $0x738] sm:$0xff] %v2678
        %3895 = vst [vmem:[%s258 + $0x740] sm:$0xff] %v3317
        %3896 = vst [vmem:[%s258 + $0x748] sm:$0xff] %v3319
        %3897 = vst [vmem:[%s258 + $0x750] sm:$0xff] %v2041
        %3898 = vst [vmem:[%s258 + $0x758] sm:$0xff] %v2043
        %3899 = vst [vmem:[%s258 + $0x760] sm:$0xff] %v2682
        %3900 = vst [vmem:[%s258 + $0x768] sm:$0xff] %v2684
        %3901 = vst [vmem:[%s258 + $0x770] sm:$0xff] %v3323
        %3902 = vst [vmem:[%s258 + $0x778] sm:$0xff] %v3325
        %3903 = vst [vmem:[%s258 + $0x780] sm:$0xff] %v2047
        %3904 = vst [vmem:[%s258 + $0x788] sm:$0xff] %v2049
        %3905 = vst [vmem:[%s258 + $0x790] sm:$0xff] %v2688
        %3906 = vst [vmem:[%s258 + $0x798] sm:$0xff] %v2690
        %3907 = vst [vmem:[%s258 + $0x7a0] sm:$0xff] %v3329
        %3908 = vst [vmem:[%s258 + $0x7a8] sm:$0xff] %v3331
        %3909 = vst [vmem:[%s258 + $0x7b0] sm:$0xff] %v2053
        %3910 = vst [vmem:[%s258 + $0x7b8] sm:$0xff] %v2055
        %3911 = vst [vmem:[%s258 + $0x7c0] sm:$0xff] %v2694
        %3912 = vst [vmem:[%s258 + $0x7c8] sm:$0xff] %v2696
        %3913 = vst [vmem:[%s258 + $0x7d0] sm:$0xff] %v3335
        %3914 = vst [vmem:[%s258 + $0x7d8] sm:$0xff] %v3337
        %3915 = vst [vmem:[%s258 + $0x7e0] sm:$0xff] %v2059
        %3916 = vst [vmem:[%s258 + $0x7e8] sm:$0xff] %v2061
        %3917 = vst [vmem:[%s258 + $0x7f0] sm:$0xff] %v2700
        %3918 = vst [vmem:[%s258 + $0x7f8] sm:$0xff] %v2702
        %3919 = vst [vmem:[%s258 + $0x800] sm:$0xff] %v3341
        %3920 = vst [vmem:[%s258 + $0x808] sm:$0xff] %v3343
        %3921 = vst [vmem:[%s258 + $0x810] sm:$0xff] %v2065
        %3922 = vst [vmem:[%s258 + $0x818] sm:$0xff] %v2067
        %3923 = vst [vmem:[%s258 + $0x820] sm:$0xff] %v2706
        %3924 = vst [vmem:[%s258 + $0x828] sm:$0xff] %v2708
        %3925 = vst [vmem:[%s258 + $0x830] sm:$0xff] %v3347
        %3926 = vst [vmem:[%s258 + $0x838] sm:$0xff] %v3349
        %3927 = vst [vmem:[%s258 + $0x840] sm:$0xff] %v2071
        %3928 = vst [vmem:[%s258 + $0x848] sm:$0xff] %v2073
        %3929 = vst [vmem:[%s258 + $0x850] sm:$0xff] %v2712
        %3930 = vst [vmem:[%s258 + $0x858] sm:$0xff] %v2714
        %3931 = vst [vmem:[%s258 + $0x860] sm:$0xff] %v3353
        %3932 = vst [vmem:[%s258 + $0x868] sm:$0xff] %v3355
        %3933 = vst [vmem:[%s258 + $0x870] sm:$0xff] %v2077
        %3934 = vst [vmem:[%s258 + $0x878] sm:$0xff] %v2079
        %3935 = vst [vmem:[%s258 + $0x880] sm:$0xff] %v2718
        %3936 = vst [vmem:[%s258 + $0x888] sm:$0xff] %v2720
        %3937 = vst [vmem:[%s258 + $0x890] sm:$0xff] %v3359
        %3938 = vst [vmem:[%s258 + $0x898] sm:$0xff] %v3361
        %3939 = vst [vmem:[%s258 + $0x8a0] sm:$0xff] %v2083
        %3940 = vst [vmem:[%s258 + $0x8a8] sm:$0xff] %v2085
        %3941 = vst [vmem:[%s258 + $0x8b0] sm:$0xff] %v2724
        %3942 = vst [vmem:[%s258 + $0x8b8] sm:$0xff] %v2726
        %3943 = vst [vmem:[%s258 + $0x8c0] sm:$0xff] %v3365
        %3944 = vst [vmem:[%s258 + $0x8c8] sm:$0xff] %v3367
        %3945 = vst [vmem:[%s258 + $0x8d0] sm:$0xff] %v2089
        %3946 = vst [vmem:[%s258 + $0x8d8] sm:$0xff] %v2091
        %3947 = vst [vmem:[%s258 + $0x8e0] sm:$0xff] %v2730
        %3948 = vst [vmem:[%s258 + $0x8e8] sm:$0xff] %v2732
        %3949 = vst [vmem:[%s258 + $0x8f0] sm:$0xff] %v3371
        %3950 = vst [vmem:[%s258 + $0x8f8] sm:$0xff] %v3373
        %3951 = vst [vmem:[%s258 + $0x900] sm:$0xff] %v2095
        %3952 = vst [vmem:[%s258 + $0x908] sm:$0xff] %v2097
        %3953 = vst [vmem:[%s258 + $0x910] sm:$0xff] %v2736
        %3954 = vst [vmem:[%s258 + $0x918] sm:$0xff] %v2738
        %3955 = vst [vmem:[%s258 + $0x920] sm:$0xff] %v3377
        %3956 = vst [vmem:[%s258 + $0x928] sm:$0xff] %v3379
        %3957 = vst [vmem:[%s258 + $0x930] sm:$0xff] %v2101
        %3958 = vst [vmem:[%s258 + $0x938] sm:$0xff] %v2103
        %3959 = vst [vmem:[%s258 + $0x940] sm:$0xff] %v2742
        %3960 = vst [vmem:[%s258 + $0x948] sm:$0xff] %v2744
        %3961 = vst [vmem:[%s258 + $0x950] sm:$0xff] %v3383
        %3962 = vst [vmem:[%s258 + $0x958] sm:$0xff] %v3385
        %3963 = vst [vmem:[%s258 + $0x960] sm:$0xff] %v2107
        %3964 = vst [vmem:[%s258 + $0x968] sm:$0xff] %v2109
        %3965 = vst [vmem:[%s258 + $0x970] sm:$0xff] %v2748
        %3966 = vst [vmem:[%s258 + $0x978] sm:$0xff] %v2750
        %3967 = vst [vmem:[%s258 + $0x980] sm:$0xff] %v3389
        %3968 = vst [vmem:[%s258 + $0x988] sm:$0xff] %v3391
        %3969 = vst [vmem:[%s258 + $0x990] sm:$0xff] %v2113
        %3970 = vst [vmem:[%s258 + $0x998] sm:$0xff] %v2115
        %3971 = vst [vmem:[%s258 + $0x9a0] sm:$0xff] %v2754
        %3972 = vst [vmem:[%s258 + $0x9a8] sm:$0xff] %v2756
        %3973 = vst [vmem:[%s258 + $0x9b0] sm:$0xff] %v3395
        %3974 = vst [vmem:[%s258 + $0x9b8] sm:$0xff] %v3397
        %3975 = vst [vmem:[%s258 + $0x9c0] sm:$0xff] %v2119
        %3976 = vst [vmem:[%s258 + $0x9c8] sm:$0xff] %v2121
        %3977 = vst [vmem:[%s258 + $0x9d0] sm:$0xff] %v2760
        %3978 = vst [vmem:[%s258 + $0x9d8] sm:$0xff] %v2762
        %3979 = vst [vmem:[%s258 + $0x9e0] sm:$0xff] %v3401
        %3980 = vst [vmem:[%s258 + $0x9e8] sm:$0xff] %v3403
        %3981 = vst [vmem:[%s258 + $0x9f0] sm:$0xff] %v2125
        %3982 = vst [vmem:[%s258 + $0x9f8] sm:$0xff] %v2127
        %3983 = vst [vmem:[%s258 + $0xa00] sm:$0xff] %v2766
        %3984 = vst [vmem:[%s258 + $0xa08] sm:$0xff] %v2768
        %3985 = vst [vmem:[%s258 + $0xa10] sm:$0xff] %v3407
        %3986 = vst [vmem:[%s258 + $0xa18] sm:$0xff] %v3409
        %3987 = vst [vmem:[%s258 + $0xa20] sm:$0xff] %v2131
        %3988 = vst [vmem:[%s258 + $0xa28] sm:$0xff] %v2133
        %3989 = vst [vmem:[%s258 + $0xa30] sm:$0xff] %v2772
        %3990 = vst [vmem:[%s258 + $0xa38] sm:$0xff] %v2774
        %3991 = vst [vmem:[%s258 + $0xa40] sm:$0xff] %v3413
        %3992 = vst [vmem:[%s258 + $0xa48] sm:$0xff] %v3415
        %3993 = vst [vmem:[%s258 + $0xa50] sm:$0xff] %v2137
        %3994 = vst [vmem:[%s258 + $0xa58] sm:$0xff] %v2139
        %3995 = vst [vmem:[%s258 + $0xa60] sm:$0xff] %v2778
        %3996 = vst [vmem:[%s258 + $0xa68] sm:$0xff] %v2780
        %3997 = vst [vmem:[%s258 + $0xa70] sm:$0xff] %v3419
        %3998 = vst [vmem:[%s258 + $0xa78] sm:$0xff] %v3421
        %3999 = vst [vmem:[%s258 + $0xa80] sm:$0xff] %v2143
        %4000 = vst [vmem:[%s258 + $0xa88] sm:$0xff] %v2145
        %4001 = vst [vmem:[%s258 + $0xa90] sm:$0xff] %v2784
        %4002 = vst [vmem:[%s258 + $0xa98] sm:$0xff] %v2786
        %4003 = vst [vmem:[%s258 + $0xaa0] sm:$0xff] %v3425
        %4004 = vst [vmem:[%s258 + $0xaa8] sm:$0xff] %v3427
        %4005 = vst [vmem:[%s258 + $0xab0] sm:$0xff] %v2149
        %4006 = vst [vmem:[%s258 + $0xab8] sm:$0xff] %v2151
        %4007 = vst [vmem:[%s258 + $0xac0] sm:$0xff] %v2790
        %4008 = vst [vmem:[%s258 + $0xac8] sm:$0xff] %v2792
        %4009 = vst [vmem:[%s258 + $0xad0] sm:$0xff] %v3431
        %4010 = vst [vmem:[%s258 + $0xad8] sm:$0xff] %v3433
        %4011 = vst [vmem:[%s258 + $0xae0] sm:$0xff] %v2155
        %4012 = vst [vmem:[%s258 + $0xae8] sm:$0xff] %v2157
        %4013 = vst [vmem:[%s258 + $0xaf0] sm:$0xff] %v2796
        %4014 = vst [vmem:[%s258 + $0xaf8] sm:$0xff] %v2798
        %4015 = vst [vmem:[%s258 + $0xb00] sm:$0xff] %v3437
        %4016 = vst [vmem:[%s258 + $0xb08] sm:$0xff] %v3439
        %4017 = vst [vmem:[%s258 + $0xb10] sm:$0xff] %v2161
        %4018 = vst [vmem:[%s258 + $0xb18] sm:$0xff] %v2163
        %4019 = vst [vmem:[%s258 + $0xb20] sm:$0xff] %v2802
        %4020 = vst [vmem:[%s258 + $0xb28] sm:$0xff] %v2804
        %4021 = vst [vmem:[%s258 + $0xb30] sm:$0xff] %v3443
        %4022 = vst [vmem:[%s258 + $0xb38] sm:$0xff] %v3445
        %4023 = vst [vmem:[%s258 + $0xb40] sm:$0xff] %v2167
        %4024 = vst [vmem:[%s258 + $0xb48] sm:$0xff] %v2169
        %4025 = vst [vmem:[%s258 + $0xb50] sm:$0xff] %v2808
        %4026 = vst [vmem:[%s258 + $0xb58] sm:$0xff] %v2810
        %4027 = vst [vmem:[%s258 + $0xb60] sm:$0xff] %v3449
        %4028 = vst [vmem:[%s258 + $0xb68] sm:$0xff] %v3451
        %4029 = vst [vmem:[%s258 + $0xb70] sm:$0xff] %v2173
        %4030 = vst [vmem:[%s258 + $0xb78] sm:$0xff] %v2175
        %4031 = vst [vmem:[%s258 + $0xb80] sm:$0xff] %v2814
        %4032 = vst [vmem:[%s258 + $0xb88] sm:$0xff] %v2816
        %4033 = vst [vmem:[%s258 + $0xb90] sm:$0xff] %v3455
        %4034 = vst [vmem:[%s258 + $0xb98] sm:$0xff] %v3457
        %4035 = vst [vmem:[%s258 + $0xba0] sm:$0xff] %v2179
        %4036 = vst [vmem:[%s258 + $0xba8] sm:$0xff] %v2181
        %4037 = vst [vmem:[%s258 + $0xbb0] sm:$0xff] %v2820
        %4038 = vst [vmem:[%s258 + $0xbb8] sm:$0xff] %v2822
        %4039 = vst [vmem:[%s258 + $0xbc0] sm:$0xff] %v3461
        %4040 = vst [vmem:[%s258 + $0xbc8] sm:$0xff] %v3463
        %4041 = vst [vmem:[%s258 + $0xbd0] sm:$0xff] %v2185
        %4042 = vst [vmem:[%s258 + $0xbd8] sm:$0xff] %v2187
        %4043 = vst [vmem:[%s258 + $0xbe0] sm:$0xff] %v2826
        %4044 = vst [vmem:[%s258 + $0xbe8] sm:$0xff] %v2828
        %4045 = vst [vmem:[%s258 + $0xbf0] sm:$0xff] %v3467
        %4046 = vst [vmem:[%s258 + $0xbf8] sm:$0xff] %v3469
        %4047 = vst [vmem:[%s258 + $0xc00] sm:$0xff] %v2191
        %4048 = vst [vmem:[%s258 + $0xc08] sm:$0xff] %v2193
        %4049 = vst [vmem:[%s258 + $0xc10] sm:$0xff] %v2832
        %4050 = vst [vmem:[%s258 + $0xc18] sm:$0xff] %v2834
        %4051 = vst [vmem:[%s258 + $0xc20] sm:$0xff] %v3473
        %4052 = vst [vmem:[%s258 + $0xc28] sm:$0xff] %v3475
        %4053 = vst [vmem:[%s258 + $0xc30] sm:$0xff] %v2197
        %4054 = vst [vmem:[%s258 + $0xc38] sm:$0xff] %v2199
        %4055 = vst [vmem:[%s258 + $0xc40] sm:$0xff] %v2838
        %4056 = vst [vmem:[%s258 + $0xc48] sm:$0xff] %v2840
        %4057 = vst [vmem:[%s258 + $0xc50] sm:$0xff] %v3479
        %4058 = vst [vmem:[%s258 + $0xc58] sm:$0xff] %v3481
        %4059 = vst [vmem:[%s258 + $0xc60] sm:$0xff] %v2203
        %4060 = vst [vmem:[%s258 + $0xc68] sm:$0xff] %v2205
        %4061 = vst [vmem:[%s258 + $0xc70] sm:$0xff] %v2844
        %4062 = vst [vmem:[%s258 + $0xc78] sm:$0xff] %v2846
        %4063 = vst [vmem:[%s258 + $0xc80] sm:$0xff] %v3485
        %4064 = vst [vmem:[%s258 + $0xc88] sm:$0xff] %v3487
        %4065 = vst [vmem:[%s258 + $0xc90] sm:$0xff] %v2209
        %4066 = vst [vmem:[%s258 + $0xc98] sm:$0xff] %v2211
        %4067 = vst [vmem:[%s258 + $0xca0] sm:$0xff] %v2850
        %4068 = vst [vmem:[%s258 + $0xca8] sm:$0xff] %v2852
        %4069 = vst [vmem:[%s258 + $0xcb0] sm:$0xff] %v3491
        %4070 = vst [vmem:[%s258 + $0xcb8] sm:$0xff] %v3493
        %4071 = vst [vmem:[%s258 + $0xcc0] sm:$0xff] %v2215
        %4072 = vst [vmem:[%s258 + $0xcc8] sm:$0xff] %v2217
        %4073 = vst [vmem:[%s258 + $0xcd0] sm:$0xff] %v2856
        %4074 = vst [vmem:[%s258 + $0xcd8] sm:$0xff] %v2858
        %4075 = vst [vmem:[%s258 + $0xce0] sm:$0xff] %v3497
        %4076 = vst [vmem:[%s258 + $0xce8] sm:$0xff] %v3499
        %4077 = vst [vmem:[%s258 + $0xcf0] sm:$0xff] %v2221
        %4078 = vst [vmem:[%s258 + $0xcf8] sm:$0xff] %v2223
        %4079 = vst [vmem:[%s258 + $0xd00] sm:$0xff] %v2862
        %4080 = vst [vmem:[%s258 + $0xd08] sm:$0xff] %v2864
        %4081 = vst [vmem:[%s258 + $0xd10] sm:$0xff] %v3503
        %4082 = vst [vmem:[%s258 + $0xd18] sm:$0xff] %v3505
        %4083 = vst [vmem:[%s258 + $0xd20] sm:$0xff] %v2227
        %4084 = vst [vmem:[%s258 + $0xd28] sm:$0xff] %v2229
        %4085 = vst [vmem:[%s258 + $0xd30] sm:$0xff] %v2868
        %4086 = vst [vmem:[%s258 + $0xd38] sm:$0xff] %v2870
        %4087 = vst [vmem:[%s258 + $0xd40] sm:$0xff] %v3509
        %4088 = vst [vmem:[%s258 + $0xd48] sm:$0xff] %v3511
        %4089 = vst [vmem:[%s258 + $0xd50] sm:$0xff] %v2233
        %4090 = vst [vmem:[%s258 + $0xd58] sm:$0xff] %v2235
        %4091 = vst [vmem:[%s258 + $0xd60] sm:$0xff] %v2874
        %4092 = vst [vmem:[%s258 + $0xd68] sm:$0xff] %v2876
        %4093 = vst [vmem:[%s258 + $0xd70] sm:$0xff] %v3515
        %4094 = vst [vmem:[%s258 + $0xd78] sm:$0xff] %v3517
        %4095 = vst [vmem:[%s258 + $0xd80] sm:$0xff] %v2239
        %4096 = vst [vmem:[%s258 + $0xd88] sm:$0xff] %v2241
        %4097 = vst [vmem:[%s258 + $0xd90] sm:$0xff] %v2880
        %4098 = vst [vmem:[%s258 + $0xd98] sm:$0xff] %v2882
        %4099 = vst [vmem:[%s258 + $0xda0] sm:$0xff] %v3521
        %4100 = vst [vmem:[%s258 + $0xda8] sm:$0xff] %v3523
        %4101 = vst [vmem:[%s258 + $0xdb0] sm:$0xff] %v2245
        %4102 = vst [vmem:[%s258 + $0xdb8] sm:$0xff] %v2247
        %4103 = vst [vmem:[%s258 + $0xdc0] sm:$0xff] %v2886
        %4104 = vst [vmem:[%s258 + $0xdc8] sm:$0xff] %v2888
        %4105 = vst [vmem:[%s258 + $0xdd0] sm:$0xff] %v3527
        %4106 = vst [vmem:[%s258 + $0xdd8] sm:$0xff] %v3529
        %4107 = vst [vmem:[%s258 + $0xde0] sm:$0xff] %v2251
        %4108 = vst [vmem:[%s258 + $0xde8] sm:$0xff] %v2253
        %4109 = vst [vmem:[%s258 + $0xdf0] sm:$0xff] %v2892
        %4110 = vst [vmem:[%s258 + $0xdf8] sm:$0xff] %v2894
        %4111 = vst [vmem:[%s258 + $0xe00] sm:$0xff] %v3533
        %4112 = vst [vmem:[%s258 + $0xe08] sm:$0xff] %v3535
        %4113 = vst [vmem:[%s258 + $0xe10] sm:$0xff] %v2257
        %4114 = vst [vmem:[%s258 + $0xe18] sm:$0xff] %v2259
        %4115 = vst [vmem:[%s258 + $0xe20] sm:$0xff] %v2898
        %4116 = vst [vmem:[%s258 + $0xe28] sm:$0xff] %v2900
        %4117 = vst [vmem:[%s258 + $0xe30] sm:$0xff] %v3539
        %4118 = vst [vmem:[%s258 + $0xe38] sm:$0xff] %v3541
        %4119 = vst [vmem:[%s258 + $0xe40] sm:$0xff] %v2263
        %4120 = vst [vmem:[%s258 + $0xe48] sm:$0xff] %v2265
        %4121 = vst [vmem:[%s258 + $0xe50] sm:$0xff] %v2904
        %4122 = vst [vmem:[%s258 + $0xe58] sm:$0xff] %v2906
        %4123 = vst [vmem:[%s258 + $0xe60] sm:$0xff] %v3545
        %4124 = vst [vmem:[%s258 + $0xe68] sm:$0xff] %v3547
        %4125 = vst [vmem:[%s258 + $0xe70] sm:$0xff] %v2269
        %4126 = vst [vmem:[%s258 + $0xe78] sm:$0xff] %v2271
        %4127 = vst [vmem:[%s258 + $0xe80] sm:$0xff] %v2910
        %4128 = vst [vmem:[%s258 + $0xe88] sm:$0xff] %v2912
        %4129 = vst [vmem:[%s258 + $0xe90] sm:$0xff] %v3551
        %4130 = vst [vmem:[%s258 + $0xe98] sm:$0xff] %v3553
        %4131 = vst [vmem:[%s258 + $0xea0] sm:$0xff] %v2275
        %4132 = vst [vmem:[%s258 + $0xea8] sm:$0xff] %v2277
        %4133 = vst [vmem:[%s258 + $0xeb0] sm:$0xff] %v2916
        %4134 = vst [vmem:[%s258 + $0xeb8] sm:$0xff] %v2918
        %4135 = vst [vmem:[%s258 + $0xec0] sm:$0xff] %v3557
        %4136 = vst [vmem:[%s258 + $0xec8] sm:$0xff] %v3559
        %4137 = vst [vmem:[%s258 + $0xed0] sm:$0xff] %v2281
        %4138 = vst [vmem:[%s258 + $0xed8] sm:$0xff] %v2283
        %4139 = vst [vmem:[%s258 + $0xee0] sm:$0xff] %v2922
        %4140 = vst [vmem:[%s258 + $0xee8] sm:$0xff] %v2924
        %4141 = vst [vmem:[%s258 + $0xef0] sm:$0xff] %v3563
        %4142 = vst [vmem:[%s258 + $0xef8] sm:$0xff] %v3565
        %4143 = vst [vmem:[%s258 + $0xf00] sm:$0xff] %v2287
        %4144 = vst [vmem:[%s258 + $0xf08] sm:$0xff] %v2289
        %4145 = vst [vmem:[%s258 + $0xf10] sm:$0xff] %v2928
        %4146 = vst [vmem:[%s258 + $0xf18] sm:$0xff] %v2930
        %4147 = vst [vmem:[%s258 + $0xf20] sm:$0xff] %v3569
        %4148 = vst [vmem:[%s258 + $0xf28] sm:$0xff] %v3571
        %4149 = vst [vmem:[%s258 + $0xf30] sm:$0xff] %v2293
        %4150 = vst [vmem:[%s258 + $0xf38] sm:$0xff] %v2295
        %4151 = vst [vmem:[%s258 + $0xf40] sm:$0xff] %v2934
        %4152 = vst [vmem:[%s258 + $0xf48] sm:$0xff] %v2936
        %4153 = vst [vmem:[%s258 + $0xf50] sm:$0xff] %v3575
        %4154 = vst [vmem:[%s258 + $0xf58] sm:$0xff] %v3577
        %4155 = vst [vmem:[%s258 + $0xf60] sm:$0xff] %v2299
        %4156 = vst [vmem:[%s258 + $0xf68] sm:$0xff] %v2301
        %4157 = vst [vmem:[%s258 + $0xf70] sm:$0xff] %v2940
        %4158 = vst [vmem:[%s258 + $0xf78] sm:$0xff] %v2942
        %4159 = vst [vmem:[%s258 + $0xf80] sm:$0xff] %v3581
        %4160 = vst [vmem:[%s258 + $0xf88] sm:$0xff] %v3583
        %4161 = vst [vmem:[%s258 + $0xf90] sm:$0xff] %v2305
        %4162 = vst [vmem:[%s258 + $0xf98] sm:$0xff] %v2307
        %4163 = vst [vmem:[%s258 + $0xfa0] sm:$0xff] %v2946
        %4164 = vst [vmem:[%s258 + $0xfa8] sm:$0xff] %v2948
        %4165 = vst [vmem:[%s258 + $0xfb0] sm:$0xff] %v3587
        %4166 = vst [vmem:[%s258 + $0xfb8] sm:$0xff] %v3589
        %4167 = vst [vmem:[%s258 + $0xfc0] sm:$0xff] %v2311
        %4168 = vst [vmem:[%s258 + $0xfc8] sm:$0xff] %v2313
        %4169 = vst [vmem:[%s258 + $0xfd0] sm:$0xff] %v2952
        %4170 = vst [vmem:[%s258 + $0xfd8] sm:$0xff] %v2954
        %4171 = vst [vmem:[%s258 + $0xfe0] sm:$0xff] %v3593
        %4172 = vst [vmem:[%s258 + $0xfe8] sm:$0xff] %v3595
        %4173 = vst [vmem:[%s258 + $0xff0] sm:$0xff] %v2317
        %4174 = vst [vmem:[%s258 + $0xff8] sm:$0xff] %v2319
        %4175 = vst [vmem:[%s258 + $0x1000] sm:$0xff] %v2958
        %4176 = vst [vmem:[%s258 + $0x1008] sm:$0xff] %v2960
        %4177 = vst [vmem:[%s258 + $0x1010] sm:$0xff] %v3599
        %4178 = vst [vmem:[%s258 + $0x1018] sm:$0xff] %v3601
        %4179 = vst [vmem:[%s258 + $0x1020] sm:$0xff] %v2323
        %4180 = vst [vmem:[%s258 + $0x1028] sm:$0xff] %v2325
        %4181 = vst [vmem:[%s258 + $0x1030] sm:$0xff] %v2964
        %4182 = vst [vmem:[%s258 + $0x1038] sm:$0xff] %v2966
        %4183 = vst [vmem:[%s258 + $0x1040] sm:$0xff] %v3605
        %4184 = vst [vmem:[%s258 + $0x1048] sm:$0xff] %v3607
        %4185 = vst [vmem:[%s258 + $0x1050] sm:$0xff] %v2329
        %4186 = vst [vmem:[%s258 + $0x1058] sm:$0xff] %v2331
        %4187 = vst [vmem:[%s258 + $0x1060] sm:$0xff] %v2970
        %4188 = vst [vmem:[%s258 + $0x1068] sm:$0xff] %v2972
        %4189 = vst [vmem:[%s258 + $0x1070] sm:$0xff] %v3611
        %4190 = vst [vmem:[%s258 + $0x1078] sm:$0xff] %v3613
        %4191 = vst [vmem:[%s258 + $0x1080] sm:$0xff] %v2335
        %4192 = vst [vmem:[%s258 + $0x1088] sm:$0xff] %v2337
        %4193 = vst [vmem:[%s258 + $0x1090] sm:$0xff] %v2976
        %4194 = vst [vmem:[%s258 + $0x1098] sm:$0xff] %v2978
        %4195 = vst [vmem:[%s258 + $0x10a0] sm:$0xff] %v3617
        %4196 = vst [vmem:[%s258 + $0x10a8] sm:$0xff] %v3619
        %4197 = vst [vmem:[%s258 + $0x10b0] sm:$0xff] %v2341
        %4198 = vst [vmem:[%s258 + $0x10b8] sm:$0xff] %v2343
        %4199 = vst [vmem:[%s258 + $0x10c0] sm:$0xff] %v2982
        %4200 = vst [vmem:[%s258 + $0x10c8] sm:$0xff] %v2984
        %4201 = vst [vmem:[%s258 + $0x10d0] sm:$0xff] %v3623
        %4202 = vst [vmem:[%s258 + $0x10d8] sm:$0xff] %v3625
        %4203 = vst [vmem:[%s258 + $0x10e0] sm:$0xff] %v2347
        %4204 = vst [vmem:[%s258 + $0x10e8] sm:$0xff] %v2349
        %4205 = vst [vmem:[%s258 + $0x10f0] sm:$0xff] %v2988
        %4206 = vst [vmem:[%s258 + $0x10f8] sm:$0xff] %v2990
        %4207 = vst [vmem:[%s258 + $0x1100] sm:$0xff] %v3629
        %4208 = vst [vmem:[%s258 + $0x1108] sm:$0xff] %v3631
        %4209 = vst [vmem:[%s258 + $0x1110] sm:$0xff] %v2353
        %4210 = vst [vmem:[%s258 + $0x1118] sm:$0xff] %v2355
        %4211 = vst [vmem:[%s258 + $0x1120] sm:$0xff] %v2994
        %4212 = vst [vmem:[%s258 + $0x1128] sm:$0xff] %v2996
        %4213 = vst [vmem:[%s258 + $0x1130] sm:$0xff] %v3635
        %4214 = vst [vmem:[%s258 + $0x1138] sm:$0xff] %v3637
        %4215 = vst [vmem:[%s258 + $0x1140] sm:$0xff] %v2359
        %4216 = vst [vmem:[%s258 + $0x1148] sm:$0xff] %v2361
        %4217 = vst [vmem:[%s258 + $0x1150] sm:$0xff] %v3000
        %4218 = vst [vmem:[%s258 + $0x1158] sm:$0xff] %v3002
        %4219 = vst [vmem:[%s258 + $0x1160] sm:$0xff] %v3641
        %4220 = vst [vmem:[%s258 + $0x1168] sm:$0xff] %v3643
        %4221 = vst [vmem:[%s258 + $0x1170] sm:$0xff] %v2365
        %4222 = vst [vmem:[%s258 + $0x1178] sm:$0xff] %v2367
        %4223 = vst [vmem:[%s258 + $0x1180] sm:$0xff] %v3006
        %4224 = vst [vmem:[%s258 + $0x1188] sm:$0xff] %v3008
        %4225 = vst [vmem:[%s258 + $0x1190] sm:$0xff] %v3647
        %4226 = vst [vmem:[%s258 + $0x1198] sm:$0xff] %v3649
        %4227 = vst [vmem:[%s258 + $0x11a0] sm:$0xff] %v2371
        %4228 = vst [vmem:[%s258 + $0x11a8] sm:$0xff] %v2373
        %4229 = vst [vmem:[%s258 + $0x11b0] sm:$0xff] %v3012
        %4230 = vst [vmem:[%s258 + $0x11b8] sm:$0xff] %v3014
        %4231 = vst [vmem:[%s258 + $0x11c0] sm:$0xff] %v3653
        %4232 = vst [vmem:[%s258 + $0x11c8] sm:$0xff] %v3655
        %4233 = vst [vmem:[%s258 + $0x11d0] sm:$0xff] %v2377
        %4234 = vst [vmem:[%s258 + $0x11d8] sm:$0xff] %v2379
        %4235 = vst [vmem:[%s258 + $0x11e0] sm:$0xff] %v3018
        %4236 = vst [vmem:[%s258 + $0x11e8] sm:$0xff] %v3020
        %4237 = vst [vmem:[%s258 + $0x11f0] sm:$0xff] %v3659
        %4238 = vst [vmem:[%s258 + $0x11f8] sm:$0xff] %v3661
        %s4239 = sand.u32 %s130, 1
        %s4240 = scalar_lea.sflag [#allocation5], %s4239
        %s4241 = sand.u32 %s130, 1
        %s4242 = smul.addr %s4241, 4608
        %s4243 = scalar_lea.vmem [#allocation9], %s4242
        // Predicated region
        $region49: #{tpu_custom_call.1} parent=31 // pred_check
          %p4244 = pneg %p140
        $region50: #{tpu_custom_call.1} parent=31 // pred_check_branch
          %4246 = sbr.rel (%p4244) target = $region52
        $region51: #{tpu_custom_call.1} parent=31 // pred_region
          %s4247 = smul.u32 96, %s27
          %s4248 = smul.u32 6, %s28
          %s4250 = ssub.s32 73728, 73728
          %4251 = vsyncadd %s4240, %s4250
          %s4252 = smul.addr %s4247, 6
          %s4253 = sadd.s32 %s4248, %s4252
          %s4254 = smul.addr %s26, 576
          %s4255 = sadd.s32 %s4253, %s4254
          %s4256 = smul.addr %s4255, 128
          %s4257 = scalar_lea.hbm %s3, %s4256
          %s4258 = sshll.u32 %s4243, 4
          %s4259 = int_to_ptr.vmem [resolvable:$true] %s4258
          %4264 = dma.vmem_to_hbm [thread:$0]  %s4259, 73728, %s4257, %s4240, 768, 768, 48
        $region52: #{tpu_custom_call.1} parent=31 // pred_fallthru
          _
      $region32: #{tpu_custom_call.1} parent=5 // pred_fallthru
        _
      %p4265 = scmp.le.s32.totalorder 2, %s16
      // Predicated region
      $region53: #{tpu_custom_call.1} parent=5 // pred_check
        %p4266 = pneg %p4265
      $region54: #{tpu_custom_call.1} parent=5 // pred_check_branch
        %4268 = sbr.rel (%p4266) target = $region56
      $region55: #{tpu_custom_call.1} parent=5 // pred_region
        %s4269 = ssub.s32 %s16, 2
        // Predicated region
        $region57: #{tpu_custom_call.1} parent=55 // pred_check
          %p4270 = pneg %p146
        $region58: #{tpu_custom_call.1} parent=55 // pred_check_branch
          %4272 = sbr.rel (%p4270) target = $region60
        $region59: #{tpu_custom_call.1} parent=55 // pred_region
          %s4273 = sand.u32 %s131, 1
          %s4274 = scalar_lea.sflag [#allocation5], %s4273
          %s4275 = sand.u32 %s131, 1
          %s4276 = smul.addr %s4275, 4608
          %s4277 = scalar_lea.vmem [#allocation9], %s4276
          %4278 = dma.done %s4274, 73728
        $region60: #{tpu_custom_call.1} parent=55 // pred_fallthru
          _
      $region56: #{tpu_custom_call.1} parent=5 // pred_fallthru
        _
    $region6: #{tpu_custom_call.1} parent=1 // loop_footer
      %s20 = sadd.s32 1, %s16
    $region7: #{tpu_custom_call.1} parent=1 // loop_footer_branch
      %15 = sbr.rel target = $region3
    $region8: #{tpu_custom_call.1} parent=1 // loop_exit
      _
    %4279 = vsyncpa [#allocation4], 1
    %s4280 = scalar_lea.sflag [#allocation4], 1
    %4281 = vsyncpa %s4280, 1
    %4282 = vsyncpa [#allocation7], 1
    %4283 = vsyncpa [#allocation5], 1
    %s4284 = scalar_lea.sflag [#allocation5], 1
    %4285 = vsyncpa %s4284, 1

</llo_original>
